<compile_context>
chip_gen: v7x
topology: tpu7x:2x2x1
jax: 0.10.0
libtpu: 0.0.40
codegen_flags: <defaults>
</compile_context>

<pallas_src>
import functools

import jax
import jax.numpy as jnp
from jax.experimental import pallas as pl
from jax.experimental.pallas import tpu as pltpu


# --------------------------------------------------------------------------- helpers
def _cdiv(a, b):
    return -(-a // b)


def _round_up(x, m):
    return _cdiv(x, m) * m


def _pad2d(a, rows, cols):
    r, c = a.shape
    if r == rows and c == cols:
        return a
    return jnp.pad(a, ((0, rows - r), (0, cols - c)))


def _row_tile(m, tm):
    """Row (sublane) tile: as large as possible (amortize ~0.35us/grid-step),
    multiple of 8, and split into >=2 tiles when there is enough work so both
    v7x TensorCores get a share of the 'parallel' M axis."""
    t = min(tm, _round_up(m, 8))
    if m > 256:
        t = min(t, _round_up(_cdiv(m, 2), 8))
    return max(t, 8)


def _l2_normalize(x, eps=1e-12):
    n = jnp.linalg.norm(x, axis=-1, keepdims=True)
    return x / jnp.maximum(n, eps)


# --------------------------------------------------------------------- fused MLP kernel
def fused_mlp_kernel(x_ref, w1_ref, b1_ref, w2_ref, b2_ref, o_ref, acc_ref):
    """One (row-tile, hidden-block) step of  y = gelu(x @ w1 + b1) @ w2 + b2."""
    k = pl.program_id(1)

    @pl.when(k == 0)
    def _init():
        acc_ref[...] = jnp.zeros_like(acc_ref)

    # First matmul for this hidden block: bf16 MXU path, f32 accumulation.
    h = jnp.dot(x_ref[...], w1_ref[...], preferred_element_type=jnp.float32)
    h = h + b1_ref[...]
    # tanh-approx GELU (EUP); PyTorch nn.GELU() is erf-based, difference ~1e-3.
    # TODO(synk): switch to erf-based GELU if Mosaic's erf lowering is required bit-exactness.
    h = jax.nn.gelu(h, approximate=True)

    # Second matmul: accumulate this hidden block's contribution in f32 scratch.
    acc_ref[...] += jnp.dot(h.astype(w2_ref.dtype), w2_ref[...],
                            preferred_element_type=jnp.float32)

    @pl.when(k == pl.num_programs(1) - 1)
    def _finalize():
        o_ref[...] = (acc_ref[...] + b2_ref[...]).astype(o_ref.dtype)


def fused_mlp(x, w1, b1, w2, b2, *, tm=512, th=1024, compute_dtype=jnp.bfloat16):
    """y = gelu(x @ w1.T + b1) @ w2.T + b2 over the last axis (PyTorch Linear layout).

    x: (..., C);  w1: (Hd, C);  b1: (Hd,);  w2: (O, Hd);  b2: (O,)
    """
    *lead, C = x.shape
    Hd = w1.shape[0]
    O = w2.shape[0]
    x2d = x.reshape(-1, C)              # channels already last -> lane-dense, no transposes
    M = x2d.shape[0]

    C_p = _round_up(C, 128)
    O_p = _round_up(O, 128)
    # Hidden blocking: block size multiple of 128 chosen to minimize padding.
    th = _round_up(th, 128)
    h_round = _round_up(Hd, 128)
    n_k = _cdiv(h_round, th)
    th_eff = _round_up(_cdiv(h_round, n_k), 128)
    H_p = th_eff * n_k

    tm_eff = _row_tile(M, tm)
    M_p = _round_up(M, tm_eff)          # cdiv + zero-pad tail instead of an assert

    xp = _pad2d(x2d, M_p, C_p).astype(compute_dtype)
    w1p = _pad2d(w1.T, C_p, H_p).astype(compute_dtype)
    b1p = jnp.pad(b1, (0, H_p - Hd)).reshape(1, H_p).astype(jnp.float32)
    w2p = _pad2d(w2.T, H_p, O_p).astype(compute_dtype)
    b2p = jnp.pad(b2, (0, O_p - O)).reshape(1, O_p).astype(jnp.float32)

    cd = jnp.dtype(compute_dtype).itemsize
    od = jnp.dtype(x.dtype).itemsize
    est = (2 * (tm_eff * C_p * cd + C_p * th_eff * cd + th_eff * 4
                + th_eff * O_p * cd + O_p * 4 + tm_eff * O_p * od)
           + tm_eff * O_p * 4)
    cp_kwargs = dict(dimension_semantics=("parallel", "arbitrary"))
    if est > (24 << 20):
        cp_kwargs["vmem_limit_bytes"] = min(int(est * 1.5) + (4 << 20), 64 << 20)

    out = pl.pallas_call(
        fused_mlp_kernel,
        out_shape=jax.ShapeDtypeStruct((M_p, O_p), x.dtype),
        grid_spec=pltpu.PrefetchScalarGridSpec(
            num_scalar_prefetch=0,
            grid=(M_p // tm_eff, H_p // th_eff),
            in_specs=[
                pl.BlockSpec((tm_eff, C_p), lambda i, k: (i, 0)),   # x row tile (resident over k)
                pl.BlockSpec((C_p, th_eff), lambda i, k: (0, k)),   # w1 hidden block (streamed)
                pl.BlockSpec((1, th_eff), lambda i, k: (0, k)),     # b1 hidden block
                pl.BlockSpec((th_eff, O_p), lambda i, k: (k, 0)),   # w2 hidden block (streamed)
                pl.BlockSpec((1, O_p), lambda i, k: (0, 0)),        # b2 (grid-invariant)
            ],
            out_specs=pl.BlockSpec((tm_eff, O_p), lambda i, k: (i, 0)),
            scratch_shapes=[pltpu.VMEM((tm_eff, O_p), jnp.float32)],
        ),
        compiler_params=pltpu.CompilerParams(**cp_kwargs),
    )(xp, w1p, b1p, w2p, b2p)

    return out[:M, :O].reshape(*lead, O)


# ------------------------------------------------------------------------ linear kernel
def linear_kernel(x_ref, w_ref, b_ref, o_ref):
    y = jnp.dot(x_ref[...], w_ref[...], preferred_element_type=jnp.float32) + b_ref[...]
    o_ref[...] = y.astype(o_ref.dtype)


def linear_pallas(x, w, b, *, tm=512, compute_dtype=jnp.bfloat16):
    """y = x @ w.T + b over the last axis (PyTorch Linear layout). w: (N, K); b: (N,)."""
    *lead, K = x.shape
    N = w.shape[0]
    x2d = x.reshape(-1, K)
    M = x2d.shape[0]

    K_p = _round_up(K, 128)
    N_p = _round_up(N, 128)
    tm_eff = _row_tile(M, tm)
    M_p = _round_up(M, tm_eff)

    xp = _pad2d(x2d, M_p, K_p).astype(compute_dtype)
    wp = _pad2d(w.T, K_p, N_p).astype(compute_dtype)
    bp = jnp.pad(b, (0, N_p - N)).reshape(1, N_p).astype(jnp.float32)

    out = pl.pallas_call(
        linear_kernel,
        out_shape=jax.ShapeDtypeStruct((M_p, N_p), x.dtype),
        grid_spec=pltpu.PrefetchScalarGridSpec(
            num_scalar_prefetch=0,
            grid=(M_p // tm_eff,),
            in_specs=[
                pl.BlockSpec((tm_eff, K_p), lambda i: (i, 0)),
                pl.BlockSpec((K_p, N_p), lambda i: (0, 0)),
                pl.BlockSpec((1, N_p), lambda i: (0, 0)),
            ],
            out_specs=pl.BlockSpec((tm_eff, N_p), lambda i: (i, 0)),
        ),
        compiler_params=pltpu.CompilerParams(dimension_semantics=("parallel",)),
    )(xp, wp, bp)

    return out[:M, :N].reshape(*lead, N)


def batched_linear_pallas(xs, ws, bs, *, tm=512, compute_dtype=jnp.bfloat16):
    """G independent Linears in ONE pallas_call (used for the q/k/v projections).

    xs: (G, M, K);  ws: (G, N, K);  bs: (G, N)  ->  (G, M, N)
    The leading G axis is a grid dimension; each step loads its own (K, N) weight
    block (double-buffered by Pallas) so the three launches collapse into one.
    """
    G, M, K = xs.shape
    N = ws.shape[1]

    K_p = _round_up(K, 128)
    N_p = _round_up(N, 128)
    tm_eff = _row_tile(M, tm)
    M_p = _round_up(M, tm_eff)

    xp = jnp.pad(xs, ((0, 0), (0, M_p - M), (0, K_p - K))).astype(compute_dtype)
    wp = jnp.pad(jnp.swapaxes(ws, 1, 2),
                 ((0, 0), (0, K_p - K), (0, N_p - N))).astype(compute_dtype)
    bp = jnp.pad(bs, ((0, 0), (0, N_p - N))).reshape(G, 1, N_p).astype(jnp.float32)

    out = pl.pallas_call(
        linear_kernel,   # leading size-1 dims are squeezed -> same 2-D body
        out_shape=jax.ShapeDtypeStruct((G, M_p, N_p), xs.dtype),
        grid_spec=pltpu.PrefetchScalarGridSpec(
            num_scalar_prefetch=0,
            grid=(G, M_p // tm_eff),
            in_specs=[
                pl.BlockSpec((None, tm_eff, K_p), lambda g, i: (g, i, 0)),
                pl.BlockSpec((None, K_p, N_p), lambda g, i: (g, 0, 0)),
                pl.BlockSpec((None, 1, N_p), lambda g, i: (g, 0, 0)),
            ],
            out_specs=pl.BlockSpec((None, tm_eff, N_p), lambda g, i: (g, i, 0)),
        ),
        compiler_params=pltpu.CompilerParams(
            dimension_semantics=("parallel", "parallel")),
    )(xp, wp, bp)

    return out[:, :M, :N]


# ---------------------------------------------------------------- pure-JAX f32 references
def ref_mlp(x, w1, b1, w2, b2):
    h = jax.nn.gelu(x @ w1.T + b1, approximate=True)
    return h @ w2.T + b2


def ref_linear(x, w, b):
    return x @ w.T + b


def _attention_core(q, k, v, num_heads):
    B, Sq, E = q.shape
    Sk = k.shape[1]
    Dh = E // num_heads
    qh = q.reshape(B, Sq, num_heads, Dh).transpose(0, 2, 1, 3)
    kh = k.reshape(B, Sk, num_heads, Dh).transpose(0, 2, 1, 3)
    vh = v.reshape(B, Sk, num_heads, Dh).transpose(0, 2, 1, 3)
    scores = jnp.einsum("bhqd,bhkd->bhqk", qh, kh) / (Dh ** 0.5)
    attn = jax.nn.softmax(scores, axis=-1)
    out = jnp.einsum("bhqk,bhkd->bhqd", attn, vh)
    return out.transpose(0, 2, 1, 3).reshape(B, Sq, E)


# ----------------------------------------------------------------- Brain_Net_Vit forward
def brain_net_vit_forward(img_features, params, *, cls_per_tsk, num_heads=8,
                          use_pallas=True):
    """Inference branch of Brain_Net_Vit.forward (labels=None), starting from the
    ViT token features."""
    mlp = fused_mlp if use_pallas else ref_mlp
    lin = linear_pallas if use_pallas else ref_linear

    B, S, E = img_features.shape

    # memory_map: Linear(768, 3072) -> GELU -> Linear(3072, hidden_dim)
    feats_cls = mlp(img_features, *params["memory_map"])

    # external_att = SelfAttentionMLP(768, hidden_dim, 768, 768, class_info)
    att = params["external_att"]
    x_ori = img_features                                  # pre_ori = Identity
    x_cls = lin(feats_cls, *att["pre_cls"])               # Linear(hidden_dim, 768)
    x_tsk = mlp(img_features, *att["pre_tsk"])            # Linear->GELU->Linear (768->768->768)

    if use_pallas:
        # q/k/v: three different 768->768 Linears on three different inputs,
        # fused into a single pallas_call with a leading "projection" grid axis.
        qkv_in = jnp.stack([x_cls.reshape(-1, E),
                            x_ori.reshape(-1, E),
                            x_tsk.reshape(-1, E)], axis=0)
        qkv_w = jnp.stack([att["wq"], att["wk"], att["wv"]], axis=0)
        qkv_b = jnp.stack([att["bq"], att["bk"], att["bv"]], axis=0)
        qkv = batched_linear_pallas(qkv_in, qkv_w, qkv_b)
        q = qkv[0].reshape(B, S, E)
        k = qkv[1].reshape(B, S, E)
        v = qkv[2].reshape(B, S, E)
    else:
        q = ref_linear(x_cls, att["wq"], att["bq"])
        k = ref_linear(x_ori, att["wk"], att["bk"])
        v = ref_linear(x_tsk, att["wv"], att["bv"])

    # TODO(synk): the (B=2, S=8, heads=8) softmax-attention core is a few KB of
    # work and is left to XLA rather than a dedicated Pallas flash kernel.
    a = _attention_core(q, k, v, num_heads)
    a = lin(a, att["wo"], att["bo"])
    feats_tsk = mlp(a, *att["out"])                       # Linear->GELU->Linear (768->768->class_info)

    img_feat = jnp.concatenate([feats_tsk, feats_cls], axis=-1)      # (B, S, 1024)

    # Frozen Brain embeddings for the inference branch (all memories/tasks opened).
    emb_tsk = jnp.repeat(params["brain_embedding_tsk"], cls_per_tsk, axis=0)
    brain_embeddings = jnp.concatenate([emb_tsk, params["brain_embedding"]], axis=-1)

    # use_normalize=True path: mean over tokens, L2-normalize, cosine-style logits.
    img_vec = _l2_normalize(jnp.mean(img_feat, axis=1))
    brain_embeddings = _l2_normalize(brain_embeddings)
    return img_vec @ brain_embeddings.T


# ------------------------------------------------------------------------ parameter init
def _init_linear(key, out_dim, in_dim):
    # kaiming_normal_(nonlinearity='linear') + zero bias, as in initialize_weights().
    w = jax.random.normal(key, (out_dim, in_dim), jnp.float32) / jnp.sqrt(in_dim)
    b = jnp.zeros((out_dim,), jnp.float32)
    return w, b


def init_params(key, *, vit_dim=768, proj_hidden=3072, hidden_dim=512,
                num_classes=10, cls_per_tsk=2):
    class_info = 1024 - hidden_dim
    task_num = num_classes // cls_per_tsk
    keys = jax.random.split(key, 13)

    mm_w1, mm_b1 = _init_linear(keys[0], proj_hidden, vit_dim)
    mm_w2, mm_b2 = _init_linear(keys[1], hidden_dim, proj_hidden)

    pc_w, pc_b = _init_linear(keys[2], vit_dim, hidden_dim)
    pt_w1, pt_b1 = _init_linear(keys[3], vit_dim, vit_dim)
    pt_w2, pt_b2 = _init_linear(keys[4], vit_dim, vit_dim)

    wq, bq = _init_linear(keys[5], vit_dim, vit_dim)
    wk, bk = _init_linear(keys[6], vit_dim, vit_dim)
    wv, bv = _init_linear(keys[7], vit_dim, vit_dim)
    wo, bo = _init_linear(keys[8], vit_dim, vit_dim)

    out_w1, out_b1 = _init_linear(keys[9], vit_dim, vit_dim)
    out_w2, out_b2 = _init_linear(keys[10], class_info, vit_dim)

    emb_cls = jax.random.normal(keys[11], (num_classes, hidden_dim), jnp.float32)
    emb_tsk = jax.random.normal(keys[12], (task_num, class_info), jnp.float32)

    return {
        "memory_map": (mm_w1, mm_b1, mm_w2, mm_b2),
        "external_att": {
            "pre_cls": (pc_w, pc_b),
            "pre_tsk": (pt_w1, pt_b1, pt_w2, pt_b2),
            "wq": wq, "bq": bq, "wk": wk, "bk": bk, "wv": wv, "bv": bv,
            "wo": wo, "bo": bo,
            "out": (out_w1, out_b1, out_w2, out_b2),
        },
        "brain_embedding": emb_cls,
        "brain_embedding_tsk": emb_tsk,
    }


if __name__ == "__main__":
    key = jax.random.PRNGKey(0)
    k_feat, k_par = jax.random.split(key)

    # Small shapes consistent with the module: ViT-base token dim 768, projector
    # hidden 3072, hidden_dim=512 (class_info=512), 10 classes / 2 per task,
    # batch=2, seq=8 synthetic tokens.
    B, S, VIT_DIM = 2, 8, 768
    PROJ_HIDDEN, HIDDEN_DIM = 3072, 512
    NUM_CLASSES, CLS_PER_TSK, NUM_HEADS = 10, 2, 8

    # TODO(synk): the pretrained ViTForImageClassification backbone (Brain_Vit_att)
    # needs an external checkpoint (no files/network allowed); the demo feeds
    # synthetic ViT token features directly, and the Resize/Normalize transform
    # plus the label/task bookkeeping of the training branch are host-side state.
    img_features = jax.random.normal(k_feat, (B, S, VIT_DIM), jnp.float32)

    params = init_params(k_par, vit_dim=VIT_DIM, proj_hidden=PROJ_HIDDEN,
                         hidden_dim=HIDDEN_DIM, num_classes=NUM_CLASSES,
                         cls_per_tsk=CLS_PER_TSK)

    # Kernel-level check: fused MLP projector (bf16 MXU, f32 accumulation) vs f32 ref.
    mm = jax.block_until_ready(fused_mlp(img_features, *params["memory_map"]))
    mm_ref = ref_mlp(img_features, *params["memory_map"])
    rel = float(jnp.linalg.norm(mm - mm_ref) / jnp.linalg.norm(mm_ref))
    assert mm.shape == (B, S, HIDDEN_DIM)
    assert rel < 2e-2, f"fused_mlp mismatch: rel={rel}"

    # End-to-end inference forward (jitted Pallas path vs pure-JAX f32 reference).
    fwd = jax.jit(functools.partial(brain_net_vit_forward, cls_per_tsk=CLS_PER_TSK,
                                    num_heads=NUM_HEADS, use_pallas=True))
    logits = jax.block_until_ready(fwd(img_features, params))
    logits_ref = brain_net_vit_forward(img_features, params, cls_per_tsk=CLS_PER_TSK,
                                       num_heads=NUM_HEADS, use_pallas=False)
    assert logits.shape == (B, NUM_CLASSES)
    max_err = float(jnp.max(jnp.abs(logits - logits_ref)))
    assert max_err < 3e-2, f"logits mismatch: max_err={max_err}"

    print("KERNEL_OK")
</pallas_src>

<mosaic_0001>
module attributes {stable_mosaic.version = 11 : i64} {
  func.func @fused_mlp_kernel(%arg0: i32, %arg1: i32, %arg2: memref<16x768xbf16, #tpu.memory_space<vmem>>, %arg3: memref<768x1024xbf16, #tpu.memory_space<vmem>>, %arg4: memref<1x1024xf32, #tpu.memory_space<vmem>>, %arg5: memref<1024x512xbf16, #tpu.memory_space<vmem>>, %arg6: memref<1x512xf32, #tpu.memory_space<vmem>>, %arg7: memref<16x512xf32, #tpu.memory_space<vmem>>, %arg8: memref<16x512xf32, #tpu.memory_space<vmem>>) attributes {dimension_semantics = [#tpu.dimension_semantics<parallel>, #tpu.dimension_semantics<arbitrary>], iteration_bounds = array<i64: 1, 3>, scalar_prefetch = 0 : i64, scratch_operands = 1 : i64, tpu.core_type = #tpu.core_type<tc>, window_params = [{transform_indices = @transform_0, window_bounds = array<i64: 16, 768>}, {transform_indices = @transform_1, window_bounds = array<i64: 768, 1024>}, {transform_indices = @transform_2, window_bounds = array<i64: 1, 1024>}, {transform_indices = @transform_3, window_bounds = array<i64: 1024, 512>}, {pipeline_mode = #tpu.pipeline_mode<synchronous>, transform_indices = @transform_4, window_bounds = array<i64: 1, 512>}, {transform_indices = @transform_5, window_bounds = array<i64: 16, 512>}]} {
    %c0_i32 = arith.constant 0 : i32
    %0 = arith.cmpi eq, %arg1, %c0_i32 : i32
    %1 = arith.extui %0 : i1 to i32
    %c0_i32_0 = arith.constant 0 : i32
    %2 = arith.cmpi ne, %1, %c0_i32_0 : i32
    scf.if %2 {
      %cst_18 = arith.constant 0.000000e+00 : f32
      %31 = vector.broadcast %cst_18 : f32 to vector<16x512xf32>
      %c0_19 = arith.constant 0 : index
      %c0_20 = arith.constant 0 : index
      %32 = vector.load %arg8[%c0_19, %c0_20] : memref<16x512xf32, #tpu.memory_space<vmem>>, vector<16x512xf32>
      tpu.vector_store %arg8[%c0_19, %c0_20], %31 {strides = array<i32>} : memref<16x512xf32, #tpu.memory_space<vmem>>, vector<16x512xf32>,
    } else {
    }
    %c0 = arith.constant 0 : index
    %c0_1 = arith.constant 0 : index
    %3 = vector.load %arg2[%c0, %c0_1] : memref<16x768xbf16, #tpu.memory_space<vmem>>, vector<16x768xbf16>
    %c0_2 = arith.constant 0 : index
    %c0_3 = arith.constant 0 : index
    %4 = vector.load %arg3[%c0_2, %c0_3] : memref<768x1024xbf16, #tpu.memory_space<vmem>>, vector<768x1024xbf16>
    %cst = arith.constant dense<0.000000e+00> : vector<16x1024xf32>
    %5 = tpu.matmul %3, %4, %cst {dimension_numbers = #tpu.dot_dimension_numbers<[1], [0], [0], [1], [0, 0, 1, 1], [], []>} : vector<16x768xbf16>, vector<768x1024xbf16>, vector<16x1024xf32> -> vector<16x1024xf32>
    %c0_4 = arith.constant 0 : index
    %c0_5 = arith.constant 0 : index
    %6 = vector.load %arg4[%c0_4, %c0_5] : memref<1x1024xf32, #tpu.memory_space<vmem>>, vector<1x1024xf32>
    %7 = vector.broadcast %6 : vector<1x1024xf32> to vector<16x1024xf32>
    %8 = arith.addf %5, %7 : vector<16x1024xf32>
    %9 = arith.mulf %8, %8 : vector<16x1024xf32>
    %10 = arith.mulf %8, %9 : vector<16x1024xf32>
    %cst_6 = arith.constant 4.471500e-02 : f32
    %11 = vector.broadcast %cst_6 : f32 to vector<16x1024xf32>
    %12 = arith.mulf %11, %10 : vector<16x1024xf32>
    %13 = arith.addf %8, %12 : vector<16x1024xf32>
    %cst_7 = arith.constant 0.797884583 : f32
    %14 = vector.broadcast %cst_7 : f32 to vector<16x1024xf32>
    %15 = arith.mulf %14, %13 : vector<16x1024xf32>
    %16 = math.tanh %15 : vector<16x1024xf32>
    %cst_8 = arith.constant 1.000000e+00 : f32
    %17 = vector.broadcast %cst_8 : f32 to vector<16x1024xf32>
    %18 = arith.addf %17, %16 : vector<16x1024xf32>
    %cst_9 = arith.constant 5.000000e-01 : f32
    %19 = vector.broadcast %cst_9 : f32 to vector<16x1024xf32>
    %20 = arith.mulf %19, %18 : vector<16x1024xf32>
    %21 = arith.mulf %8, %20 : vector<16x1024xf32>
    %c0_10 = arith.constant 0 : index
    %c0_11 = arith.constant 0 : index
    %22 = vector.load %arg8[%c0_10, %c0_11] : memref<16x512xf32, #tpu.memory_space<vmem>>, vector<16x512xf32>
    %23 = arith.truncf %21 : vector<16x1024xf32> to vector<16x1024xbf16>
    %c0_12 = arith.constant 0 : index
    %c0_13 = arith.constant 0 : index
    %24 = vector.load %arg5[%c0_12, %c0_13] : memref<1024x512xbf16, #tpu.memory_space<vmem>>, vector<1024x512xbf16>
    %cst_14 = arith.constant dense<0.000000e+00> : vector<16x512xf32>
    %25 = tpu.matmul %23, %24, %cst_14 {dimension_numbers = #tpu.dot_dimension_numbers<[1], [0], [0], [1], [0, 0, 1, 1], [], []>} : vector<16x1024xbf16>, vector<1024x512xbf16>, vector<16x512xf32> -> vector<16x512xf32>
    %26 = arith.addf %22, %25 : vector<16x512xf32>
    %c0_15 = arith.constant 0 : index
    %c0_16 = arith.constant 0 : index
    %27 = vector.load %arg8[%c0_15, %c0_16] : memref<16x512xf32, #tpu.memory_space<vmem>>, vector<16x512xf32>
    tpu.vector_store %arg8[%c0_15, %c0_16], %26 {strides = array<i32>} : memref<16x512xf32, #tpu.memory_space<vmem>>, vector<16x512xf32>,
    %c2_i32 = arith.constant 2 : i32
    %28 = arith.cmpi eq, %arg1, %c2_i32 : i32
    %29 = arith.extui %28 : i1 to i32
    %c0_i32_17 = arith.constant 0 : i32
    %30 = arith.cmpi ne, %29, %c0_i32_17 : i32
    scf.if %30 {
      %c0_18 = arith.constant 0 : index
      %c0_19 = arith.constant 0 : index
      %31 = vector.load %arg8[%c0_18, %c0_19] : memref<16x512xf32, #tpu.memory_space<vmem>>, vector<16x512xf32>
      %c0_20 = arith.constant 0 : index
      %c0_21 = arith.constant 0 : index
      %32 = vector.load %arg6[%c0_20, %c0_21] : memref<1x512xf32, #tpu.memory_space<vmem>>, vector<1x512xf32>
      %33 = vector.broadcast %32 : vector<1x512xf32> to vector<16x512xf32>
      %34 = arith.addf %31, %33 : vector<16x512xf32>
      %c0_22 = arith.constant 0 : index
      %c0_23 = arith.constant 0 : index
      %35 = vector.load %arg7[%c0_22, %c0_23] : memref<16x512xf32, #tpu.memory_space<vmem>>, vector<16x512xf32>
      tpu.vector_store %arg7[%c0_22, %c0_23], %34 {strides = array<i32>} : memref<16x512xf32, #tpu.memory_space<vmem>>, vector<16x512xf32>,
    } else {
    }
    return
  }
  func.func @transform_0(%arg0: i32, %arg1: i32) -> (i32, i32) {
    %c0_i32 = arith.constant 0 : i32
    %c0_i32_0 = arith.constant 0 : i32
    return %arg0, %c0_i32 : i32, i32
  }
  func.func @transform_1(%arg0: i32, %arg1: i32) -> (i32, i32) {
    %c0_i32 = arith.constant 0 : i32
    %c0_i32_0 = arith.constant 0 : i32
    return %c0_i32, %arg1 : i32, i32
  }
  func.func @transform_2(%arg0: i32, %arg1: i32) -> (i32, i32) {
    %c0_i32 = arith.constant 0 : i32
    %c0_i32_0 = arith.constant 0 : i32
    return %c0_i32, %arg1 : i32, i32
  }
  func.func @transform_3(%arg0: i32, %arg1: i32) -> (i32, i32) {
    %c0_i32 = arith.constant 0 : i32
    %c0_i32_0 = arith.constant 0 : i32
    return %arg1, %c0_i32 : i32, i32
  }
  func.func @transform_4(%arg0: i32, %arg1: i32) -> (i32, i32) {
    %c0_i32 = arith.constant 0 : i32
    %c0_i32_0 = arith.constant 0 : i32
    %c0_i32_1 = arith.constant 0 : i32
    return %c0_i32, %c0_i32_0 : i32, i32
  }
  func.func @transform_5(%arg0: i32, %arg1: i32) -> (i32, i32) {
    %c0_i32 = arith.constant 0 : i32
    %c0_i32_0 = arith.constant 0 : i32
    return %arg0, %c0_i32 : i32, i32
  }
}

</mosaic_0001>

<llo_original>
// kernel: tpu_custom_call.1
$region0: #{tpu_custom_call.1}
  #allocation0 [shape = 'u32[]', space=smem, size = 0x4, offset = 0x4, fixed_abs, tag = 'smem constant byte address 0x4 - core index']
  #allocation1 [shape = 'u32[144,128]{1,0:T(1,128)}', space=vmem, size = 0x12000, scoped, tag = 'internal scratch']
  #allocation2 [shape = 'f32[16,512]{1,0:T(8,128)}', space=vmem, size = 0x8000, scoped, tag = 'scratch operand']
  %s0 = inlined_call_operand.hbm [shape: bf16[16,768], index: 0, kind: input, shape index: {}]
  %s1 = inlined_call_operand.hbm [shape: bf16[768,3072], index: 1, kind: input, shape index: {}]
  %s2 = inlined_call_operand.hbm [shape: f32[1,3072], index: 2, kind: input, shape index: {}]
  %s3 = inlined_call_operand.hbm [shape: bf16[3072,512], index: 3, kind: input, shape index: {}]
  %s4 = inlined_call_operand.hbm [shape: f32[1,512], index: 4, kind: input, shape index: {}]
  %s5 = inlined_call_operand.hbm [shape: f32[16,512], index: 5, kind: output, shape index: {}]
  %s6 = sld [smem:[#allocation0]]
  $region81: #{tpu_custom_call.1} parent=0
    _
  %s8 = ssub.s32 1, %s6
  %s9 = scalar_select 0, %s8, %s6
  $region1: #{tpu_custom_call.1} parent=0
    #allocation3 [shape = 'u8[24576]{0}', space=vmem, size = 0x6000, scoped, tag = 'input window, operand 0, single buffered']
    #allocation4 [shape = 's32[2]{0}', space=sflag, size = 0x8, scoped, tag = 'scoped memory for tpu_custom_call.1']
    #allocation5 [shape = 's32[2]{0}', space=sflag, size = 0x8, scoped, tag = 'scoped memory for tpu_custom_call.1']
    #allocation6 [shape = 'u8[3145728]{0}', space=vmem, size = 0x300000, scoped, tag = 'input window, operand 1']
    #allocation7 [shape = 's32[2]{0}', space=sflag, size = 0x8, scoped, tag = 'scoped memory for tpu_custom_call.1']
    #allocation8 [shape = 'u8[8192]{0}', space=vmem, size = 0x2000, scoped, tag = 'input window, operand 2']
    #allocation9 [shape = 'u8[2097152]{0}', space=vmem, size = 0x200000, scoped, tag = 'input window, operand 3']
    #allocation10 [shape = 's32[2]{0}', space=sflag, size = 0x8, scoped, tag = 'scoped memory for tpu_custom_call.1']
    #allocation11 [shape = 'u8[2048]{0}', space=vmem, size = 0x800, scoped, tag = 'input window, operand 4, single buffered']
    #allocation12 [shape = 'u8[32768]{0}', space=vmem, size = 0x8000, scoped, tag = 'output window, operand 0, single buffered']
    %10 = vsyncpa [#allocation4], 0
    %11 = vsyncpa [#allocation7], 0
    %s12 = scalar_lea.sflag [#allocation7], 1
    %13 = vsyncpa %s12, 0
    %14 = vsyncpa [#allocation10], 0
    %s15 = scalar_lea.sflag [#allocation10], 1
    %16 = vsyncpa %s15, 0
    %17 = vsyncpa [#allocation5], 0
    loop: start=0, step=1, limit=5
    $region2: #{tpu_custom_call.1} parent=1 // loop_pre_header
      _
    $region3: #{tpu_custom_call.1} parent=1 // loop_header
      %s19 = sphi 0, %s23
      %p20 = scmp.ge.s32.totalorder %s19, 5
      %s26 = sphi 0, %s38
      %s27 = sphi 0, %s34
      %s28 = sphi 0, %s26
      %s29 = sphi 0, %s27
      %s30 = sphi 0, %s28
      %s31 = sphi 0, %s29
      %s41 = sphi 0, %s43
      %s44 = sphi 0, %s41
      %s45 = sphi 0, %s44
      %s61 = sphi 0, %s45
      %s67 = sphi 0, %s69
      %s70 = sphi 0, %s67
      %s71 = sphi 0, %s70
      %s87 = sphi 0, %s71
      %s93 = sphi 0, %s95
      %s96 = sphi 0, %s93
      %s97 = sphi 0, %s96
      %s113 = sphi 0, %s97
      %s119 = sphi 0, %s121
      %s122 = sphi 0, %s119
      %s123 = sphi 0, %s122
      %s139 = sphi 0, %s123
      %s143 = sphi 0, %s143
      %s145 = sphi 0, %s143
      %s146 = sphi 0, %s145
      %s160 = sphi 0, %s146
      %s166 = sphi 0, %s168
      %s169 = sphi 0, %s166
      %s170 = sphi 0, %s169
      %s186 = sphi 0, %s170
    $region4: #{tpu_custom_call.1} parent=1 // loop_header_branch
      %22 = sbr.rel (%p20) target = $region8
    $region5: #{tpu_custom_call.1} parent=1 // loop_body
      %s24 = ssub.s32 %s19, 1
      %s25 = ssub.s32 %s19, 2
      %s32 = sadd.s32 1, %s27
      %p33 = scmp.ge.s32.totalorder %s32, 3
      %s34 = scalar_select %p33, 0, %s32
      %s35 = sadd.s32 1, %s26
      %s36 = scalar_select %p33, %s35, %s26
      %p37 = scmp.ge.s32.totalorder %s36, 1
      %s38 = scalar_select %p37, 0, %s36
      %s39 = ssub.s32 %s26, %s38
      %p40 = scmp.eq.s32.totalorder %s39, 0
      %s42 = sadd.s32 %s41, 1
      %s43 = scalar_select %p40, %s41, %s42
      %p46 = pneg %p40
      %p47 = scmp.eq.s32.totalorder %s19, 2
      %p48 = por %p46, %p47
      %p49 = scmp.ne.s32.totalorder %s41, %s44
      %p50 = scmp.eq.s32.totalorder %s19, 0
      %p51 = por %p49, %p50
      %p52 = scmp.ne.s32.totalorder %s41, %s44
      %p53 = scmp.eq.s32.totalorder %s24, 2
      %p54 = por %p52, %p53
      %p55 = scmp.ne.s32.totalorder %s44, %s45
      %p56 = scmp.eq.s32.totalorder %s24, 0
      %p57 = por %p55, %p56
      %p58 = scmp.ne.s32.totalorder %s44, %s45
      %p59 = scmp.eq.s32.totalorder %s25, 2
      %p60 = por %p58, %p59
      %p62 = scmp.ne.s32.totalorder %s45, %s61
      %p63 = scmp.eq.s32.totalorder %s25, 0
      %p64 = por %p62, %p63
      %s65 = ssub.s32 %s27, %s34
      %p66 = scmp.eq.s32.totalorder %s65, 0
      %s68 = sadd.s32 %s67, 1
      %s69 = scalar_select %p66, %s67, %s68
      %p72 = pneg %p66
      %p73 = scmp.eq.s32.totalorder %s19, 2
      %p74 = por %p72, %p73
      %p75 = scmp.ne.s32.totalorder %s67, %s70
      %p76 = scmp.eq.s32.totalorder %s19, 0
      %p77 = por %p75, %p76
      %p78 = scmp.ne.s32.totalorder %s67, %s70
      %p79 = scmp.eq.s32.totalorder %s24, 2
      %p80 = por %p78, %p79
      %p81 = scmp.ne.s32.totalorder %s70, %s71
      %p82 = scmp.eq.s32.totalorder %s24, 0
      %p83 = por %p81, %p82
      %p84 = scmp.ne.s32.totalorder %s70, %s71
      %p85 = scmp.eq.s32.totalorder %s25, 2
      %p86 = por %p84, %p85
      %p88 = scmp.ne.s32.totalorder %s71, %s87
      %p89 = scmp.eq.s32.totalorder %s25, 0
      %p90 = por %p88, %p89
      %s91 = ssub.s32 %s27, %s34
      %p92 = scmp.eq.s32.totalorder %s91, 0
      %s94 = sadd.s32 %s93, 1
      %s95 = scalar_select %p92, %s93, %s94
      %p98 = pneg %p92
      %p99 = scmp.eq.s32.totalorder %s19, 2
      %p100 = por %p98, %p99
      %p101 = scmp.ne.s32.totalorder %s93, %s96
      %p102 = scmp.eq.s32.totalorder %s19, 0
      %p103 = por %p101, %p102
      %p104 = scmp.ne.s32.totalorder %s93, %s96
      %p105 = scmp.eq.s32.totalorder %s24, 2
      %p106 = por %p104, %p105
      %p107 = scmp.ne.s32.totalorder %s96, %s97
      %p108 = scmp.eq.s32.totalorder %s24, 0
      %p109 = por %p107, %p108
      %p110 = scmp.ne.s32.totalorder %s96, %s97
      %p111 = scmp.eq.s32.totalorder %s25, 2
      %p112 = por %p110, %p111
      %p114 = scmp.ne.s32.totalorder %s97, %s113
      %p115 = scmp.eq.s32.totalorder %s25, 0
      %p116 = por %p114, %p115
      %s117 = ssub.s32 %s27, %s34
      %p118 = scmp.eq.s32.totalorder %s117, 0
      %s120 = sadd.s32 %s119, 1
      %s121 = scalar_select %p118, %s119, %s120
      %p124 = pneg %p118
      %p125 = scmp.eq.s32.totalorder %s19, 2
      %p126 = por %p124, %p125
      %p127 = scmp.ne.s32.totalorder %s119, %s122
      %p128 = scmp.eq.s32.totalorder %s19, 0
      %p129 = por %p127, %p128
      %p130 = scmp.ne.s32.totalorder %s119, %s122
      %p131 = scmp.eq.s32.totalorder %s24, 2
      %p132 = por %p130, %p131
      %p133 = scmp.ne.s32.totalorder %s122, %s123
      %p134 = scmp.eq.s32.totalorder %s24, 0
      %p135 = por %p133, %p134
      %p136 = scmp.ne.s32.totalorder %s122, %s123
      %p137 = scmp.eq.s32.totalorder %s25, 2
      %p138 = por %p136, %p137
      %p140 = scmp.ne.s32.totalorder %s123, %s139
      %p141 = scmp.eq.s32.totalorder %s25, 0
      %p142 = por %p140, %p141
      %s144 = sadd.s32 %s143, 1
      %p147 = scmp.eq.s32.totalorder %s19, 2
      %p148 = scmp.ne.s32.totalorder %s143, %s145
      %p149 = scmp.eq.s32.totalorder %s19, 0
      %p150 = por %p148, %p149
      %p151 = scmp.ne.s32.totalorder %s143, %s145
      %p152 = scmp.eq.s32.totalorder %s24, 2
      %p153 = por %p151, %p152
      %p154 = scmp.ne.s32.totalorder %s145, %s146
      %p155 = scmp.eq.s32.totalorder %s24, 0
      %p156 = por %p154, %p155
      %p157 = scmp.ne.s32.totalorder %s145, %s146
      %p158 = scmp.eq.s32.totalorder %s25, 2
      %p159 = por %p157, %p158
      %p161 = scmp.ne.s32.totalorder %s146, %s160
      %p162 = scmp.eq.s32.totalorder %s25, 0
      %p163 = por %p161, %p162
      %s164 = ssub.s32 %s26, %s38
      %p165 = scmp.eq.s32.totalorder %s164, 0
      %s167 = sadd.s32 %s166, 1
      %s168 = scalar_select %p165, %s166, %s167
      %p171 = pneg %p165
      %p172 = scmp.eq.s32.totalorder %s19, 2
      %p173 = por %p171, %p172
      %p174 = scmp.ne.s32.totalorder %s166, %s169
      %p175 = scmp.eq.s32.totalorder %s19, 0
      %p176 = por %p174, %p175
      %p177 = scmp.ne.s32.totalorder %s166, %s169
      %p178 = scmp.eq.s32.totalorder %s24, 2
      %p179 = por %p177, %p178
      %p180 = scmp.ne.s32.totalorder %s169, %s170
      %p181 = scmp.eq.s32.totalorder %s24, 0
      %p182 = por %p180, %p181
      %p183 = scmp.ne.s32.totalorder %s169, %s170
      %p184 = scmp.eq.s32.totalorder %s25, 2
      %p185 = por %p183, %p184
      %p187 = scmp.ne.s32.totalorder %s170, %s186
      %p188 = scmp.eq.s32.totalorder %s25, 0
      %p189 = por %p187, %p188
      %p190 = scmp.le.s32.totalorder 1, %s19
      %p191 = scmp.lt.s32.totalorder %s19, 4
      %p192 = pnand %p190, %p191
      %p193 = pneg %p192
      // Predicated region
      $region9: #{tpu_custom_call.1} parent=5 // pred_check
        _
      $region10: #{tpu_custom_call.1} parent=5 // pred_check_branch
        %195 = sbr.rel (%p192) target = $region12
      $region11: #{tpu_custom_call.1} parent=5 // pred_region
        %s196 = ssub.s32 %s19, 1
        // Predicated region
        $region13: #{tpu_custom_call.1} parent=11 // pred_check
          %p197 = pneg %p57
        $region14: #{tpu_custom_call.1} parent=11 // pred_check_branch
          %199 = sbr.rel (%p197) target = $region16
        $region15: #{tpu_custom_call.1} parent=11 // pred_region
          %s200 = smul.u32 2, %s28
          %s202 = ssub.s32 768, 768
          %203 = vsyncadd [#allocation4], %s202
          %s204 = smul.addr %s200, 6
          %s205 = smul.addr %s204, 64
          %s206 = scalar_lea.hbm %s0, %s205
          %s207 = sshll.u32 [#allocation3], 4
          %s208 = int_to_ptr.vmem [resolvable:$true] %s207
          %213 = dma.hbm_to_vmem [thread:$0]  %s206, 768, %s208, [#allocation4], 384, 384, 24
        $region16: #{tpu_custom_call.1} parent=11 // pred_fallthru
          _
        // Predicated region
        $region17: #{tpu_custom_call.1} parent=11 // pred_check
          %p214 = pneg %p156
        $region18: #{tpu_custom_call.1} parent=11 // pred_check_branch
          %216 = sbr.rel (%p214) target = $region20
        $region19: #{tpu_custom_call.1} parent=11 // pred_region
          %s218 = ssub.s32 64, 64
          %219 = vsyncadd [#allocation10], %s218
          %s221 = sshll.u32 [#allocation11], 4
          %s222 = int_to_ptr.vmem [resolvable:$true] %s221
          %224 = dma.hbm_to_vmem [thread:$0]  %s4, 64, %s222, [#allocation10]
        $region20: #{tpu_custom_call.1} parent=11 // pred_fallthru
          _
      $region12: #{tpu_custom_call.1} parent=5 // pred_fallthru
        _
      %p225 = scmp.lt.s32.totalorder %s19, 3
      // Predicated region
      $region21: #{tpu_custom_call.1} parent=5 // pred_check
        %p226 = pneg %p225
      $region22: #{tpu_custom_call.1} parent=5 // pred_check_branch
        %228 = sbr.rel (%p226) target = $region24
      $region23: #{tpu_custom_call.1} parent=5 // pred_region
        // Predicated region
        $region25: #{tpu_custom_call.1} parent=23 // pred_check
          %p229 = pneg %p77
        $region26: #{tpu_custom_call.1} parent=23 // pred_check_branch
          %231 = sbr.rel (%p229) target = $region28
        $region27: #{tpu_custom_call.1} parent=23 // pred_region
          %s232 = sand.u32 %s19, 1
          %s233 = scalar_lea.sflag [#allocation7], %s232
          %s234 = sand.u32 %s67, 1
          %s235 = smul.addr %s234, 3072
          %s236 = scalar_lea.vmem [#allocation6], %s235
          %s237 = smul.u32 8, %s27
          %s239 = ssub.s32 49152, 49152
          %240 = vsyncadd %s233, %s239
          %s241 = smul.addr %s237, 64
          %s242 = scalar_lea.hbm %s1, %s241
          %s243 = sshll.u32 %s236, 4
          %s244 = int_to_ptr.vmem [resolvable:$true] %s243
          %249 = dma.hbm_to_vmem [thread:$0]  %s242, 49152, %s244, %s233, 1536, 512, 32
        $region28: #{tpu_custom_call.1} parent=23 // pred_fallthru
          _
        // Predicated region
        $region29: #{tpu_custom_call.1} parent=23 // pred_check
          %p250 = pneg %p103
        $region30: #{tpu_custom_call.1} parent=23 // pred_check_branch
          %252 = sbr.rel (%p250) target = $region32
        $region31: #{tpu_custom_call.1} parent=23 // pred_region
          %s253 = sand.u32 %s19, 1
          %s254 = scalar_lea.sflag [#allocation7], %s253
          %s255 = sand.u32 %s93, 1
          %s256 = smul.addr %s255, 8
          %s257 = scalar_lea.vmem [#allocation8], %s256
          %s258 = smul.u32 8, %s27
          %s260 = ssub.s32 128, 128
          %261 = vsyncadd %s254, %s260
          %s262 = smul.addr %s258, 16
          %s263 = scalar_lea.hbm %s2, %s262
          %s265 = sshll.u32 %s257, 4
          %s266 = int_to_ptr.vmem [resolvable:$true] %s265
          %268 = dma.hbm_to_vmem [thread:$0]  %s263, 128, %s266, %s254
        $region32: #{tpu_custom_call.1} parent=23 // pred_fallthru
          _
        // Predicated region
        $region33: #{tpu_custom_call.1} parent=23 // pred_check
          %p269 = pneg %p129
        $region34: #{tpu_custom_call.1} parent=23 // pred_check_branch
          %271 = sbr.rel (%p269) target = $region36
        $region35: #{tpu_custom_call.1} parent=23 // pred_region
          %s272 = sand.u32 %s19, 1
          %s273 = scalar_lea.sflag [#allocation10], %s272
          %s274 = sand.u32 %s119, 1
          %s275 = smul.addr %s274, 2048
          %s276 = scalar_lea.vmem [#allocation9], %s275
          %s277 = smul.u32 128, %s27
          %s279 = ssub.s32 32768, 32768
          %280 = vsyncadd %s273, %s279
          %s281 = smul.addr %s277, 4
          %s282 = smul.addr %s281, 64
          %s283 = scalar_lea.hbm %s3, %s282
          %s284 = sshll.u32 %s276, 4
          %s285 = int_to_ptr.vmem [resolvable:$true] %s284
          %290 = dma.hbm_to_vmem [thread:$0]  %s283, 32768, %s285, %s273, 256, 256, 16
        $region36: #{tpu_custom_call.1} parent=23 // pred_fallthru
          _
      $region24: #{tpu_custom_call.1} parent=5 // pred_fallthru
        _
      %p291 = scmp.le.s32.totalorder 1, %s19
      %p292 = scmp.lt.s32.totalorder %s19, 4
      %p293 = pnand %p291, %p292
      %p294 = pneg %p293
      // Predicated region
      $region37: #{tpu_custom_call.1} parent=5 // pred_check
        _
      $region38: #{tpu_custom_call.1} parent=5 // pred_check_branch
        %296 = sbr.rel (%p293) target = $region40
      $region39: #{tpu_custom_call.1} parent=5 // pred_region
        %s297 = ssub.s32 %s19, 1
        // Predicated region
        $region41: #{tpu_custom_call.1} parent=39 // pred_check
          %p298 = pneg %p57
        $region42: #{tpu_custom_call.1} parent=39 // pred_check_branch
          %300 = sbr.rel (%p298) target = $region44
        $region43: #{tpu_custom_call.1} parent=39 // pred_region
          %301 = dma.done [#allocation4], 768
        $region44: #{tpu_custom_call.1} parent=39 // pred_fallthru
          _
        %s302 = sand.u32 %s24, 1
        %s303 = scalar_lea.sflag [#allocation7], %s302
        %s304 = sand.u32 %s70, 1
        %s305 = smul.addr %s304, 3072
        %s306 = scalar_lea.vmem [#allocation6], %s305
        // Predicated region
        $region45: #{tpu_custom_call.1} parent=39 // pred_check
          %p307 = pneg %p83
        $region46: #{tpu_custom_call.1} parent=39 // pred_check_branch
          %309 = sbr.rel (%p307) target = $region48
        $region47: #{tpu_custom_call.1} parent=39 // pred_region
          %310 = dma.done %s303, 49152
        $region48: #{tpu_custom_call.1} parent=39 // pred_fallthru
          _
        %s311 = sand.u32 %s24, 1
        %s312 = scalar_lea.sflag [#allocation7], %s311
        %s313 = sand.u32 %s96, 1
        %s314 = smul.addr %s313, 8
        %s315 = scalar_lea.vmem [#allocation8], %s314
        // Predicated region
        $region49: #{tpu_custom_call.1} parent=39 // pred_check
          %p316 = pneg %p109
        $region50: #{tpu_custom_call.1} parent=39 // pred_check_branch
          %318 = sbr.rel (%p316) target = $region52
        $region51: #{tpu_custom_call.1} parent=39 // pred_region
          %319 = dma.done %s312, 128
        $region52: #{tpu_custom_call.1} parent=39 // pred_fallthru
          _
        %s320 = sand.u32 %s24, 1
        %s321 = scalar_lea.sflag [#allocation10], %s320
        %s322 = sand.u32 %s122, 1
        %s323 = smul.addr %s322, 2048
        %s324 = scalar_lea.vmem [#allocation9], %s323
        // Predicated region
        $region53: #{tpu_custom_call.1} parent=39 // pred_check
          %p325 = pneg %p135
        $region54: #{tpu_custom_call.1} parent=39 // pred_check_branch
          %327 = sbr.rel (%p325) target = $region56
        $region55: #{tpu_custom_call.1} parent=39 // pred_region
          %328 = dma.done %s321, 32768
        $region56: #{tpu_custom_call.1} parent=39 // pred_fallthru
          _
        // Predicated region
        $region57: #{tpu_custom_call.1} parent=39 // pred_check
          %p329 = pneg %p156
        $region58: #{tpu_custom_call.1} parent=39 // pred_check_branch
          %331 = sbr.rel (%p329) target = $region60
        $region59: #{tpu_custom_call.1} parent=39 // pred_region
          %332 = dma.done [#allocation10], 64
        $region60: #{tpu_custom_call.1} parent=39 // pred_fallthru
          _
        %p333 = pneg %p57
        %p334 = pneg %p54
        %s335 = sand.u32 %s24, 1
        %s336 = scalar_lea.sflag [#allocation7], %s335
        %s337 = sand.u32 %s70, 1
        %s338 = smul.addr %s337, 3072
        %s339 = scalar_lea.vmem [#allocation6], %s338
        %p340 = pneg %p83
        %p341 = pneg %p80
        %s342 = sand.u32 %s24, 1
        %s343 = scalar_lea.sflag [#allocation7], %s342
        %s344 = sand.u32 %s96, 1
        %s345 = smul.addr %s344, 8
        %s346 = scalar_lea.vmem [#allocation8], %s345
        %p347 = pneg %p109
        %p348 = pneg %p106
        %s349 = sand.u32 %s24, 1
        %s350 = scalar_lea.sflag [#allocation10], %s349
        %s351 = sand.u32 %s122, 1
        %s352 = smul.addr %s351, 2048
        %s353 = scalar_lea.vmem [#allocation9], %s352
        %p354 = pneg %p135
        %p355 = pneg %p132
        %p356 = pneg %p156
        %p357 = pneg %p153
        %p358 = pneg %p182
        %p359 = pneg %p179
        %s360 = smul.u32 2, %s28
        %s361 = smul.u32 8, %s29
        %s362 = smul.u32 8, %s29
        %s363 = smul.u32 128, %s29
        %s364 = smul.u32 2, %s28
        %p365 = scmp.eq.s32.totalorder %s29, 0
        // Predicated region
        $region61: #{tpu_custom_call.1} parent=39 // pred_check
          %p366 = pneg %p365
        $region62: #{tpu_custom_call.1} parent=39 // pred_check_branch
          %368 = sbr.rel (%p366) target = $region64
        $region63: #{tpu_custom_call.1} parent=39 // pred_region
          %369 = vst [vmem:[#allocation2] sm:$0xff] 0.0
          %370 = vst [vmem:[#allocation2 + $0x8] sm:$0xff] 0.0
          %371 = vst [vmem:[#allocation2 + $0x10] sm:$0xff] 0.0
          %372 = vst [vmem:[#allocation2 + $0x18] sm:$0xff] 0.0
          %373 = vst [vmem:[#allocation2 + $0x20] sm:$0xff] 0.0
          %374 = vst [vmem:[#allocation2 + $0x28] sm:$0xff] 0.0
          %375 = vst [vmem:[#allocation2 + $0x30] sm:$0xff] 0.0
          %376 = vst [vmem:[#allocation2 + $0x38] sm:$0xff] 0.0
        $region64: #{tpu_custom_call.1} parent=39 // pred_fallthru
          _
        %v377 = vld [vmem:[#allocation3] sm:$0xff]
        %v378 = vld [vmem:[#allocation3 + $0x8] sm:$0xff]
        %v379 = vld [vmem:[#allocation3 + $0x10] sm:$0xff]
        %v380 = vld [vmem:[#allocation3 + $0x18] sm:$0xff]
        %v381 = vld [vmem:[#allocation3 + $0x20] sm:$0xff]
        %v382 = vld [vmem:[#allocation3 + $0x28] sm:$0xff]
        %v383 = vld [vmem:[%s306] sm:$0xff]
        %v384 = vld [vmem:[%s306 + $0x8] sm:$0xff]
        %v385 = vld [vmem:[%s306 + $0x10] sm:$0xff]
        %v386 = vld [vmem:[%s306 + $0x18] sm:$0xff]
        %v387 = vld [vmem:[%s306 + $0x20] sm:$0xff]
        %v388 = vld [vmem:[%s306 + $0x28] sm:$0xff]
        %v389 = vld [vmem:[%s306 + $0x30] sm:$0xff]
        %v390 = vld [vmem:[%s306 + $0x38] sm:$0xff]
        %v391 = vld [vmem:[%s306 + $0x40] sm:$0xff]
        %v392 = vld [vmem:[%s306 + $0x48] sm:$0xff]
        %v393 = vld [vmem:[%s306 + $0x50] sm:$0xff]
        %v394 = vld [vmem:[%s306 + $0x58] sm:$0xff]
        %v395 = vld [vmem:[%s306 + $0x60] sm:$0xff]
        %v396 = vld [vmem:[%s306 + $0x68] sm:$0xff]
        %v397 = vld [vmem:[%s306 + $0x70] sm:$0xff]
        %v398 = vld [vmem:[%s306 + $0x78] sm:$0xff]
        %v399 = vld [vmem:[%s306 + $0x80] sm:$0xff]
        %v400 = vld [vmem:[%s306 + $0x88] sm:$0xff]
        %v401 = vld [vmem:[%s306 + $0x90] sm:$0xff]
        %v402 = vld [vmem:[%s306 + $0x98] sm:$0xff]
        %v403 = vld [vmem:[%s306 + $0xa0] sm:$0xff]
        %v404 = vld [vmem:[%s306 + $0xa8] sm:$0xff]
        %v405 = vld [vmem:[%s306 + $0xb0] sm:$0xff]
        %v406 = vld [vmem:[%s306 + $0xb8] sm:$0xff]
        %v407 = vld [vmem:[%s306 + $0xc0] sm:$0xff]
        %v408 = vld [vmem:[%s306 + $0xc8] sm:$0xff]
        %v409 = vld [vmem:[%s306 + $0xd0] sm:$0xff]
        %v410 = vld [vmem:[%s306 + $0xd8] sm:$0xff]
        %v411 = vld [vmem:[%s306 + $0xe0] sm:$0xff]
        %v412 = vld [vmem:[%s306 + $0xe8] sm:$0xff]
        %v413 = vld [vmem:[%s306 + $0xf0] sm:$0xff]
        %v414 = vld [vmem:[%s306 + $0xf8] sm:$0xff]
        %v415 = vld [vmem:[%s306 + $0x100] sm:$0xff]
        %v416 = vld [vmem:[%s306 + $0x108] sm:$0xff]
        %v417 = vld [vmem:[%s306 + $0x110] sm:$0xff]
        %v418 = vld [vmem:[%s306 + $0x118] sm:$0xff]
        %v419 = vld [vmem:[%s306 + $0x120] sm:$0xff]
        %v420 = vld [vmem:[%s306 + $0x128] sm:$0xff]
        %v421 = vld [vmem:[%s306 + $0x130] sm:$0xff]
        %v422 = vld [vmem:[%s306 + $0x138] sm:$0xff]
        %v423 = vld [vmem:[%s306 + $0x140] sm:$0xff]
        %v424 = vld [vmem:[%s306 + $0x148] sm:$0xff]
        %v425 = vld [vmem:[%s306 + $0x150] sm:$0xff]
        %v426 = vld [vmem:[%s306 + $0x158] sm:$0xff]
        %v427 = vld [vmem:[%s306 + $0x160] sm:$0xff]
        %v428 = vld [vmem:[%s306 + $0x168] sm:$0xff]
        %v429 = vld [vmem:[%s306 + $0x170] sm:$0xff]
        %v430 = vld [vmem:[%s306 + $0x178] sm:$0xff]
        %v431 = vld [vmem:[%s306 + $0x180] sm:$0xff]
        %v432 = vld [vmem:[%s306 + $0x188] sm:$0xff]
        %v433 = vld [vmem:[%s306 + $0x190] sm:$0xff]
        %v434 = vld [vmem:[%s306 + $0x198] sm:$0xff]
        %v435 = vld [vmem:[%s306 + $0x1a0] sm:$0xff]
        %v436 = vld [vmem:[%s306 + $0x1a8] sm:$0xff]
        %v437 = vld [vmem:[%s306 + $0x1b0] sm:$0xff]
        %v438 = vld [vmem:[%s306 + $0x1b8] sm:$0xff]
        %v439 = vld [vmem:[%s306 + $0x1c0] sm:$0xff]
        %v440 = vld [vmem:[%s306 + $0x1c8] sm:$0xff]
        %v441 = vld [vmem:[%s306 + $0x1d0] sm:$0xff]
        %v442 = vld [vmem:[%s306 + $0x1d8] sm:$0xff]
        %v443 = vld [vmem:[%s306 + $0x1e0] sm:$0xff]
        %v444 = vld [vmem:[%s306 + $0x1e8] sm:$0xff]
        %v445 = vld [vmem:[%s306 + $0x1f0] sm:$0xff]
        %v446 = vld [vmem:[%s306 + $0x1f8] sm:$0xff]
        %v447 = vld [vmem:[%s306 + $0x200] sm:$0xff]
        %v448 = vld [vmem:[%s306 + $0x208] sm:$0xff]
        %v449 = vld [vmem:[%s306 + $0x210] sm:$0xff]
        %v450 = vld [vmem:[%s306 + $0x218] sm:$0xff]
        %v451 = vld [vmem:[%s306 + $0x220] sm:$0xff]
        %v452 = vld [vmem:[%s306 + $0x228] sm:$0xff]
        %v453 = vld [vmem:[%s306 + $0x230] sm:$0xff]
        %v454 = vld [vmem:[%s306 + $0x238] sm:$0xff]
        %v455 = vld [vmem:[%s306 + $0x240] sm:$0xff]
        %v456 = vld [vmem:[%s306 + $0x248] sm:$0xff]
        %v457 = vld [vmem:[%s306 + $0x250] sm:$0xff]
        %v458 = vld [vmem:[%s306 + $0x258] sm:$0xff]
        %v459 = vld [vmem:[%s306 + $0x260] sm:$0xff]
        %v460 = vld [vmem:[%s306 + $0x268] sm:$0xff]
        %v461 = vld [vmem:[%s306 + $0x270] sm:$0xff]
        %v462 = vld [vmem:[%s306 + $0x278] sm:$0xff]
        %v463 = vld [vmem:[%s306 + $0x280] sm:$0xff]
        %v464 = vld [vmem:[%s306 + $0x288] sm:$0xff]
        %v465 = vld [vmem:[%s306 + $0x290] sm:$0xff]
        %v466 = vld [vmem:[%s306 + $0x298] sm:$0xff]
        %v467 = vld [vmem:[%s306 + $0x2a0] sm:$0xff]
        %v468 = vld [vmem:[%s306 + $0x2a8] sm:$0xff]
        %v469 = vld [vmem:[%s306 + $0x2b0] sm:$0xff]
        %v470 = vld [vmem:[%s306 + $0x2b8] sm:$0xff]
        %v471 = vld [vmem:[%s306 + $0x2c0] sm:$0xff]
        %v472 = vld [vmem:[%s306 + $0x2c8] sm:$0xff]
        %v473 = vld [vmem:[%s306 + $0x2d0] sm:$0xff]
        %v474 = vld [vmem:[%s306 + $0x2d8] sm:$0xff]
        %v475 = vld [vmem:[%s306 + $0x2e0] sm:$0xff]
        %v476 = vld [vmem:[%s306 + $0x2e8] sm:$0xff]
        %v477 = vld [vmem:[%s306 + $0x2f0] sm:$0xff]
        %v478 = vld [vmem:[%s306 + $0x2f8] sm:$0xff]
        %v479 = vld [vmem:[%s306 + $0x300] sm:$0xff]
        %v480 = vld [vmem:[%s306 + $0x308] sm:$0xff]
        %v481 = vld [vmem:[%s306 + $0x310] sm:$0xff]
        %v482 = vld [vmem:[%s306 + $0x318] sm:$0xff]
        %v483 = vld [vmem:[%s306 + $0x320] sm:$0xff]
        %v484 = vld [vmem:[%s306 + $0x328] sm:$0xff]
        %v485 = vld [vmem:[%s306 + $0x330] sm:$0xff]
        %v486 = vld [vmem:[%s306 + $0x338] sm:$0xff]
        %v487 = vld [vmem:[%s306 + $0x340] sm:$0xff]
        %v488 = vld [vmem:[%s306 + $0x348] sm:$0xff]
        %v489 = vld [vmem:[%s306 + $0x350] sm:$0xff]
        %v490 = vld [vmem:[%s306 + $0x358] sm:$0xff]
        %v491 = vld [vmem:[%s306 + $0x360] sm:$0xff]
        %v492 = vld [vmem:[%s306 + $0x368] sm:$0xff]
        %v493 = vld [vmem:[%s306 + $0x370] sm:$0xff]
        %v494 = vld [vmem:[%s306 + $0x378] sm:$0xff]
        %v495 = vld [vmem:[%s306 + $0x380] sm:$0xff]
        %v496 = vld [vmem:[%s306 + $0x388] sm:$0xff]
        %v497 = vld [vmem:[%s306 + $0x390] sm:$0xff]
        %v498 = vld [vmem:[%s306 + $0x398] sm:$0xff]
        %v499 = vld [vmem:[%s306 + $0x3a0] sm:$0xff]
        %v500 = vld [vmem:[%s306 + $0x3a8] sm:$0xff]
        %v501 = vld [vmem:[%s306 + $0x3b0] sm:$0xff]
        %v502 = vld [vmem:[%s306 + $0x3b8] sm:$0xff]
        %v503 = vld [vmem:[%s306 + $0x3c0] sm:$0xff]
        %v504 = vld [vmem:[%s306 + $0x3c8] sm:$0xff]
        %v505 = vld [vmem:[%s306 + $0x3d0] sm:$0xff]
        %v506 = vld [vmem:[%s306 + $0x3d8] sm:$0xff]
        %v507 = vld [vmem:[%s306 + $0x3e0] sm:$0xff]
        %v508 = vld [vmem:[%s306 + $0x3e8] sm:$0xff]
        %v509 = vld [vmem:[%s306 + $0x3f0] sm:$0xff]
        %v510 = vld [vmem:[%s306 + $0x3f8] sm:$0xff]
        %v511 = vld [vmem:[%s306 + $0x400] sm:$0xff]
        %v512 = vld [vmem:[%s306 + $0x408] sm:$0xff]
        %v513 = vld [vmem:[%s306 + $0x410] sm:$0xff]
        %v514 = vld [vmem:[%s306 + $0x418] sm:$0xff]
        %v515 = vld [vmem:[%s306 + $0x420] sm:$0xff]
        %v516 = vld [vmem:[%s306 + $0x428] sm:$0xff]
        %v517 = vld [vmem:[%s306 + $0x430] sm:$0xff]
        %v518 = vld [vmem:[%s306 + $0x438] sm:$0xff]
        %v519 = vld [vmem:[%s306 + $0x440] sm:$0xff]
        %v520 = vld [vmem:[%s306 + $0x448] sm:$0xff]
        %v521 = vld [vmem:[%s306 + $0x450] sm:$0xff]
        %v522 = vld [vmem:[%s306 + $0x458] sm:$0xff]
        %v523 = vld [vmem:[%s306 + $0x460] sm:$0xff]
        %v524 = vld [vmem:[%s306 + $0x468] sm:$0xff]
        %v525 = vld [vmem:[%s306 + $0x470] sm:$0xff]
        %v526 = vld [vmem:[%s306 + $0x478] sm:$0xff]
        %v527 = vld [vmem:[%s306 + $0x480] sm:$0xff]
        %v528 = vld [vmem:[%s306 + $0x488] sm:$0xff]
        %v529 = vld [vmem:[%s306 + $0x490] sm:$0xff]
        %v530 = vld [vmem:[%s306 + $0x498] sm:$0xff]
        %v531 = vld [vmem:[%s306 + $0x4a0] sm:$0xff]
        %v532 = vld [vmem:[%s306 + $0x4a8] sm:$0xff]
        %v533 = vld [vmem:[%s306 + $0x4b0] sm:$0xff]
        %v534 = vld [vmem:[%s306 + $0x4b8] sm:$0xff]
        %v535 = vld [vmem:[%s306 + $0x4c0] sm:$0xff]
        %v536 = vld [vmem:[%s306 + $0x4c8] sm:$0xff]
        %v537 = vld [vmem:[%s306 + $0x4d0] sm:$0xff]
        %v538 = vld [vmem:[%s306 + $0x4d8] sm:$0xff]
        %v539 = vld [vmem:[%s306 + $0x4e0] sm:$0xff]
        %v540 = vld [vmem:[%s306 + $0x4e8] sm:$0xff]
        %v541 = vld [vmem:[%s306 + $0x4f0] sm:$0xff]
        %v542 = vld [vmem:[%s306 + $0x4f8] sm:$0xff]
        %v543 = vld [vmem:[%s306 + $0x500] sm:$0xff]
        %v544 = vld [vmem:[%s306 + $0x508] sm:$0xff]
        %v545 = vld [vmem:[%s306 + $0x510] sm:$0xff]
        %v546 = vld [vmem:[%s306 + $0x518] sm:$0xff]
        %v547 = vld [vmem:[%s306 + $0x520] sm:$0xff]
        %v548 = vld [vmem:[%s306 + $0x528] sm:$0xff]
        %v549 = vld [vmem:[%s306 + $0x530] sm:$0xff]
        %v550 = vld [vmem:[%s306 + $0x538] sm:$0xff]
        %v551 = vld [vmem:[%s306 + $0x540] sm:$0xff]
        %v552 = vld [vmem:[%s306 + $0x548] sm:$0xff]
        %v553 = vld [vmem:[%s306 + $0x550] sm:$0xff]
        %v554 = vld [vmem:[%s306 + $0x558] sm:$0xff]
        %v555 = vld [vmem:[%s306 + $0x560] sm:$0xff]
        %v556 = vld [vmem:[%s306 + $0x568] sm:$0xff]
        %v557 = vld [vmem:[%s306 + $0x570] sm:$0xff]
        %v558 = vld [vmem:[%s306 + $0x578] sm:$0xff]
        %v559 = vld [vmem:[%s306 + $0x580] sm:$0xff]
        %v560 = vld [vmem:[%s306 + $0x588] sm:$0xff]
        %v561 = vld [vmem:[%s306 + $0x590] sm:$0xff]
        %v562 = vld [vmem:[%s306 + $0x598] sm:$0xff]
        %v563 = vld [vmem:[%s306 + $0x5a0] sm:$0xff]
        %v564 = vld [vmem:[%s306 + $0x5a8] sm:$0xff]
        %v565 = vld [vmem:[%s306 + $0x5b0] sm:$0xff]
        %v566 = vld [vmem:[%s306 + $0x5b8] sm:$0xff]
        %v567 = vld [vmem:[%s306 + $0x5c0] sm:$0xff]
        %v568 = vld [vmem:[%s306 + $0x5c8] sm:$0xff]
        %v569 = vld [vmem:[%s306 + $0x5d0] sm:$0xff]
        %v570 = vld [vmem:[%s306 + $0x5d8] sm:$0xff]
        %v571 = vld [vmem:[%s306 + $0x5e0] sm:$0xff]
        %v572 = vld [vmem:[%s306 + $0x5e8] sm:$0xff]
        %v573 = vld [vmem:[%s306 + $0x5f0] sm:$0xff]
        %v574 = vld [vmem:[%s306 + $0x5f8] sm:$0xff]
        %v575 = vld [vmem:[%s306 + $0x600] sm:$0xff]
        %v576 = vld [vmem:[%s306 + $0x608] sm:$0xff]
        %v577 = vld [vmem:[%s306 + $0x610] sm:$0xff]
        %v578 = vld [vmem:[%s306 + $0x618] sm:$0xff]
        %v579 = vld [vmem:[%s306 + $0x620] sm:$0xff]
        %v580 = vld [vmem:[%s306 + $0x628] sm:$0xff]
        %v581 = vld [vmem:[%s306 + $0x630] sm:$0xff]
        %v582 = vld [vmem:[%s306 + $0x638] sm:$0xff]
        %v583 = vld [vmem:[%s306 + $0x640] sm:$0xff]
        %v584 = vld [vmem:[%s306 + $0x648] sm:$0xff]
        %v585 = vld [vmem:[%s306 + $0x650] sm:$0xff]
        %v586 = vld [vmem:[%s306 + $0x658] sm:$0xff]
        %v587 = vld [vmem:[%s306 + $0x660] sm:$0xff]
        %v588 = vld [vmem:[%s306 + $0x668] sm:$0xff]
        %v589 = vld [vmem:[%s306 + $0x670] sm:$0xff]
        %v590 = vld [vmem:[%s306 + $0x678] sm:$0xff]
        %v591 = vld [vmem:[%s306 + $0x680] sm:$0xff]
        %v592 = vld [vmem:[%s306 + $0x688] sm:$0xff]
        %v593 = vld [vmem:[%s306 + $0x690] sm:$0xff]
        %v594 = vld [vmem:[%s306 + $0x698] sm:$0xff]
        %v595 = vld [vmem:[%s306 + $0x6a0] sm:$0xff]
        %v596 = vld [vmem:[%s306 + $0x6a8] sm:$0xff]
        %v597 = vld [vmem:[%s306 + $0x6b0] sm:$0xff]
        %v598 = vld [vmem:[%s306 + $0x6b8] sm:$0xff]
        %v599 = vld [vmem:[%s306 + $0x6c0] sm:$0xff]
        %v600 = vld [vmem:[%s306 + $0x6c8] sm:$0xff]
        %v601 = vld [vmem:[%s306 + $0x6d0] sm:$0xff]
        %v602 = vld [vmem:[%s306 + $0x6d8] sm:$0xff]
        %v603 = vld [vmem:[%s306 + $0x6e0] sm:$0xff]
        %v604 = vld [vmem:[%s306 + $0x6e8] sm:$0xff]
        %v605 = vld [vmem:[%s306 + $0x6f0] sm:$0xff]
        %v606 = vld [vmem:[%s306 + $0x6f8] sm:$0xff]
        %v607 = vld [vmem:[%s306 + $0x700] sm:$0xff]
        %v608 = vld [vmem:[%s306 + $0x708] sm:$0xff]
        %v609 = vld [vmem:[%s306 + $0x710] sm:$0xff]
        %v610 = vld [vmem:[%s306 + $0x718] sm:$0xff]
        %v611 = vld [vmem:[%s306 + $0x720] sm:$0xff]
        %v612 = vld [vmem:[%s306 + $0x728] sm:$0xff]
        %v613 = vld [vmem:[%s306 + $0x730] sm:$0xff]
        %v614 = vld [vmem:[%s306 + $0x738] sm:$0xff]
        %v615 = vld [vmem:[%s306 + $0x740] sm:$0xff]
        %v616 = vld [vmem:[%s306 + $0x748] sm:$0xff]
        %v617 = vld [vmem:[%s306 + $0x750] sm:$0xff]
        %v618 = vld [vmem:[%s306 + $0x758] sm:$0xff]
        %v619 = vld [vmem:[%s306 + $0x760] sm:$0xff]
        %v620 = vld [vmem:[%s306 + $0x768] sm:$0xff]
        %v621 = vld [vmem:[%s306 + $0x770] sm:$0xff]
        %v622 = vld [vmem:[%s306 + $0x778] sm:$0xff]
        %v623 = vld [vmem:[%s306 + $0x780] sm:$0xff]
        %v624 = vld [vmem:[%s306 + $0x788] sm:$0xff]
        %v625 = vld [vmem:[%s306 + $0x790] sm:$0xff]
        %v626 = vld [vmem:[%s306 + $0x798] sm:$0xff]
        %v627 = vld [vmem:[%s306 + $0x7a0] sm:$0xff]
        %v628 = vld [vmem:[%s306 + $0x7a8] sm:$0xff]
        %v629 = vld [vmem:[%s306 + $0x7b0] sm:$0xff]
        %v630 = vld [vmem:[%s306 + $0x7b8] sm:$0xff]
        %v631 = vld [vmem:[%s306 + $0x7c0] sm:$0xff]
        %v632 = vld [vmem:[%s306 + $0x7c8] sm:$0xff]
        %v633 = vld [vmem:[%s306 + $0x7d0] sm:$0xff]
        %v634 = vld [vmem:[%s306 + $0x7d8] sm:$0xff]
        %v635 = vld [vmem:[%s306 + $0x7e0] sm:$0xff]
        %v636 = vld [vmem:[%s306 + $0x7e8] sm:$0xff]
        %v637 = vld [vmem:[%s306 + $0x7f0] sm:$0xff]
        %v638 = vld [vmem:[%s306 + $0x7f8] sm:$0xff]
        %v639 = vld [vmem:[%s306 + $0x800] sm:$0xff]
        %v640 = vld [vmem:[%s306 + $0x808] sm:$0xff]
        %v641 = vld [vmem:[%s306 + $0x810] sm:$0xff]
        %v642 = vld [vmem:[%s306 + $0x818] sm:$0xff]
        %v643 = vld [vmem:[%s306 + $0x820] sm:$0xff]
        %v644 = vld [vmem:[%s306 + $0x828] sm:$0xff]
        %v645 = vld [vmem:[%s306 + $0x830] sm:$0xff]
        %v646 = vld [vmem:[%s306 + $0x838] sm:$0xff]
        %v647 = vld [vmem:[%s306 + $0x840] sm:$0xff]
        %v648 = vld [vmem:[%s306 + $0x848] sm:$0xff]
        %v649 = vld [vmem:[%s306 + $0x850] sm:$0xff]
        %v650 = vld [vmem:[%s306 + $0x858] sm:$0xff]
        %v651 = vld [vmem:[%s306 + $0x860] sm:$0xff]
        %v652 = vld [vmem:[%s306 + $0x868] sm:$0xff]
        %v653 = vld [vmem:[%s306 + $0x870] sm:$0xff]
        %v654 = vld [vmem:[%s306 + $0x878] sm:$0xff]
        %v655 = vld [vmem:[%s306 + $0x880] sm:$0xff]
        %v656 = vld [vmem:[%s306 + $0x888] sm:$0xff]
        %v657 = vld [vmem:[%s306 + $0x890] sm:$0xff]
        %v658 = vld [vmem:[%s306 + $0x898] sm:$0xff]
        %v659 = vld [vmem:[%s306 + $0x8a0] sm:$0xff]
        %v660 = vld [vmem:[%s306 + $0x8a8] sm:$0xff]
        %v661 = vld [vmem:[%s306 + $0x8b0] sm:$0xff]
        %v662 = vld [vmem:[%s306 + $0x8b8] sm:$0xff]
        %v663 = vld [vmem:[%s306 + $0x8c0] sm:$0xff]
        %v664 = vld [vmem:[%s306 + $0x8c8] sm:$0xff]
        %v665 = vld [vmem:[%s306 + $0x8d0] sm:$0xff]
        %v666 = vld [vmem:[%s306 + $0x8d8] sm:$0xff]
        %v667 = vld [vmem:[%s306 + $0x8e0] sm:$0xff]
        %v668 = vld [vmem:[%s306 + $0x8e8] sm:$0xff]
        %v669 = vld [vmem:[%s306 + $0x8f0] sm:$0xff]
        %v670 = vld [vmem:[%s306 + $0x8f8] sm:$0xff]
        %v671 = vld [vmem:[%s306 + $0x900] sm:$0xff]
        %v672 = vld [vmem:[%s306 + $0x908] sm:$0xff]
        %v673 = vld [vmem:[%s306 + $0x910] sm:$0xff]
        %v674 = vld [vmem:[%s306 + $0x918] sm:$0xff]
        %v675 = vld [vmem:[%s306 + $0x920] sm:$0xff]
        %v676 = vld [vmem:[%s306 + $0x928] sm:$0xff]
        %v677 = vld [vmem:[%s306 + $0x930] sm:$0xff]
        %v678 = vld [vmem:[%s306 + $0x938] sm:$0xff]
        %v679 = vld [vmem:[%s306 + $0x940] sm:$0xff]
        %v680 = vld [vmem:[%s306 + $0x948] sm:$0xff]
        %v681 = vld [vmem:[%s306 + $0x950] sm:$0xff]
        %v682 = vld [vmem:[%s306 + $0x958] sm:$0xff]
        %v683 = vld [vmem:[%s306 + $0x960] sm:$0xff]
        %v684 = vld [vmem:[%s306 + $0x968] sm:$0xff]
        %v685 = vld [vmem:[%s306 + $0x970] sm:$0xff]
        %v686 = vld [vmem:[%s306 + $0x978] sm:$0xff]
        %v687 = vld [vmem:[%s306 + $0x980] sm:$0xff]
        %v688 = vld [vmem:[%s306 + $0x988] sm:$0xff]
        %v689 = vld [vmem:[%s306 + $0x990] sm:$0xff]
        %v690 = vld [vmem:[%s306 + $0x998] sm:$0xff]
        %v691 = vld [vmem:[%s306 + $0x9a0] sm:$0xff]
        %v692 = vld [vmem:[%s306 + $0x9a8] sm:$0xff]
        %v693 = vld [vmem:[%s306 + $0x9b0] sm:$0xff]
        %v694 = vld [vmem:[%s306 + $0x9b8] sm:$0xff]
        %v695 = vld [vmem:[%s306 + $0x9c0] sm:$0xff]
        %v696 = vld [vmem:[%s306 + $0x9c8] sm:$0xff]
        %v697 = vld [vmem:[%s306 + $0x9d0] sm:$0xff]
        %v698 = vld [vmem:[%s306 + $0x9d8] sm:$0xff]
        %v699 = vld [vmem:[%s306 + $0x9e0] sm:$0xff]
        %v700 = vld [vmem:[%s306 + $0x9e8] sm:$0xff]
        %v701 = vld [vmem:[%s306 + $0x9f0] sm:$0xff]
        %v702 = vld [vmem:[%s306 + $0x9f8] sm:$0xff]
        %v703 = vld [vmem:[%s306 + $0xa00] sm:$0xff]
        %v704 = vld [vmem:[%s306 + $0xa08] sm:$0xff]
        %v705 = vld [vmem:[%s306 + $0xa10] sm:$0xff]
        %v706 = vld [vmem:[%s306 + $0xa18] sm:$0xff]
        %v707 = vld [vmem:[%s306 + $0xa20] sm:$0xff]
        %v708 = vld [vmem:[%s306 + $0xa28] sm:$0xff]
        %v709 = vld [vmem:[%s306 + $0xa30] sm:$0xff]
        %v710 = vld [vmem:[%s306 + $0xa38] sm:$0xff]
        %v711 = vld [vmem:[%s306 + $0xa40] sm:$0xff]
        %v712 = vld [vmem:[%s306 + $0xa48] sm:$0xff]
        %v713 = vld [vmem:[%s306 + $0xa50] sm:$0xff]
        %v714 = vld [vmem:[%s306 + $0xa58] sm:$0xff]
        %v715 = vld [vmem:[%s306 + $0xa60] sm:$0xff]
        %v716 = vld [vmem:[%s306 + $0xa68] sm:$0xff]
        %v717 = vld [vmem:[%s306 + $0xa70] sm:$0xff]
        %v718 = vld [vmem:[%s306 + $0xa78] sm:$0xff]
        %v719 = vld [vmem:[%s306 + $0xa80] sm:$0xff]
        %v720 = vld [vmem:[%s306 + $0xa88] sm:$0xff]
        %v721 = vld [vmem:[%s306 + $0xa90] sm:$0xff]
        %v722 = vld [vmem:[%s306 + $0xa98] sm:$0xff]
        %v723 = vld [vmem:[%s306 + $0xaa0] sm:$0xff]
        %v724 = vld [vmem:[%s306 + $0xaa8] sm:$0xff]
        %v725 = vld [vmem:[%s306 + $0xab0] sm:$0xff]
        %v726 = vld [vmem:[%s306 + $0xab8] sm:$0xff]
        %v727 = vld [vmem:[%s306 + $0xac0] sm:$0xff]
        %v728 = vld [vmem:[%s306 + $0xac8] sm:$0xff]
        %v729 = vld [vmem:[%s306 + $0xad0] sm:$0xff]
        %v730 = vld [vmem:[%s306 + $0xad8] sm:$0xff]
        %v731 = vld [vmem:[%s306 + $0xae0] sm:$0xff]
        %v732 = vld [vmem:[%s306 + $0xae8] sm:$0xff]
        %v733 = vld [vmem:[%s306 + $0xaf0] sm:$0xff]
        %v734 = vld [vmem:[%s306 + $0xaf8] sm:$0xff]
        %v735 = vld [vmem:[%s306 + $0xb00] sm:$0xff]
        %v736 = vld [vmem:[%s306 + $0xb08] sm:$0xff]
        %v737 = vld [vmem:[%s306 + $0xb10] sm:$0xff]
        %v738 = vld [vmem:[%s306 + $0xb18] sm:$0xff]
        %v739 = vld [vmem:[%s306 + $0xb20] sm:$0xff]
        %v740 = vld [vmem:[%s306 + $0xb28] sm:$0xff]
        %v741 = vld [vmem:[%s306 + $0xb30] sm:$0xff]
        %v742 = vld [vmem:[%s306 + $0xb38] sm:$0xff]
        %v743 = vld [vmem:[%s306 + $0xb40] sm:$0xff]
        %v744 = vld [vmem:[%s306 + $0xb48] sm:$0xff]
        %v745 = vld [vmem:[%s306 + $0xb50] sm:$0xff]
        %v746 = vld [vmem:[%s306 + $0xb58] sm:$0xff]
        %v747 = vld [vmem:[%s306 + $0xb60] sm:$0xff]
        %v748 = vld [vmem:[%s306 + $0xb68] sm:$0xff]
        %v749 = vld [vmem:[%s306 + $0xb70] sm:$0xff]
        %v750 = vld [vmem:[%s306 + $0xb78] sm:$0xff]
        %v751 = vld [vmem:[%s306 + $0xb80] sm:$0xff]
        %v752 = vld [vmem:[%s306 + $0xb88] sm:$0xff]
        %v753 = vld [vmem:[%s306 + $0xb90] sm:$0xff]
        %v754 = vld [vmem:[%s306 + $0xb98] sm:$0xff]
        %v755 = vld [vmem:[%s306 + $0xba0] sm:$0xff]
        %v756 = vld [vmem:[%s306 + $0xba8] sm:$0xff]
        %v757 = vld [vmem:[%s306 + $0xbb0] sm:$0xff]
        %v758 = vld [vmem:[%s306 + $0xbb8] sm:$0xff]
        %v759 = vld [vmem:[%s306 + $0xbc0] sm:$0xff]
        %v760 = vld [vmem:[%s306 + $0xbc8] sm:$0xff]
        %v761 = vld [vmem:[%s306 + $0xbd0] sm:$0xff]
        %v762 = vld [vmem:[%s306 + $0xbd8] sm:$0xff]
        %v763 = vld [vmem:[%s306 + $0xbe0] sm:$0xff]
        %v764 = vld [vmem:[%s306 + $0xbe8] sm:$0xff]
        %v765 = vld [vmem:[%s306 + $0xbf0] sm:$0xff]
        %v766 = vld [vmem:[%s306 + $0xbf8] sm:$0xff]
        %v767 = vld [vmem:[%s315] sm:$0xff]
        %v769 = vlaneseq
        %v770 = vshrl.u32 %v769, 7
        %v771 = vsub.s32 0, %v770
        %v772 = vrot.slane %v767, %v771
        %v773 = vlaneseq
        %v774 = vshrl.u32 %v773, 7
        %v775 = vsub.s32 1, %v774
        %v776 = vrot.slane %v767, %v775
        %v777 = vlaneseq
        %v778 = vshrl.u32 %v777, 7
        %v779 = vsub.s32 2, %v778
        %v780 = vrot.slane %v767, %v779
        %v781 = vlaneseq
        %v782 = vshrl.u32 %v781, 7
        %v783 = vsub.s32 3, %v782
        %v784 = vrot.slane %v767, %v783
        %v785 = vlaneseq
        %v786 = vshrl.u32 %v785, 7
        %v787 = vsub.s32 4, %v786
        %v788 = vrot.slane %v767, %v787
        %v789 = vlaneseq
        %v790 = vshrl.u32 %v789, 7
        %v791 = vsub.s32 5, %v790
        %v792 = vrot.slane %v767, %v791
        %v793 = vlaneseq
        %v794 = vshrl.u32 %v793, 7
        %v795 = vsub.s32 6, %v794
        %v796 = vrot.slane %v767, %v795
        %v797 = vlaneseq
        %v798 = vshrl.u32 %v797, 7
        %v799 = vsub.s32 7, %v798
        %v800 = vrot.slane %v767, %v799
        %v815 = vunpack.c.l.b16 %v377
        %v816 = vunpack.c.h.b16 %v377
        %v817 = vunpack.c.l.b16 %v378
        %v818 = vunpack.c.h.b16 %v378
        %v819 = vunpack.c.l.b16 %v379
        %v820 = vunpack.c.h.b16 %v379
        %v821 = vunpack.c.l.b16 %v380
        %v822 = vunpack.c.h.b16 %v380
        %v823 = vunpack.c.l.b16 %v381
        %v824 = vunpack.c.h.b16 %v381
        %v825 = vunpack.c.l.b16 %v382
        %v826 = vunpack.c.h.b16 %v382
        %v827 = vpack.c.b16 %v821, %v815
        %v828 = vpack.c.b16 %v822, %v816
        %v829 = vpack.c.b16 %v823, %v817
        %v830 = vpack.c.b16 %v824, %v818
        %v831 = vpack.c.b16 %v825, %v819
        %v832 = vpack.c.b16 %v826, %v820
        %v1223 = vunpack.c.l.b16 %v383
        %v1224 = vunpack.c.h.b16 %v383
        %v1225 = vunpack.c.l.b16 %v384
        %v1226 = vunpack.c.h.b16 %v384
        %v1227 = vunpack.c.l.b16 %v385
        %v1228 = vunpack.c.h.b16 %v385
        %v1229 = vunpack.c.l.b16 %v386
        %v1230 = vunpack.c.h.b16 %v386
        %v1231 = vunpack.c.l.b16 %v387
        %v1232 = vunpack.c.h.b16 %v387
        %v1233 = vunpack.c.l.b16 %v388
        %v1234 = vunpack.c.h.b16 %v388
        %v1235 = vunpack.c.l.b16 %v389
        %v1236 = vunpack.c.h.b16 %v389
        %v1237 = vunpack.c.l.b16 %v390
        %v1238 = vunpack.c.h.b16 %v390
        %v1239 = vunpack.c.l.b16 %v391
        %v1240 = vunpack.c.h.b16 %v391
        %v1241 = vunpack.c.l.b16 %v392
        %v1242 = vunpack.c.h.b16 %v392
        %v1243 = vunpack.c.l.b16 %v393
        %v1244 = vunpack.c.h.b16 %v393
        %v1245 = vunpack.c.l.b16 %v394
        %v1246 = vunpack.c.h.b16 %v394
        %v1247 = vunpack.c.l.b16 %v395
        %v1248 = vunpack.c.h.b16 %v395
        %v1249 = vunpack.c.l.b16 %v396
        %v1250 = vunpack.c.h.b16 %v396
        %v1251 = vunpack.c.l.b16 %v397
        %v1252 = vunpack.c.h.b16 %v397
        %v1253 = vunpack.c.l.b16 %v398
        %v1254 = vunpack.c.h.b16 %v398
        %v1255 = vunpack.c.l.b16 %v399
        %v1256 = vunpack.c.h.b16 %v399
        %v1257 = vunpack.c.l.b16 %v400
        %v1258 = vunpack.c.h.b16 %v400
        %v1259 = vunpack.c.l.b16 %v401
        %v1260 = vunpack.c.h.b16 %v401
        %v1261 = vunpack.c.l.b16 %v402
        %v1262 = vunpack.c.h.b16 %v402
        %v1263 = vunpack.c.l.b16 %v403
        %v1264 = vunpack.c.h.b16 %v403
        %v1265 = vunpack.c.l.b16 %v404
        %v1266 = vunpack.c.h.b16 %v404
        %v1267 = vunpack.c.l.b16 %v405
        %v1268 = vunpack.c.h.b16 %v405
        %v1269 = vunpack.c.l.b16 %v406
        %v1270 = vunpack.c.h.b16 %v406
        %v1271 = vunpack.c.l.b16 %v407
        %v1272 = vunpack.c.h.b16 %v407
        %v1273 = vunpack.c.l.b16 %v408
        %v1274 = vunpack.c.h.b16 %v408
        %v1275 = vunpack.c.l.b16 %v409
        %v1276 = vunpack.c.h.b16 %v409
        %v1277 = vunpack.c.l.b16 %v410
        %v1278 = vunpack.c.h.b16 %v410
        %v1279 = vunpack.c.l.b16 %v411
        %v1280 = vunpack.c.h.b16 %v411
        %v1281 = vunpack.c.l.b16 %v412
        %v1282 = vunpack.c.h.b16 %v412
        %v1283 = vunpack.c.l.b16 %v413
        %v1284 = vunpack.c.h.b16 %v413
        %v1285 = vunpack.c.l.b16 %v414
        %v1286 = vunpack.c.h.b16 %v414
        %v1287 = vunpack.c.l.b16 %v415
        %v1288 = vunpack.c.h.b16 %v415
        %v1289 = vunpack.c.l.b16 %v416
        %v1290 = vunpack.c.h.b16 %v416
        %v1291 = vunpack.c.l.b16 %v417
        %v1292 = vunpack.c.h.b16 %v417
        %v1293 = vunpack.c.l.b16 %v418
        %v1294 = vunpack.c.h.b16 %v418
        %v1295 = vunpack.c.l.b16 %v419
        %v1296 = vunpack.c.h.b16 %v419
        %v1297 = vunpack.c.l.b16 %v420
        %v1298 = vunpack.c.h.b16 %v420
        %v1299 = vunpack.c.l.b16 %v421
        %v1300 = vunpack.c.h.b16 %v421
        %v1301 = vunpack.c.l.b16 %v422
        %v1302 = vunpack.c.h.b16 %v422
        %v1303 = vunpack.c.l.b16 %v423
        %v1304 = vunpack.c.h.b16 %v423
        %v1305 = vunpack.c.l.b16 %v424
        %v1306 = vunpack.c.h.b16 %v424
        %v1307 = vunpack.c.l.b16 %v425
        %v1308 = vunpack.c.h.b16 %v425
        %v1309 = vunpack.c.l.b16 %v426
        %v1310 = vunpack.c.h.b16 %v426
        %v1311 = vunpack.c.l.b16 %v427
        %v1312 = vunpack.c.h.b16 %v427
        %v1313 = vunpack.c.l.b16 %v428
        %v1314 = vunpack.c.h.b16 %v428
        %v1315 = vunpack.c.l.b16 %v429
        %v1316 = vunpack.c.h.b16 %v429
        %v1317 = vunpack.c.l.b16 %v430
        %v1318 = vunpack.c.h.b16 %v430
        %v1319 = vunpack.c.l.b16 %v431
        %v1320 = vunpack.c.h.b16 %v431
        %v1321 = vunpack.c.l.b16 %v432
        %v1322 = vunpack.c.h.b16 %v432
        %v1323 = vunpack.c.l.b16 %v433
        %v1324 = vunpack.c.h.b16 %v433
        %v1325 = vunpack.c.l.b16 %v434
        %v1326 = vunpack.c.h.b16 %v434
        %v1327 = vunpack.c.l.b16 %v435
        %v1328 = vunpack.c.h.b16 %v435
        %v1329 = vunpack.c.l.b16 %v436
        %v1330 = vunpack.c.h.b16 %v436
        %v1331 = vunpack.c.l.b16 %v437
        %v1332 = vunpack.c.h.b16 %v437
        %v1333 = vunpack.c.l.b16 %v438
        %v1334 = vunpack.c.h.b16 %v438
        %v1335 = vunpack.c.l.b16 %v439
        %v1336 = vunpack.c.h.b16 %v439
        %v1337 = vunpack.c.l.b16 %v440
        %v1338 = vunpack.c.h.b16 %v440
        %v1339 = vunpack.c.l.b16 %v441
        %v1340 = vunpack.c.h.b16 %v441
        %v1341 = vunpack.c.l.b16 %v442
        %v1342 = vunpack.c.h.b16 %v442
        %v1343 = vunpack.c.l.b16 %v443
        %v1344 = vunpack.c.h.b16 %v443
        %v1345 = vunpack.c.l.b16 %v444
        %v1346 = vunpack.c.h.b16 %v444
        %v1347 = vunpack.c.l.b16 %v445
        %v1348 = vunpack.c.h.b16 %v445
        %v1349 = vunpack.c.l.b16 %v446
        %v1350 = vunpack.c.h.b16 %v446
        %v1351 = vunpack.c.l.b16 %v447
        %v1352 = vunpack.c.h.b16 %v447
        %v1353 = vunpack.c.l.b16 %v448
        %v1354 = vunpack.c.h.b16 %v448
        %v1355 = vunpack.c.l.b16 %v449
        %v1356 = vunpack.c.h.b16 %v449
        %v1357 = vunpack.c.l.b16 %v450
        %v1358 = vunpack.c.h.b16 %v450
        %v1359 = vunpack.c.l.b16 %v451
        %v1360 = vunpack.c.h.b16 %v451
        %v1361 = vunpack.c.l.b16 %v452
        %v1362 = vunpack.c.h.b16 %v452
        %v1363 = vunpack.c.l.b16 %v453
        %v1364 = vunpack.c.h.b16 %v453
        %v1365 = vunpack.c.l.b16 %v454
        %v1366 = vunpack.c.h.b16 %v454
        %v1367 = vunpack.c.l.b16 %v455
        %v1368 = vunpack.c.h.b16 %v455
        %v1369 = vunpack.c.l.b16 %v456
        %v1370 = vunpack.c.h.b16 %v456
        %v1371 = vunpack.c.l.b16 %v457
        %v1372 = vunpack.c.h.b16 %v457
        %v1373 = vunpack.c.l.b16 %v458
        %v1374 = vunpack.c.h.b16 %v458
        %v1375 = vunpack.c.l.b16 %v459
        %v1376 = vunpack.c.h.b16 %v459
        %v1377 = vunpack.c.l.b16 %v460
        %v1378 = vunpack.c.h.b16 %v460
        %v1379 = vunpack.c.l.b16 %v461
        %v1380 = vunpack.c.h.b16 %v461
        %v1381 = vunpack.c.l.b16 %v462
        %v1382 = vunpack.c.h.b16 %v462
        %v1383 = vunpack.c.l.b16 %v463
        %v1384 = vunpack.c.h.b16 %v463
        %v1385 = vunpack.c.l.b16 %v464
        %v1386 = vunpack.c.h.b16 %v464
        %v1387 = vunpack.c.l.b16 %v465
        %v1388 = vunpack.c.h.b16 %v465
        %v1389 = vunpack.c.l.b16 %v466
        %v1390 = vunpack.c.h.b16 %v466
        %v1391 = vunpack.c.l.b16 %v467
        %v1392 = vunpack.c.h.b16 %v467
        %v1393 = vunpack.c.l.b16 %v468
        %v1394 = vunpack.c.h.b16 %v468
        %v1395 = vunpack.c.l.b16 %v469
        %v1396 = vunpack.c.h.b16 %v469
        %v1397 = vunpack.c.l.b16 %v470
        %v1398 = vunpack.c.h.b16 %v470
        %v1399 = vunpack.c.l.b16 %v471
        %v1400 = vunpack.c.h.b16 %v471
        %v1401 = vunpack.c.l.b16 %v472
        %v1402 = vunpack.c.h.b16 %v472
        %v1403 = vunpack.c.l.b16 %v473
        %v1404 = vunpack.c.h.b16 %v473
        %v1405 = vunpack.c.l.b16 %v474
        %v1406 = vunpack.c.h.b16 %v474
        %v1407 = vunpack.c.l.b16 %v475
        %v1408 = vunpack.c.h.b16 %v475
        %v1409 = vunpack.c.l.b16 %v476
        %v1410 = vunpack.c.h.b16 %v476
        %v1411 = vunpack.c.l.b16 %v477
        %v1412 = vunpack.c.h.b16 %v477
        %v1413 = vunpack.c.l.b16 %v478
        %v1414 = vunpack.c.h.b16 %v478
        %v1415 = vunpack.c.l.b16 %v479
        %v1416 = vunpack.c.h.b16 %v479
        %v1417 = vunpack.c.l.b16 %v480
        %v1418 = vunpack.c.h.b16 %v480
        %v1419 = vunpack.c.l.b16 %v481
        %v1420 = vunpack.c.h.b16 %v481
        %v1421 = vunpack.c.l.b16 %v482
        %v1422 = vunpack.c.h.b16 %v482
        %v1423 = vunpack.c.l.b16 %v483
        %v1424 = vunpack.c.h.b16 %v483
        %v1425 = vunpack.c.l.b16 %v484
        %v1426 = vunpack.c.h.b16 %v484
        %v1427 = vunpack.c.l.b16 %v485
        %v1428 = vunpack.c.h.b16 %v485
        %v1429 = vunpack.c.l.b16 %v486
        %v1430 = vunpack.c.h.b16 %v486
        %v1431 = vunpack.c.l.b16 %v487
        %v1432 = vunpack.c.h.b16 %v487
        %v1433 = vunpack.c.l.b16 %v488
        %v1434 = vunpack.c.h.b16 %v488
        %v1435 = vunpack.c.l.b16 %v489
        %v1436 = vunpack.c.h.b16 %v489
        %v1437 = vunpack.c.l.b16 %v490
        %v1438 = vunpack.c.h.b16 %v490
        %v1439 = vunpack.c.l.b16 %v491
        %v1440 = vunpack.c.h.b16 %v491
        %v1441 = vunpack.c.l.b16 %v492
        %v1442 = vunpack.c.h.b16 %v492
        %v1443 = vunpack.c.l.b16 %v493
        %v1444 = vunpack.c.h.b16 %v493
        %v1445 = vunpack.c.l.b16 %v494
        %v1446 = vunpack.c.h.b16 %v494
        %v1447 = vunpack.c.l.b16 %v495
        %v1448 = vunpack.c.h.b16 %v495
        %v1449 = vunpack.c.l.b16 %v496
        %v1450 = vunpack.c.h.b16 %v496
        %v1451 = vunpack.c.l.b16 %v497
        %v1452 = vunpack.c.h.b16 %v497
        %v1453 = vunpack.c.l.b16 %v498
        %v1454 = vunpack.c.h.b16 %v498
        %v1455 = vunpack.c.l.b16 %v499
        %v1456 = vunpack.c.h.b16 %v499
        %v1457 = vunpack.c.l.b16 %v500
        %v1458 = vunpack.c.h.b16 %v500
        %v1459 = vunpack.c.l.b16 %v501
        %v1460 = vunpack.c.h.b16 %v501
        %v1461 = vunpack.c.l.b16 %v502
        %v1462 = vunpack.c.h.b16 %v502
        %v1463 = vunpack.c.l.b16 %v503
        %v1464 = vunpack.c.h.b16 %v503
        %v1465 = vunpack.c.l.b16 %v504
        %v1466 = vunpack.c.h.b16 %v504
        %v1467 = vunpack.c.l.b16 %v505
        %v1468 = vunpack.c.h.b16 %v505
        %v1469 = vunpack.c.l.b16 %v506
        %v1470 = vunpack.c.h.b16 %v506
        %v1471 = vunpack.c.l.b16 %v507
        %v1472 = vunpack.c.h.b16 %v507
        %v1473 = vunpack.c.l.b16 %v508
        %v1474 = vunpack.c.h.b16 %v508
        %v1475 = vunpack.c.l.b16 %v509
        %v1476 = vunpack.c.h.b16 %v509
        %v1477 = vunpack.c.l.b16 %v510
        %v1478 = vunpack.c.h.b16 %v510
        %v1479 = vunpack.c.l.b16 %v511
        %v1480 = vunpack.c.h.b16 %v511
        %v1481 = vunpack.c.l.b16 %v512
        %v1482 = vunpack.c.h.b16 %v512
        %v1483 = vunpack.c.l.b16 %v513
        %v1484 = vunpack.c.h.b16 %v513
        %v1485 = vunpack.c.l.b16 %v514
        %v1486 = vunpack.c.h.b16 %v514
        %v1487 = vunpack.c.l.b16 %v515
        %v1488 = vunpack.c.h.b16 %v515
        %v1489 = vunpack.c.l.b16 %v516
        %v1490 = vunpack.c.h.b16 %v516
        %v1491 = vunpack.c.l.b16 %v517
        %v1492 = vunpack.c.h.b16 %v517
        %v1493 = vunpack.c.l.b16 %v518
        %v1494 = vunpack.c.h.b16 %v518
        %v1495 = vunpack.c.l.b16 %v519
        %v1496 = vunpack.c.h.b16 %v519
        %v1497 = vunpack.c.l.b16 %v520
        %v1498 = vunpack.c.h.b16 %v520
        %v1499 = vunpack.c.l.b16 %v521
        %v1500 = vunpack.c.h.b16 %v521
        %v1501 = vunpack.c.l.b16 %v522
        %v1502 = vunpack.c.h.b16 %v522
        %v1503 = vunpack.c.l.b16 %v523
        %v1504 = vunpack.c.h.b16 %v523
        %v1505 = vunpack.c.l.b16 %v524
        %v1506 = vunpack.c.h.b16 %v524
        %v1507 = vunpack.c.l.b16 %v525
        %v1508 = vunpack.c.h.b16 %v525
        %v1509 = vunpack.c.l.b16 %v526
        %v1510 = vunpack.c.h.b16 %v526
        %v1511 = vunpack.c.l.b16 %v527
        %v1512 = vunpack.c.h.b16 %v527
        %v1513 = vunpack.c.l.b16 %v528
        %v1514 = vunpack.c.h.b16 %v528
        %v1515 = vunpack.c.l.b16 %v529
        %v1516 = vunpack.c.h.b16 %v529
        %v1517 = vunpack.c.l.b16 %v530
        %v1518 = vunpack.c.h.b16 %v530
        %v1519 = vunpack.c.l.b16 %v531
        %v1520 = vunpack.c.h.b16 %v531
        %v1521 = vunpack.c.l.b16 %v532
        %v1522 = vunpack.c.h.b16 %v532
        %v1523 = vunpack.c.l.b16 %v533
        %v1524 = vunpack.c.h.b16 %v533
        %v1525 = vunpack.c.l.b16 %v534
        %v1526 = vunpack.c.h.b16 %v534
        %v1527 = vunpack.c.l.b16 %v535
        %v1528 = vunpack.c.h.b16 %v535
        %v1529 = vunpack.c.l.b16 %v536
        %v1530 = vunpack.c.h.b16 %v536
        %v1531 = vunpack.c.l.b16 %v537
        %v1532 = vunpack.c.h.b16 %v537
        %v1533 = vunpack.c.l.b16 %v538
        %v1534 = vunpack.c.h.b16 %v538
        %v1535 = vunpack.c.l.b16 %v539
        %v1536 = vunpack.c.h.b16 %v539
        %v1537 = vunpack.c.l.b16 %v540
        %v1538 = vunpack.c.h.b16 %v540
        %v1539 = vunpack.c.l.b16 %v541
        %v1540 = vunpack.c.h.b16 %v541
        %v1541 = vunpack.c.l.b16 %v542
        %v1542 = vunpack.c.h.b16 %v542
        %v1543 = vunpack.c.l.b16 %v543
        %v1544 = vunpack.c.h.b16 %v543
        %v1545 = vunpack.c.l.b16 %v544
        %v1546 = vunpack.c.h.b16 %v544
        %v1547 = vunpack.c.l.b16 %v545
        %v1548 = vunpack.c.h.b16 %v545
        %v1549 = vunpack.c.l.b16 %v546
        %v1550 = vunpack.c.h.b16 %v546
        %v1551 = vunpack.c.l.b16 %v547
        %v1552 = vunpack.c.h.b16 %v547
        %v1553 = vunpack.c.l.b16 %v548
        %v1554 = vunpack.c.h.b16 %v548
        %v1555 = vunpack.c.l.b16 %v549
        %v1556 = vunpack.c.h.b16 %v549
        %v1557 = vunpack.c.l.b16 %v550
        %v1558 = vunpack.c.h.b16 %v550
        %v1559 = vunpack.c.l.b16 %v551
        %v1560 = vunpack.c.h.b16 %v551
        %v1561 = vunpack.c.l.b16 %v552
        %v1562 = vunpack.c.h.b16 %v552
        %v1563 = vunpack.c.l.b16 %v553
        %v1564 = vunpack.c.h.b16 %v553
        %v1565 = vunpack.c.l.b16 %v554
        %v1566 = vunpack.c.h.b16 %v554
        %v1567 = vunpack.c.l.b16 %v555
        %v1568 = vunpack.c.h.b16 %v555
        %v1569 = vunpack.c.l.b16 %v556
        %v1570 = vunpack.c.h.b16 %v556
        %v1571 = vunpack.c.l.b16 %v557
        %v1572 = vunpack.c.h.b16 %v557
        %v1573 = vunpack.c.l.b16 %v558
        %v1574 = vunpack.c.h.b16 %v558
        %v1575 = vunpack.c.l.b16 %v559
        %v1576 = vunpack.c.h.b16 %v559
        %v1577 = vunpack.c.l.b16 %v560
        %v1578 = vunpack.c.h.b16 %v560
        %v1579 = vunpack.c.l.b16 %v561
        %v1580 = vunpack.c.h.b16 %v561
        %v1581 = vunpack.c.l.b16 %v562
        %v1582 = vunpack.c.h.b16 %v562
        %v1583 = vunpack.c.l.b16 %v563
        %v1584 = vunpack.c.h.b16 %v563
        %v1585 = vunpack.c.l.b16 %v564
        %v1586 = vunpack.c.h.b16 %v564
        %v1587 = vunpack.c.l.b16 %v565
        %v1588 = vunpack.c.h.b16 %v565
        %v1589 = vunpack.c.l.b16 %v566
        %v1590 = vunpack.c.h.b16 %v566
        %v1591 = vunpack.c.l.b16 %v567
        %v1592 = vunpack.c.h.b16 %v567
        %v1593 = vunpack.c.l.b16 %v568
        %v1594 = vunpack.c.h.b16 %v568
        %v1595 = vunpack.c.l.b16 %v569
        %v1596 = vunpack.c.h.b16 %v569
        %v1597 = vunpack.c.l.b16 %v570
        %v1598 = vunpack.c.h.b16 %v570
        %v1599 = vunpack.c.l.b16 %v571
        %v1600 = vunpack.c.h.b16 %v571
        %v1601 = vunpack.c.l.b16 %v572
        %v1602 = vunpack.c.h.b16 %v572
        %v1603 = vunpack.c.l.b16 %v573
        %v1604 = vunpack.c.h.b16 %v573
        %v1605 = vunpack.c.l.b16 %v574
        %v1606 = vunpack.c.h.b16 %v574
        %v1607 = vunpack.c.l.b16 %v575
        %v1608 = vunpack.c.h.b16 %v575
        %v1609 = vunpack.c.l.b16 %v576
        %v1610 = vunpack.c.h.b16 %v576
        %v1611 = vunpack.c.l.b16 %v577
        %v1612 = vunpack.c.h.b16 %v577
        %v1613 = vunpack.c.l.b16 %v578
        %v1614 = vunpack.c.h.b16 %v578
        %v1615 = vunpack.c.l.b16 %v579
        %v1616 = vunpack.c.h.b16 %v579
        %v1617 = vunpack.c.l.b16 %v580
        %v1618 = vunpack.c.h.b16 %v580
        %v1619 = vunpack.c.l.b16 %v581
        %v1620 = vunpack.c.h.b16 %v581
        %v1621 = vunpack.c.l.b16 %v582
        %v1622 = vunpack.c.h.b16 %v582
        %v1623 = vunpack.c.l.b16 %v583
        %v1624 = vunpack.c.h.b16 %v583
        %v1625 = vunpack.c.l.b16 %v584
        %v1626 = vunpack.c.h.b16 %v584
        %v1627 = vunpack.c.l.b16 %v585
        %v1628 = vunpack.c.h.b16 %v585
        %v1629 = vunpack.c.l.b16 %v586
        %v1630 = vunpack.c.h.b16 %v586
        %v1631 = vunpack.c.l.b16 %v587
        %v1632 = vunpack.c.h.b16 %v587
        %v1633 = vunpack.c.l.b16 %v588
        %v1634 = vunpack.c.h.b16 %v588
        %v1635 = vunpack.c.l.b16 %v589
        %v1636 = vunpack.c.h.b16 %v589
        %v1637 = vunpack.c.l.b16 %v590
        %v1638 = vunpack.c.h.b16 %v590
        %v1639 = vunpack.c.l.b16 %v591
        %v1640 = vunpack.c.h.b16 %v591
        %v1641 = vunpack.c.l.b16 %v592
        %v1642 = vunpack.c.h.b16 %v592
        %v1643 = vunpack.c.l.b16 %v593
        %v1644 = vunpack.c.h.b16 %v593
        %v1645 = vunpack.c.l.b16 %v594
        %v1646 = vunpack.c.h.b16 %v594
        %v1647 = vunpack.c.l.b16 %v595
        %v1648 = vunpack.c.h.b16 %v595
        %v1649 = vunpack.c.l.b16 %v596
        %v1650 = vunpack.c.h.b16 %v596
        %v1651 = vunpack.c.l.b16 %v597
        %v1652 = vunpack.c.h.b16 %v597
        %v1653 = vunpack.c.l.b16 %v598
        %v1654 = vunpack.c.h.b16 %v598
        %v1655 = vunpack.c.l.b16 %v599
        %v1656 = vunpack.c.h.b16 %v599
        %v1657 = vunpack.c.l.b16 %v600
        %v1658 = vunpack.c.h.b16 %v600
        %v1659 = vunpack.c.l.b16 %v601
        %v1660 = vunpack.c.h.b16 %v601
        %v1661 = vunpack.c.l.b16 %v602
        %v1662 = vunpack.c.h.b16 %v602
        %v1663 = vunpack.c.l.b16 %v603
        %v1664 = vunpack.c.h.b16 %v603
        %v1665 = vunpack.c.l.b16 %v604
        %v1666 = vunpack.c.h.b16 %v604
        %v1667 = vunpack.c.l.b16 %v605
        %v1668 = vunpack.c.h.b16 %v605
        %v1669 = vunpack.c.l.b16 %v606
        %v1670 = vunpack.c.h.b16 %v606
        %v1671 = vunpack.c.l.b16 %v607
        %v1672 = vunpack.c.h.b16 %v607
        %v1673 = vunpack.c.l.b16 %v608
        %v1674 = vunpack.c.h.b16 %v608
        %v1675 = vunpack.c.l.b16 %v609
        %v1676 = vunpack.c.h.b16 %v609
        %v1677 = vunpack.c.l.b16 %v610
        %v1678 = vunpack.c.h.b16 %v610
        %v1679 = vunpack.c.l.b16 %v611
        %v1680 = vunpack.c.h.b16 %v611
        %v1681 = vunpack.c.l.b16 %v612
        %v1682 = vunpack.c.h.b16 %v612
        %v1683 = vunpack.c.l.b16 %v613
        %v1684 = vunpack.c.h.b16 %v613
        %v1685 = vunpack.c.l.b16 %v614
        %v1686 = vunpack.c.h.b16 %v614
        %v1687 = vunpack.c.l.b16 %v615
        %v1688 = vunpack.c.h.b16 %v615
        %v1689 = vunpack.c.l.b16 %v616
        %v1690 = vunpack.c.h.b16 %v616
        %v1691 = vunpack.c.l.b16 %v617
        %v1692 = vunpack.c.h.b16 %v617
        %v1693 = vunpack.c.l.b16 %v618
        %v1694 = vunpack.c.h.b16 %v618
        %v1695 = vunpack.c.l.b16 %v619
        %v1696 = vunpack.c.h.b16 %v619
        %v1697 = vunpack.c.l.b16 %v620
        %v1698 = vunpack.c.h.b16 %v620
        %v1699 = vunpack.c.l.b16 %v621
        %v1700 = vunpack.c.h.b16 %v621
        %v1701 = vunpack.c.l.b16 %v622
        %v1702 = vunpack.c.h.b16 %v622
        %v1703 = vunpack.c.l.b16 %v623
        %v1704 = vunpack.c.h.b16 %v623
        %v1705 = vunpack.c.l.b16 %v624
        %v1706 = vunpack.c.h.b16 %v624
        %v1707 = vunpack.c.l.b16 %v625
        %v1708 = vunpack.c.h.b16 %v625
        %v1709 = vunpack.c.l.b16 %v626
        %v1710 = vunpack.c.h.b16 %v626
        %v1711 = vunpack.c.l.b16 %v627
        %v1712 = vunpack.c.h.b16 %v627
        %v1713 = vunpack.c.l.b16 %v628
        %v1714 = vunpack.c.h.b16 %v628
        %v1715 = vunpack.c.l.b16 %v629
        %v1716 = vunpack.c.h.b16 %v629
        %v1717 = vunpack.c.l.b16 %v630
        %v1718 = vunpack.c.h.b16 %v630
        %v1719 = vunpack.c.l.b16 %v631
        %v1720 = vunpack.c.h.b16 %v631
        %v1721 = vunpack.c.l.b16 %v632
        %v1722 = vunpack.c.h.b16 %v632
        %v1723 = vunpack.c.l.b16 %v633
        %v1724 = vunpack.c.h.b16 %v633
        %v1725 = vunpack.c.l.b16 %v634
        %v1726 = vunpack.c.h.b16 %v634
        %v1727 = vunpack.c.l.b16 %v635
        %v1728 = vunpack.c.h.b16 %v635
        %v1729 = vunpack.c.l.b16 %v636
        %v1730 = vunpack.c.h.b16 %v636
        %v1731 = vunpack.c.l.b16 %v637
        %v1732 = vunpack.c.h.b16 %v637
        %v1733 = vunpack.c.l.b16 %v638
        %v1734 = vunpack.c.h.b16 %v638
        %v1735 = vunpack.c.l.b16 %v639
        %v1736 = vunpack.c.h.b16 %v639
        %v1737 = vunpack.c.l.b16 %v640
        %v1738 = vunpack.c.h.b16 %v640
        %v1739 = vunpack.c.l.b16 %v641
        %v1740 = vunpack.c.h.b16 %v641
        %v1741 = vunpack.c.l.b16 %v642
        %v1742 = vunpack.c.h.b16 %v642
        %v1743 = vunpack.c.l.b16 %v643
        %v1744 = vunpack.c.h.b16 %v643
        %v1745 = vunpack.c.l.b16 %v644
        %v1746 = vunpack.c.h.b16 %v644
        %v1747 = vunpack.c.l.b16 %v645
        %v1748 = vunpack.c.h.b16 %v645
        %v1749 = vunpack.c.l.b16 %v646
        %v1750 = vunpack.c.h.b16 %v646
        %v1751 = vunpack.c.l.b16 %v647
        %v1752 = vunpack.c.h.b16 %v647
        %v1753 = vunpack.c.l.b16 %v648
        %v1754 = vunpack.c.h.b16 %v648
        %v1755 = vunpack.c.l.b16 %v649
        %v1756 = vunpack.c.h.b16 %v649
        %v1757 = vunpack.c.l.b16 %v650
        %v1758 = vunpack.c.h.b16 %v650
        %v1759 = vunpack.c.l.b16 %v651
        %v1760 = vunpack.c.h.b16 %v651
        %v1761 = vunpack.c.l.b16 %v652
        %v1762 = vunpack.c.h.b16 %v652
        %v1763 = vunpack.c.l.b16 %v653
        %v1764 = vunpack.c.h.b16 %v653
        %v1765 = vunpack.c.l.b16 %v654
        %v1766 = vunpack.c.h.b16 %v654
        %v1767 = vunpack.c.l.b16 %v655
        %v1768 = vunpack.c.h.b16 %v655
        %v1769 = vunpack.c.l.b16 %v656
        %v1770 = vunpack.c.h.b16 %v656
        %v1771 = vunpack.c.l.b16 %v657
        %v1772 = vunpack.c.h.b16 %v657
        %v1773 = vunpack.c.l.b16 %v658
        %v1774 = vunpack.c.h.b16 %v658
        %v1775 = vunpack.c.l.b16 %v659
        %v1776 = vunpack.c.h.b16 %v659
        %v1777 = vunpack.c.l.b16 %v660
        %v1778 = vunpack.c.h.b16 %v660
        %v1779 = vunpack.c.l.b16 %v661
        %v1780 = vunpack.c.h.b16 %v661
        %v1781 = vunpack.c.l.b16 %v662
        %v1782 = vunpack.c.h.b16 %v662
        %v1783 = vunpack.c.l.b16 %v663
        %v1784 = vunpack.c.h.b16 %v663
        %v1785 = vunpack.c.l.b16 %v664
        %v1786 = vunpack.c.h.b16 %v664
        %v1787 = vunpack.c.l.b16 %v665
        %v1788 = vunpack.c.h.b16 %v665
        %v1789 = vunpack.c.l.b16 %v666
        %v1790 = vunpack.c.h.b16 %v666
        %v1791 = vunpack.c.l.b16 %v667
        %v1792 = vunpack.c.h.b16 %v667
        %v1793 = vunpack.c.l.b16 %v668
        %v1794 = vunpack.c.h.b16 %v668
        %v1795 = vunpack.c.l.b16 %v669
        %v1796 = vunpack.c.h.b16 %v669
        %v1797 = vunpack.c.l.b16 %v670
        %v1798 = vunpack.c.h.b16 %v670
        %v1799 = vunpack.c.l.b16 %v671
        %v1800 = vunpack.c.h.b16 %v671
        %v1801 = vunpack.c.l.b16 %v672
        %v1802 = vunpack.c.h.b16 %v672
        %v1803 = vunpack.c.l.b16 %v673
        %v1804 = vunpack.c.h.b16 %v673
        %v1805 = vunpack.c.l.b16 %v674
        %v1806 = vunpack.c.h.b16 %v674
        %v1807 = vunpack.c.l.b16 %v675
        %v1808 = vunpack.c.h.b16 %v675
        %v1809 = vunpack.c.l.b16 %v676
        %v1810 = vunpack.c.h.b16 %v676
        %v1811 = vunpack.c.l.b16 %v677
        %v1812 = vunpack.c.h.b16 %v677
        %v1813 = vunpack.c.l.b16 %v678
        %v1814 = vunpack.c.h.b16 %v678
        %v1815 = vunpack.c.l.b16 %v679
        %v1816 = vunpack.c.h.b16 %v679
        %v1817 = vunpack.c.l.b16 %v680
        %v1818 = vunpack.c.h.b16 %v680
        %v1819 = vunpack.c.l.b16 %v681
        %v1820 = vunpack.c.h.b16 %v681
        %v1821 = vunpack.c.l.b16 %v682
        %v1822 = vunpack.c.h.b16 %v682
        %v1823 = vunpack.c.l.b16 %v683
        %v1824 = vunpack.c.h.b16 %v683
        %v1825 = vunpack.c.l.b16 %v684
        %v1826 = vunpack.c.h.b16 %v684
        %v1827 = vunpack.c.l.b16 %v685
        %v1828 = vunpack.c.h.b16 %v685
        %v1829 = vunpack.c.l.b16 %v686
        %v1830 = vunpack.c.h.b16 %v686
        %v1831 = vunpack.c.l.b16 %v687
        %v1832 = vunpack.c.h.b16 %v687
        %v1833 = vunpack.c.l.b16 %v688
        %v1834 = vunpack.c.h.b16 %v688
        %v1835 = vunpack.c.l.b16 %v689
        %v1836 = vunpack.c.h.b16 %v689
        %v1837 = vunpack.c.l.b16 %v690
        %v1838 = vunpack.c.h.b16 %v690
        %v1839 = vunpack.c.l.b16 %v691
        %v1840 = vunpack.c.h.b16 %v691
        %v1841 = vunpack.c.l.b16 %v692
        %v1842 = vunpack.c.h.b16 %v692
        %v1843 = vunpack.c.l.b16 %v693
        %v1844 = vunpack.c.h.b16 %v693
        %v1845 = vunpack.c.l.b16 %v694
        %v1846 = vunpack.c.h.b16 %v694
        %v1847 = vunpack.c.l.b16 %v695
        %v1848 = vunpack.c.h.b16 %v695
        %v1849 = vunpack.c.l.b16 %v696
        %v1850 = vunpack.c.h.b16 %v696
        %v1851 = vunpack.c.l.b16 %v697
        %v1852 = vunpack.c.h.b16 %v697
        %v1853 = vunpack.c.l.b16 %v698
        %v1854 = vunpack.c.h.b16 %v698
        %v1855 = vunpack.c.l.b16 %v699
        %v1856 = vunpack.c.h.b16 %v699
        %v1857 = vunpack.c.l.b16 %v700
        %v1858 = vunpack.c.h.b16 %v700
        %v1859 = vunpack.c.l.b16 %v701
        %v1860 = vunpack.c.h.b16 %v701
        %v1861 = vunpack.c.l.b16 %v702
        %v1862 = vunpack.c.h.b16 %v702
        %v1863 = vunpack.c.l.b16 %v703
        %v1864 = vunpack.c.h.b16 %v703
        %v1865 = vunpack.c.l.b16 %v704
        %v1866 = vunpack.c.h.b16 %v704
        %v1867 = vunpack.c.l.b16 %v705
        %v1868 = vunpack.c.h.b16 %v705
        %v1869 = vunpack.c.l.b16 %v706
        %v1870 = vunpack.c.h.b16 %v706
        %v1871 = vunpack.c.l.b16 %v707
        %v1872 = vunpack.c.h.b16 %v707
        %v1873 = vunpack.c.l.b16 %v708
        %v1874 = vunpack.c.h.b16 %v708
        %v1875 = vunpack.c.l.b16 %v709
        %v1876 = vunpack.c.h.b16 %v709
        %v1877 = vunpack.c.l.b16 %v710
        %v1878 = vunpack.c.h.b16 %v710
        %v1879 = vunpack.c.l.b16 %v711
        %v1880 = vunpack.c.h.b16 %v711
        %v1881 = vunpack.c.l.b16 %v712
        %v1882 = vunpack.c.h.b16 %v712
        %v1883 = vunpack.c.l.b16 %v713
        %v1884 = vunpack.c.h.b16 %v713
        %v1885 = vunpack.c.l.b16 %v714
        %v1886 = vunpack.c.h.b16 %v714
        %v1887 = vunpack.c.l.b16 %v715
        %v1888 = vunpack.c.h.b16 %v715
        %v1889 = vunpack.c.l.b16 %v716
        %v1890 = vunpack.c.h.b16 %v716
        %v1891 = vunpack.c.l.b16 %v717
        %v1892 = vunpack.c.h.b16 %v717
        %v1893 = vunpack.c.l.b16 %v718
        %v1894 = vunpack.c.h.b16 %v718
        %v1895 = vunpack.c.l.b16 %v719
        %v1896 = vunpack.c.h.b16 %v719
        %v1897 = vunpack.c.l.b16 %v720
        %v1898 = vunpack.c.h.b16 %v720
        %v1899 = vunpack.c.l.b16 %v721
        %v1900 = vunpack.c.h.b16 %v721
        %v1901 = vunpack.c.l.b16 %v722
        %v1902 = vunpack.c.h.b16 %v722
        %v1903 = vunpack.c.l.b16 %v723
        %v1904 = vunpack.c.h.b16 %v723
        %v1905 = vunpack.c.l.b16 %v724
        %v1906 = vunpack.c.h.b16 %v724
        %v1907 = vunpack.c.l.b16 %v725
        %v1908 = vunpack.c.h.b16 %v725
        %v1909 = vunpack.c.l.b16 %v726
        %v1910 = vunpack.c.h.b16 %v726
        %v1911 = vunpack.c.l.b16 %v727
        %v1912 = vunpack.c.h.b16 %v727
        %v1913 = vunpack.c.l.b16 %v728
        %v1914 = vunpack.c.h.b16 %v728
        %v1915 = vunpack.c.l.b16 %v729
        %v1916 = vunpack.c.h.b16 %v729
        %v1917 = vunpack.c.l.b16 %v730
        %v1918 = vunpack.c.h.b16 %v730
        %v1919 = vunpack.c.l.b16 %v731
        %v1920 = vunpack.c.h.b16 %v731
        %v1921 = vunpack.c.l.b16 %v732
        %v1922 = vunpack.c.h.b16 %v732
        %v1923 = vunpack.c.l.b16 %v733
        %v1924 = vunpack.c.h.b16 %v733
        %v1925 = vunpack.c.l.b16 %v734
        %v1926 = vunpack.c.h.b16 %v734
        %v1927 = vunpack.c.l.b16 %v735
        %v1928 = vunpack.c.h.b16 %v735
        %v1929 = vunpack.c.l.b16 %v736
        %v1930 = vunpack.c.h.b16 %v736
        %v1931 = vunpack.c.l.b16 %v737
        %v1932 = vunpack.c.h.b16 %v737
        %v1933 = vunpack.c.l.b16 %v738
        %v1934 = vunpack.c.h.b16 %v738
        %v1935 = vunpack.c.l.b16 %v739
        %v1936 = vunpack.c.h.b16 %v739
        %v1937 = vunpack.c.l.b16 %v740
        %v1938 = vunpack.c.h.b16 %v740
        %v1939 = vunpack.c.l.b16 %v741
        %v1940 = vunpack.c.h.b16 %v741
        %v1941 = vunpack.c.l.b16 %v742
        %v1942 = vunpack.c.h.b16 %v742
        %v1943 = vunpack.c.l.b16 %v743
        %v1944 = vunpack.c.h.b16 %v743
        %v1945 = vunpack.c.l.b16 %v744
        %v1946 = vunpack.c.h.b16 %v744
        %v1947 = vunpack.c.l.b16 %v745
        %v1948 = vunpack.c.h.b16 %v745
        %v1949 = vunpack.c.l.b16 %v746
        %v1950 = vunpack.c.h.b16 %v746
        %v1951 = vunpack.c.l.b16 %v747
        %v1952 = vunpack.c.h.b16 %v747
        %v1953 = vunpack.c.l.b16 %v748
        %v1954 = vunpack.c.h.b16 %v748
        %v1955 = vunpack.c.l.b16 %v749
        %v1956 = vunpack.c.h.b16 %v749
        %v1957 = vunpack.c.l.b16 %v750
        %v1958 = vunpack.c.h.b16 %v750
        %v1959 = vunpack.c.l.b16 %v751
        %v1960 = vunpack.c.h.b16 %v751
        %v1961 = vunpack.c.l.b16 %v752
        %v1962 = vunpack.c.h.b16 %v752
        %v1963 = vunpack.c.l.b16 %v753
        %v1964 = vunpack.c.h.b16 %v753
        %v1965 = vunpack.c.l.b16 %v754
        %v1966 = vunpack.c.h.b16 %v754
        %v1967 = vunpack.c.l.b16 %v755
        %v1968 = vunpack.c.h.b16 %v755
        %v1969 = vunpack.c.l.b16 %v756
        %v1970 = vunpack.c.h.b16 %v756
        %v1971 = vunpack.c.l.b16 %v757
        %v1972 = vunpack.c.h.b16 %v757
        %v1973 = vunpack.c.l.b16 %v758
        %v1974 = vunpack.c.h.b16 %v758
        %v1975 = vunpack.c.l.b16 %v759
        %v1976 = vunpack.c.h.b16 %v759
        %v1977 = vunpack.c.l.b16 %v760
        %v1978 = vunpack.c.h.b16 %v760
        %v1979 = vunpack.c.l.b16 %v761
        %v1980 = vunpack.c.h.b16 %v761
        %v1981 = vunpack.c.l.b16 %v762
        %v1982 = vunpack.c.h.b16 %v762
        %v1983 = vunpack.c.l.b16 %v763
        %v1984 = vunpack.c.h.b16 %v763
        %v1985 = vunpack.c.l.b16 %v764
        %v1986 = vunpack.c.h.b16 %v764
        %v1987 = vunpack.c.l.b16 %v765
        %v1988 = vunpack.c.h.b16 %v765
        %v1989 = vunpack.c.l.b16 %v766
        %v1990 = vunpack.c.h.b16 %v766
        %v1991 = vpack.c.b16 %v1231, %v1223
        %v1992 = vpack.c.b16 %v1232, %v1224
        %v1993 = vpack.c.b16 %v1233, %v1225
        %v1994 = vpack.c.b16 %v1234, %v1226
        %v1995 = vpack.c.b16 %v1235, %v1227
        %v1996 = vpack.c.b16 %v1236, %v1228
        %v1997 = vpack.c.b16 %v1237, %v1229
        %v1998 = vpack.c.b16 %v1238, %v1230
        %v1999 = vpack.c.b16 %v1247, %v1239
        %v2000 = vpack.c.b16 %v1248, %v1240
        %v2001 = vpack.c.b16 %v1249, %v1241
        %v2002 = vpack.c.b16 %v1250, %v1242
        %v2003 = vpack.c.b16 %v1251, %v1243
        %v2004 = vpack.c.b16 %v1252, %v1244
        %v2005 = vpack.c.b16 %v1253, %v1245
        %v2006 = vpack.c.b16 %v1254, %v1246
        %v2007 = vpack.c.b16 %v1263, %v1255
        %v2008 = vpack.c.b16 %v1264, %v1256
        %v2009 = vpack.c.b16 %v1265, %v1257
        %v2010 = vpack.c.b16 %v1266, %v1258
        %v2011 = vpack.c.b16 %v1267, %v1259
        %v2012 = vpack.c.b16 %v1268, %v1260
        %v2013 = vpack.c.b16 %v1269, %v1261
        %v2014 = vpack.c.b16 %v1270, %v1262
        %v2015 = vpack.c.b16 %v1279, %v1271
        %v2016 = vpack.c.b16 %v1280, %v1272
        %v2017 = vpack.c.b16 %v1281, %v1273
        %v2018 = vpack.c.b16 %v1282, %v1274
        %v2019 = vpack.c.b16 %v1283, %v1275
        %v2020 = vpack.c.b16 %v1284, %v1276
        %v2021 = vpack.c.b16 %v1285, %v1277
        %v2022 = vpack.c.b16 %v1286, %v1278
        %v2023 = vpack.c.b16 %v1295, %v1287
        %v2024 = vpack.c.b16 %v1296, %v1288
        %v2025 = vpack.c.b16 %v1297, %v1289
        %v2026 = vpack.c.b16 %v1298, %v1290
        %v2027 = vpack.c.b16 %v1299, %v1291
        %v2028 = vpack.c.b16 %v1300, %v1292
        %v2029 = vpack.c.b16 %v1301, %v1293
        %v2030 = vpack.c.b16 %v1302, %v1294
        %v2031 = vpack.c.b16 %v1311, %v1303
        %v2032 = vpack.c.b16 %v1312, %v1304
        %v2033 = vpack.c.b16 %v1313, %v1305
        %v2034 = vpack.c.b16 %v1314, %v1306
        %v2035 = vpack.c.b16 %v1315, %v1307
        %v2036 = vpack.c.b16 %v1316, %v1308
        %v2037 = vpack.c.b16 %v1317, %v1309
        %v2038 = vpack.c.b16 %v1318, %v1310
        %v2039 = vpack.c.b16 %v1327, %v1319
        %v2040 = vpack.c.b16 %v1328, %v1320
        %v2041 = vpack.c.b16 %v1329, %v1321
        %v2042 = vpack.c.b16 %v1330, %v1322
        %v2043 = vpack.c.b16 %v1331, %v1323
        %v2044 = vpack.c.b16 %v1332, %v1324
        %v2045 = vpack.c.b16 %v1333, %v1325
        %v2046 = vpack.c.b16 %v1334, %v1326
        %v2047 = vpack.c.b16 %v1343, %v1335
        %v2048 = vpack.c.b16 %v1344, %v1336
        %v2049 = vpack.c.b16 %v1345, %v1337
        %v2050 = vpack.c.b16 %v1346, %v1338
        %v2051 = vpack.c.b16 %v1347, %v1339
        %v2052 = vpack.c.b16 %v1348, %v1340
        %v2053 = vpack.c.b16 %v1349, %v1341
        %v2054 = vpack.c.b16 %v1350, %v1342
        %v2055 = vpack.c.b16 %v1359, %v1351
        %v2056 = vpack.c.b16 %v1360, %v1352
        %v2057 = vpack.c.b16 %v1361, %v1353
        %v2058 = vpack.c.b16 %v1362, %v1354
        %v2059 = vpack.c.b16 %v1363, %v1355
        %v2060 = vpack.c.b16 %v1364, %v1356
        %v2061 = vpack.c.b16 %v1365, %v1357
        %v2062 = vpack.c.b16 %v1366, %v1358
        %v2063 = vpack.c.b16 %v1375, %v1367
        %v2064 = vpack.c.b16 %v1376, %v1368
        %v2065 = vpack.c.b16 %v1377, %v1369
        %v2066 = vpack.c.b16 %v1378, %v1370
        %v2067 = vpack.c.b16 %v1379, %v1371
        %v2068 = vpack.c.b16 %v1380, %v1372
        %v2069 = vpack.c.b16 %v1381, %v1373
        %v2070 = vpack.c.b16 %v1382, %v1374
        %v2071 = vpack.c.b16 %v1391, %v1383
        %v2072 = vpack.c.b16 %v1392, %v1384
        %v2073 = vpack.c.b16 %v1393, %v1385
        %v2074 = vpack.c.b16 %v1394, %v1386
        %v2075 = vpack.c.b16 %v1395, %v1387
        %v2076 = vpack.c.b16 %v1396, %v1388
        %v2077 = vpack.c.b16 %v1397, %v1389
        %v2078 = vpack.c.b16 %v1398, %v1390
        %v2079 = vpack.c.b16 %v1407, %v1399
        %v2080 = vpack.c.b16 %v1408, %v1400
        %v2081 = vpack.c.b16 %v1409, %v1401
        %v2082 = vpack.c.b16 %v1410, %v1402
        %v2083 = vpack.c.b16 %v1411, %v1403
        %v2084 = vpack.c.b16 %v1412, %v1404
        %v2085 = vpack.c.b16 %v1413, %v1405
        %v2086 = vpack.c.b16 %v1414, %v1406
        %v2087 = vpack.c.b16 %v1423, %v1415
        %v2088 = vpack.c.b16 %v1424, %v1416
        %v2089 = vpack.c.b16 %v1425, %v1417
        %v2090 = vpack.c.b16 %v1426, %v1418
        %v2091 = vpack.c.b16 %v1427, %v1419
        %v2092 = vpack.c.b16 %v1428, %v1420
        %v2093 = vpack.c.b16 %v1429, %v1421
        %v2094 = vpack.c.b16 %v1430, %v1422
        %v2095 = vpack.c.b16 %v1439, %v1431
        %v2096 = vpack.c.b16 %v1440, %v1432
        %v2097 = vpack.c.b16 %v1441, %v1433
        %v2098 = vpack.c.b16 %v1442, %v1434
        %v2099 = vpack.c.b16 %v1443, %v1435
        %v2100 = vpack.c.b16 %v1444, %v1436
        %v2101 = vpack.c.b16 %v1445, %v1437
        %v2102 = vpack.c.b16 %v1446, %v1438
        %v2103 = vpack.c.b16 %v1455, %v1447
        %v2104 = vpack.c.b16 %v1456, %v1448
        %v2105 = vpack.c.b16 %v1457, %v1449
        %v2106 = vpack.c.b16 %v1458, %v1450
        %v2107 = vpack.c.b16 %v1459, %v1451
        %v2108 = vpack.c.b16 %v1460, %v1452
        %v2109 = vpack.c.b16 %v1461, %v1453
        %v2110 = vpack.c.b16 %v1462, %v1454
        %v2111 = vpack.c.b16 %v1471, %v1463
        %v2112 = vpack.c.b16 %v1472, %v1464
        %v2113 = vpack.c.b16 %v1473, %v1465
        %v2114 = vpack.c.b16 %v1474, %v1466
        %v2115 = vpack.c.b16 %v1475, %v1467
        %v2116 = vpack.c.b16 %v1476, %v1468
        %v2117 = vpack.c.b16 %v1477, %v1469
        %v2118 = vpack.c.b16 %v1478, %v1470
        %v2119 = vpack.c.b16 %v1487, %v1479
        %v2120 = vpack.c.b16 %v1488, %v1480
        %v2121 = vpack.c.b16 %v1489, %v1481
        %v2122 = vpack.c.b16 %v1490, %v1482
        %v2123 = vpack.c.b16 %v1491, %v1483
        %v2124 = vpack.c.b16 %v1492, %v1484
        %v2125 = vpack.c.b16 %v1493, %v1485
        %v2126 = vpack.c.b16 %v1494, %v1486
        %v2127 = vpack.c.b16 %v1503, %v1495
        %v2128 = vpack.c.b16 %v1504, %v1496
        %v2129 = vpack.c.b16 %v1505, %v1497
        %v2130 = vpack.c.b16 %v1506, %v1498
        %v2131 = vpack.c.b16 %v1507, %v1499
        %v2132 = vpack.c.b16 %v1508, %v1500
        %v2133 = vpack.c.b16 %v1509, %v1501
        %v2134 = vpack.c.b16 %v1510, %v1502
        %v2135 = vpack.c.b16 %v1519, %v1511
        %v2136 = vpack.c.b16 %v1520, %v1512
        %v2137 = vpack.c.b16 %v1521, %v1513
        %v2138 = vpack.c.b16 %v1522, %v1514
        %v2139 = vpack.c.b16 %v1523, %v1515
        %v2140 = vpack.c.b16 %v1524, %v1516
        %v2141 = vpack.c.b16 %v1525, %v1517
        %v2142 = vpack.c.b16 %v1526, %v1518
        %v2143 = vpack.c.b16 %v1535, %v1527
        %v2144 = vpack.c.b16 %v1536, %v1528
        %v2145 = vpack.c.b16 %v1537, %v1529
        %v2146 = vpack.c.b16 %v1538, %v1530
        %v2147 = vpack.c.b16 %v1539, %v1531
        %v2148 = vpack.c.b16 %v1540, %v1532
        %v2149 = vpack.c.b16 %v1541, %v1533
        %v2150 = vpack.c.b16 %v1542, %v1534
        %v2151 = vpack.c.b16 %v1551, %v1543
        %v2152 = vpack.c.b16 %v1552, %v1544
        %v2153 = vpack.c.b16 %v1553, %v1545
        %v2154 = vpack.c.b16 %v1554, %v1546
        %v2155 = vpack.c.b16 %v1555, %v1547
        %v2156 = vpack.c.b16 %v1556, %v1548
        %v2157 = vpack.c.b16 %v1557, %v1549
        %v2158 = vpack.c.b16 %v1558, %v1550
        %v2159 = vpack.c.b16 %v1567, %v1559
        %v2160 = vpack.c.b16 %v1568, %v1560
        %v2161 = vpack.c.b16 %v1569, %v1561
        %v2162 = vpack.c.b16 %v1570, %v1562
        %v2163 = vpack.c.b16 %v1571, %v1563
        %v2164 = vpack.c.b16 %v1572, %v1564
        %v2165 = vpack.c.b16 %v1573, %v1565
        %v2166 = vpack.c.b16 %v1574, %v1566
        %v2167 = vpack.c.b16 %v1583, %v1575
        %v2168 = vpack.c.b16 %v1584, %v1576
        %v2169 = vpack.c.b16 %v1585, %v1577
        %v2170 = vpack.c.b16 %v1586, %v1578
        %v2171 = vpack.c.b16 %v1587, %v1579
        %v2172 = vpack.c.b16 %v1588, %v1580
        %v2173 = vpack.c.b16 %v1589, %v1581
        %v2174 = vpack.c.b16 %v1590, %v1582
        %v2175 = vpack.c.b16 %v1599, %v1591
        %v2176 = vpack.c.b16 %v1600, %v1592
        %v2177 = vpack.c.b16 %v1601, %v1593
        %v2178 = vpack.c.b16 %v1602, %v1594
        %v2179 = vpack.c.b16 %v1603, %v1595
        %v2180 = vpack.c.b16 %v1604, %v1596
        %v2181 = vpack.c.b16 %v1605, %v1597
        %v2182 = vpack.c.b16 %v1606, %v1598
        %v2183 = vpack.c.b16 %v1615, %v1607
        %v2184 = vpack.c.b16 %v1616, %v1608
        %v2185 = vpack.c.b16 %v1617, %v1609
        %v2186 = vpack.c.b16 %v1618, %v1610
        %v2187 = vpack.c.b16 %v1619, %v1611
        %v2188 = vpack.c.b16 %v1620, %v1612
        %v2189 = vpack.c.b16 %v1621, %v1613
        %v2190 = vpack.c.b16 %v1622, %v1614
        %v2191 = vpack.c.b16 %v1631, %v1623
        %v2192 = vpack.c.b16 %v1632, %v1624
        %v2193 = vpack.c.b16 %v1633, %v1625
        %v2194 = vpack.c.b16 %v1634, %v1626
        %v2195 = vpack.c.b16 %v1635, %v1627
        %v2196 = vpack.c.b16 %v1636, %v1628
        %v2197 = vpack.c.b16 %v1637, %v1629
        %v2198 = vpack.c.b16 %v1638, %v1630
        %v2199 = vpack.c.b16 %v1647, %v1639
        %v2200 = vpack.c.b16 %v1648, %v1640
        %v2201 = vpack.c.b16 %v1649, %v1641
        %v2202 = vpack.c.b16 %v1650, %v1642
        %v2203 = vpack.c.b16 %v1651, %v1643
        %v2204 = vpack.c.b16 %v1652, %v1644
        %v2205 = vpack.c.b16 %v1653, %v1645
        %v2206 = vpack.c.b16 %v1654, %v1646
        %v2207 = vpack.c.b16 %v1663, %v1655
        %v2208 = vpack.c.b16 %v1664, %v1656
        %v2209 = vpack.c.b16 %v1665, %v1657
        %v2210 = vpack.c.b16 %v1666, %v1658
        %v2211 = vpack.c.b16 %v1667, %v1659
        %v2212 = vpack.c.b16 %v1668, %v1660
        %v2213 = vpack.c.b16 %v1669, %v1661
        %v2214 = vpack.c.b16 %v1670, %v1662
        %v2215 = vpack.c.b16 %v1679, %v1671
        %v2216 = vpack.c.b16 %v1680, %v1672
        %v2217 = vpack.c.b16 %v1681, %v1673
        %v2218 = vpack.c.b16 %v1682, %v1674
        %v2219 = vpack.c.b16 %v1683, %v1675
        %v2220 = vpack.c.b16 %v1684, %v1676
        %v2221 = vpack.c.b16 %v1685, %v1677
        %v2222 = vpack.c.b16 %v1686, %v1678
        %v2223 = vpack.c.b16 %v1695, %v1687
        %v2224 = vpack.c.b16 %v1696, %v1688
        %v2225 = vpack.c.b16 %v1697, %v1689
        %v2226 = vpack.c.b16 %v1698, %v1690
        %v2227 = vpack.c.b16 %v1699, %v1691
        %v2228 = vpack.c.b16 %v1700, %v1692
        %v2229 = vpack.c.b16 %v1701, %v1693
        %v2230 = vpack.c.b16 %v1702, %v1694
        %v2231 = vpack.c.b16 %v1711, %v1703
        %v2232 = vpack.c.b16 %v1712, %v1704
        %v2233 = vpack.c.b16 %v1713, %v1705
        %v2234 = vpack.c.b16 %v1714, %v1706
        %v2235 = vpack.c.b16 %v1715, %v1707
        %v2236 = vpack.c.b16 %v1716, %v1708
        %v2237 = vpack.c.b16 %v1717, %v1709
        %v2238 = vpack.c.b16 %v1718, %v1710
        %v2239 = vpack.c.b16 %v1727, %v1719
        %v2240 = vpack.c.b16 %v1728, %v1720
        %v2241 = vpack.c.b16 %v1729, %v1721
        %v2242 = vpack.c.b16 %v1730, %v1722
        %v2243 = vpack.c.b16 %v1731, %v1723
        %v2244 = vpack.c.b16 %v1732, %v1724
        %v2245 = vpack.c.b16 %v1733, %v1725
        %v2246 = vpack.c.b16 %v1734, %v1726
        %v2247 = vpack.c.b16 %v1743, %v1735
        %v2248 = vpack.c.b16 %v1744, %v1736
        %v2249 = vpack.c.b16 %v1745, %v1737
        %v2250 = vpack.c.b16 %v1746, %v1738
        %v2251 = vpack.c.b16 %v1747, %v1739
        %v2252 = vpack.c.b16 %v1748, %v1740
        %v2253 = vpack.c.b16 %v1749, %v1741
        %v2254 = vpack.c.b16 %v1750, %v1742
        %v2255 = vpack.c.b16 %v1759, %v1751
        %v2256 = vpack.c.b16 %v1760, %v1752
        %v2257 = vpack.c.b16 %v1761, %v1753
        %v2258 = vpack.c.b16 %v1762, %v1754
        %v2259 = vpack.c.b16 %v1763, %v1755
        %v2260 = vpack.c.b16 %v1764, %v1756
        %v2261 = vpack.c.b16 %v1765, %v1757
        %v2262 = vpack.c.b16 %v1766, %v1758
        %v2263 = vpack.c.b16 %v1775, %v1767
        %v2264 = vpack.c.b16 %v1776, %v1768
        %v2265 = vpack.c.b16 %v1777, %v1769
        %v2266 = vpack.c.b16 %v1778, %v1770
        %v2267 = vpack.c.b16 %v1779, %v1771
        %v2268 = vpack.c.b16 %v1780, %v1772
        %v2269 = vpack.c.b16 %v1781, %v1773
        %v2270 = vpack.c.b16 %v1782, %v1774
        %v2271 = vpack.c.b16 %v1791, %v1783
        %v2272 = vpack.c.b16 %v1792, %v1784
        %v2273 = vpack.c.b16 %v1793, %v1785
        %v2274 = vpack.c.b16 %v1794, %v1786
        %v2275 = vpack.c.b16 %v1795, %v1787
        %v2276 = vpack.c.b16 %v1796, %v1788
        %v2277 = vpack.c.b16 %v1797, %v1789
        %v2278 = vpack.c.b16 %v1798, %v1790
        %v2279 = vpack.c.b16 %v1807, %v1799
        %v2280 = vpack.c.b16 %v1808, %v1800
        %v2281 = vpack.c.b16 %v1809, %v1801
        %v2282 = vpack.c.b16 %v1810, %v1802
        %v2283 = vpack.c.b16 %v1811, %v1803
        %v2284 = vpack.c.b16 %v1812, %v1804
        %v2285 = vpack.c.b16 %v1813, %v1805
        %v2286 = vpack.c.b16 %v1814, %v1806
        %v2287 = vpack.c.b16 %v1823, %v1815
        %v2288 = vpack.c.b16 %v1824, %v1816
        %v2289 = vpack.c.b16 %v1825, %v1817
        %v2290 = vpack.c.b16 %v1826, %v1818
        %v2291 = vpack.c.b16 %v1827, %v1819
        %v2292 = vpack.c.b16 %v1828, %v1820
        %v2293 = vpack.c.b16 %v1829, %v1821
        %v2294 = vpack.c.b16 %v1830, %v1822
        %v2295 = vpack.c.b16 %v1839, %v1831
        %v2296 = vpack.c.b16 %v1840, %v1832
        %v2297 = vpack.c.b16 %v1841, %v1833
        %v2298 = vpack.c.b16 %v1842, %v1834
        %v2299 = vpack.c.b16 %v1843, %v1835
        %v2300 = vpack.c.b16 %v1844, %v1836
        %v2301 = vpack.c.b16 %v1845, %v1837
        %v2302 = vpack.c.b16 %v1846, %v1838
        %v2303 = vpack.c.b16 %v1855, %v1847
        %v2304 = vpack.c.b16 %v1856, %v1848
        %v2305 = vpack.c.b16 %v1857, %v1849
        %v2306 = vpack.c.b16 %v1858, %v1850
        %v2307 = vpack.c.b16 %v1859, %v1851
        %v2308 = vpack.c.b16 %v1860, %v1852
        %v2309 = vpack.c.b16 %v1861, %v1853
        %v2310 = vpack.c.b16 %v1862, %v1854
        %v2311 = vpack.c.b16 %v1871, %v1863
        %v2312 = vpack.c.b16 %v1872, %v1864
        %v2313 = vpack.c.b16 %v1873, %v1865
        %v2314 = vpack.c.b16 %v1874, %v1866
        %v2315 = vpack.c.b16 %v1875, %v1867
        %v2316 = vpack.c.b16 %v1876, %v1868
        %v2317 = vpack.c.b16 %v1877, %v1869
        %v2318 = vpack.c.b16 %v1878, %v1870
        %v2319 = vpack.c.b16 %v1887, %v1879
        %v2320 = vpack.c.b16 %v1888, %v1880
        %v2321 = vpack.c.b16 %v1889, %v1881
        %v2322 = vpack.c.b16 %v1890, %v1882
        %v2323 = vpack.c.b16 %v1891, %v1883
        %v2324 = vpack.c.b16 %v1892, %v1884
        %v2325 = vpack.c.b16 %v1893, %v1885
        %v2326 = vpack.c.b16 %v1894, %v1886
        %v2327 = vpack.c.b16 %v1903, %v1895
        %v2328 = vpack.c.b16 %v1904, %v1896
        %v2329 = vpack.c.b16 %v1905, %v1897
        %v2330 = vpack.c.b16 %v1906, %v1898
        %v2331 = vpack.c.b16 %v1907, %v1899
        %v2332 = vpack.c.b16 %v1908, %v1900
        %v2333 = vpack.c.b16 %v1909, %v1901
        %v2334 = vpack.c.b16 %v1910, %v1902
        %v2335 = vpack.c.b16 %v1919, %v1911
        %v2336 = vpack.c.b16 %v1920, %v1912
        %v2337 = vpack.c.b16 %v1921, %v1913
        %v2338 = vpack.c.b16 %v1922, %v1914
        %v2339 = vpack.c.b16 %v1923, %v1915
        %v2340 = vpack.c.b16 %v1924, %v1916
        %v2341 = vpack.c.b16 %v1925, %v1917
        %v2342 = vpack.c.b16 %v1926, %v1918
        %v2343 = vpack.c.b16 %v1935, %v1927
        %v2344 = vpack.c.b16 %v1936, %v1928
        %v2345 = vpack.c.b16 %v1937, %v1929
        %v2346 = vpack.c.b16 %v1938, %v1930
        %v2347 = vpack.c.b16 %v1939, %v1931
        %v2348 = vpack.c.b16 %v1940, %v1932
        %v2349 = vpack.c.b16 %v1941, %v1933
        %v2350 = vpack.c.b16 %v1942, %v1934
        %v2351 = vpack.c.b16 %v1951, %v1943
        %v2352 = vpack.c.b16 %v1952, %v1944
        %v2353 = vpack.c.b16 %v1953, %v1945
        %v2354 = vpack.c.b16 %v1954, %v1946
        %v2355 = vpack.c.b16 %v1955, %v1947
        %v2356 = vpack.c.b16 %v1956, %v1948
        %v2357 = vpack.c.b16 %v1957, %v1949
        %v2358 = vpack.c.b16 %v1958, %v1950
        %v2359 = vpack.c.b16 %v1967, %v1959
        %v2360 = vpack.c.b16 %v1968, %v1960
        %v2361 = vpack.c.b16 %v1969, %v1961
        %v2362 = vpack.c.b16 %v1970, %v1962
        %v2363 = vpack.c.b16 %v1971, %v1963
        %v2364 = vpack.c.b16 %v1972, %v1964
        %v2365 = vpack.c.b16 %v1973, %v1965
        %v2366 = vpack.c.b16 %v1974, %v1966
        %v2367 = vpack.c.b16 %v1983, %v1975
        %v2368 = vpack.c.b16 %v1984, %v1976
        %v2369 = vpack.c.b16 %v1985, %v1977
        %v2370 = vpack.c.b16 %v1986, %v1978
        %v2371 = vpack.c.b16 %v1987, %v1979
        %v2372 = vpack.c.b16 %v1988, %v1980
        %v2373 = vpack.c.b16 %v1989, %v1981
        %v2374 = vpack.c.b16 %v1990, %v1982
        %2759 = vmatprep.subr.bf16.mxu0 %v1992
        %2760 = vmatpush1.bf16.msra.mxu0 %v1991
        %2761 = vmatprep.subr.bf16.mxu0 %v2000
        %2762 = vmatpush1.bf16.msra.mxu0 %v1999
        %2763 = vmatprep.subr.bf16.mxu0 %v2008
        %2764 = vmatpush1.bf16.msra.mxu0 %v2007
        %2765 = vmatprep.subr.bf16.mxu0 %v2016
        %2766 = vmatpush1.bf16.msra.mxu0 %v2015
        %2767 = vmatprep.subr.bf16.mxu0 %v2024
        %2768 = vmatpush1.bf16.msra.mxu0 %v2023
        %2769 = vmatprep.subr.bf16.mxu0 %v2032
        %2770 = vmatpush1.bf16.msra.mxu0 %v2031
        %2771 = vmatprep.subr.bf16.mxu0 %v2040
        %2772 = vmatpush1.bf16.msra.mxu0 %v2039
        %2773 = vmatprep.subr.bf16.mxu0 %v2048
        %2774 = vmatpush1.bf16.msra.mxu0 %v2047
        %2775 = vmatprep.subr.bf16.mxu0 %v2056
        %2776 = vmatpush1.bf16.msra.mxu0 %v2055
        %2777 = vmatprep.subr.bf16.mxu0 %v2064
        %2778 = vmatpush1.bf16.msra.mxu0 %v2063
        %2779 = vmatprep.subr.bf16.mxu0 %v2072
        %2780 = vmatpush1.bf16.msra.mxu0 %v2071
        %2781 = vmatprep.subr.bf16.mxu0 %v2080
        %2782 = vmatpush1.bf16.msra.mxu0 %v2079
        %2783 = vmatprep.subr.bf16.mxu0 %v2088
        %2784 = vmatpush1.bf16.msra.mxu0 %v2087
        %2785 = vmatprep.subr.bf16.mxu0 %v2096
        %2786 = vmatpush1.bf16.msra.mxu0 %v2095
        %2787 = vmatprep.subr.bf16.mxu0 %v2104
        %2788 = vmatpush1.bf16.msra.mxu0 %v2103
        %2789 = vmatprep.subr.bf16.mxu0 %v2112
        %2790 = vmatpush1.bf16.msra.mxu0 %v2111
        %2791 = vmatprep.mubr.bf16.mxu0 %v828
        %2792 = vmatmul.mubr.bf16.gmra.mrb[0].mxu0 %v827
        %v2793 = vpop.f32.mrb[0].mxu0
        %v2794 = vadd.f32 %v772, %v2793
        %v2795 = vpop.f32.mrb[0].mxu0
        %v2796 = vadd.f32 %v776, %v2795
        %v2797 = vpop.f32.mrb[0].mxu0
        %v2798 = vadd.f32 %v772, %v2797
        %v2799 = vpop.f32.mrb[0].mxu0
        %v2800 = vadd.f32 %v776, %v2799
        %2801 = vdwg.mxu0
        %2802 = vmatprep.subr.bf16.mxu0 %v2120
        %2803 = vmatpush1.bf16.msra.mxu0 %v2119
        %2804 = vmatprep.subr.bf16.mxu0 %v2128
        %2805 = vmatpush1.bf16.msra.mxu0 %v2127
        %2806 = vmatprep.subr.bf16.mxu0 %v2136
        %2807 = vmatpush1.bf16.msra.mxu0 %v2135
        %2808 = vmatprep.subr.bf16.mxu0 %v2144
        %2809 = vmatpush1.bf16.msra.mxu0 %v2143
        %2810 = vmatprep.subr.bf16.mxu0 %v2152
        %2811 = vmatpush1.bf16.msra.mxu0 %v2151
        %2812 = vmatprep.subr.bf16.mxu0 %v2160
        %2813 = vmatpush1.bf16.msra.mxu0 %v2159
        %2814 = vmatprep.subr.bf16.mxu0 %v2168
        %2815 = vmatpush1.bf16.msra.mxu0 %v2167
        %2816 = vmatprep.subr.bf16.mxu0 %v2176
        %2817 = vmatpush1.bf16.msra.mxu0 %v2175
        %2818 = vmatprep.subr.bf16.mxu0 %v2184
        %2819 = vmatpush1.bf16.msra.mxu0 %v2183
        %2820 = vmatprep.subr.bf16.mxu0 %v2192
        %2821 = vmatpush1.bf16.msra.mxu0 %v2191
        %2822 = vmatprep.subr.bf16.mxu0 %v2200
        %2823 = vmatpush1.bf16.msra.mxu0 %v2199
        %2824 = vmatprep.subr.bf16.mxu0 %v2208
        %2825 = vmatpush1.bf16.msra.mxu0 %v2207
        %2826 = vmatprep.subr.bf16.mxu0 %v2216
        %2827 = vmatpush1.bf16.msra.mxu0 %v2215
        %2828 = vmatprep.subr.bf16.mxu0 %v2224
        %2829 = vmatpush1.bf16.msra.mxu0 %v2223
        %2830 = vmatprep.subr.bf16.mxu0 %v2232
        %2831 = vmatpush1.bf16.msra.mxu0 %v2231
        %2832 = vmatprep.subr.bf16.mxu0 %v2240
        %2833 = vmatpush1.bf16.msra.mxu0 %v2239
        %2834 = vmatprep.mubr.bf16.mxu0 %v830
        %2835 = vmatmul.mubr.bf16.gmra.mrb[0].mxu0 %v829
        %v2836 = vpop.f32.mrb[0].mxu0
        %v2837 = vadd.f32 %v2794, %v2836
        %v2838 = vpop.f32.mrb[0].mxu0
        %v2839 = vadd.f32 %v2796, %v2838
        %v2840 = vpop.f32.mrb[0].mxu0
        %v2841 = vadd.f32 %v2798, %v2840
        %v2842 = vpop.f32.mrb[0].mxu0
        %v2843 = vadd.f32 %v2800, %v2842
        %2844 = vdwg.mxu0
        %2845 = vmatprep.subr.bf16.mxu0 %v2248
        %2846 = vmatpush1.bf16.msra.mxu0 %v2247
        %2847 = vmatprep.subr.bf16.mxu0 %v2256
        %2848 = vmatpush1.bf16.msra.mxu0 %v2255
        %2849 = vmatprep.subr.bf16.mxu0 %v2264
        %2850 = vmatpush1.bf16.msra.mxu0 %v2263
        %2851 = vmatprep.subr.bf16.mxu0 %v2272
        %2852 = vmatpush1.bf16.msra.mxu0 %v2271
        %2853 = vmatprep.subr.bf16.mxu0 %v2280
        %2854 = vmatpush1.bf16.msra.mxu0 %v2279
        %2855 = vmatprep.subr.bf16.mxu0 %v2288
        %2856 = vmatpush1.bf16.msra.mxu0 %v2287
        %2857 = vmatprep.subr.bf16.mxu0 %v2296
        %2858 = vmatpush1.bf16.msra.mxu0 %v2295
        %2859 = vmatprep.subr.bf16.mxu0 %v2304
        %2860 = vmatpush1.bf16.msra.mxu0 %v2303
        %2861 = vmatprep.subr.bf16.mxu0 %v2312
        %2862 = vmatpush1.bf16.msra.mxu0 %v2311
        %2863 = vmatprep.subr.bf16.mxu0 %v2320
        %2864 = vmatpush1.bf16.msra.mxu0 %v2319
        %2865 = vmatprep.subr.bf16.mxu0 %v2328
        %2866 = vmatpush1.bf16.msra.mxu0 %v2327
        %2867 = vmatprep.subr.bf16.mxu0 %v2336
        %2868 = vmatpush1.bf16.msra.mxu0 %v2335
        %2869 = vmatprep.subr.bf16.mxu0 %v2344
        %2870 = vmatpush1.bf16.msra.mxu0 %v2343
        %2871 = vmatprep.subr.bf16.mxu0 %v2352
        %2872 = vmatpush1.bf16.msra.mxu0 %v2351
        %2873 = vmatprep.subr.bf16.mxu0 %v2360
        %2874 = vmatpush1.bf16.msra.mxu0 %v2359
        %2875 = vmatprep.subr.bf16.mxu0 %v2368
        %2876 = vmatpush1.bf16.msra.mxu0 %v2367
        %2877 = vmatprep.mubr.bf16.mxu0 %v832
        %2878 = vmatmul.mubr.bf16.gmra.mrb[0].mxu0 %v831
        %v2879 = vpop.f32.mrb[0].mxu0
        %v2880 = vadd.f32 %v2837, %v2879
        %v2881 = vpop.f32.mrb[0].mxu0
        %v2882 = vadd.f32 %v2839, %v2881
        %v2883 = vpop.f32.mrb[0].mxu0
        %v2884 = vadd.f32 %v2841, %v2883
        %v2885 = vpop.f32.mrb[0].mxu0
        %v2886 = vadd.f32 %v2843, %v2885
        %2887 = vdwg.mxu0
        %2888 = vmatprep.subr.bf16.mxu0 %v1994
        %2889 = vmatpush1.bf16.msra.mxu0 %v1993
        %2890 = vmatprep.subr.bf16.mxu0 %v2002
        %2891 = vmatpush1.bf16.msra.mxu0 %v2001
        %2892 = vmatprep.subr.bf16.mxu0 %v2010
        %2893 = vmatpush1.bf16.msra.mxu0 %v2009
        %2894 = vmatprep.subr.bf16.mxu0 %v2018
        %2895 = vmatpush1.bf16.msra.mxu0 %v2017
        %2896 = vmatprep.subr.bf16.mxu0 %v2026
        %2897 = vmatpush1.bf16.msra.mxu0 %v2025
        %2898 = vmatprep.subr.bf16.mxu0 %v2034
        %2899 = vmatpush1.bf16.msra.mxu0 %v2033
        %2900 = vmatprep.subr.bf16.mxu0 %v2042
        %2901 = vmatpush1.bf16.msra.mxu0 %v2041
        %2902 = vmatprep.subr.bf16.mxu0 %v2050
        %2903 = vmatpush1.bf16.msra.mxu0 %v2049
        %2904 = vmatprep.subr.bf16.mxu0 %v2058
        %2905 = vmatpush1.bf16.msra.mxu0 %v2057
        %2906 = vmatprep.subr.bf16.mxu0 %v2066
        %2907 = vmatpush1.bf16.msra.mxu0 %v2065
        %2908 = vmatprep.subr.bf16.mxu0 %v2074
        %2909 = vmatpush1.bf16.msra.mxu0 %v2073
        %2910 = vmatprep.subr.bf16.mxu0 %v2082
        %2911 = vmatpush1.bf16.msra.mxu0 %v2081
        %2912 = vmatprep.subr.bf16.mxu0 %v2090
        %2913 = vmatpush1.bf16.msra.mxu0 %v2089
        %2914 = vmatprep.subr.bf16.mxu0 %v2098
        %2915 = vmatpush1.bf16.msra.mxu0 %v2097
        %2916 = vmatprep.subr.bf16.mxu0 %v2106
        %2917 = vmatpush1.bf16.msra.mxu0 %v2105
        %2918 = vmatprep.subr.bf16.mxu0 %v2114
        %2919 = vmatpush1.bf16.msra.mxu0 %v2113
        %2920 = vmatprep.mubr.bf16.mxu0 %v828
        %2921 = vmatmul.mubr.bf16.gmra.mrb[0].mxu0 %v827
        %v2922 = vpop.f32.mrb[0].mxu0
        %v2923 = vadd.f32 %v780, %v2922
        %v2924 = vpop.f32.mrb[0].mxu0
        %v2925 = vadd.f32 %v784, %v2924
        %v2926 = vpop.f32.mrb[0].mxu0
        %v2927 = vadd.f32 %v780, %v2926
        %v2928 = vpop.f32.mrb[0].mxu0
        %v2929 = vadd.f32 %v784, %v2928
        %2930 = vdwg.mxu0
        %2931 = vmatprep.subr.bf16.mxu0 %v2122
        %2932 = vmatpush1.bf16.msra.mxu0 %v2121
        %2933 = vmatprep.subr.bf16.mxu0 %v2130
        %2934 = vmatpush1.bf16.msra.mxu0 %v2129
        %2935 = vmatprep.subr.bf16.mxu0 %v2138
        %2936 = vmatpush1.bf16.msra.mxu0 %v2137
        %2937 = vmatprep.subr.bf16.mxu0 %v2146
        %2938 = vmatpush1.bf16.msra.mxu0 %v2145
        %2939 = vmatprep.subr.bf16.mxu0 %v2154
        %2940 = vmatpush1.bf16.msra.mxu0 %v2153
        %2941 = vmatprep.subr.bf16.mxu0 %v2162
        %2942 = vmatpush1.bf16.msra.mxu0 %v2161
        %2943 = vmatprep.subr.bf16.mxu0 %v2170
        %2944 = vmatpush1.bf16.msra.mxu0 %v2169
        %2945 = vmatprep.subr.bf16.mxu0 %v2178
        %2946 = vmatpush1.bf16.msra.mxu0 %v2177
        %2947 = vmatprep.subr.bf16.mxu0 %v2186
        %2948 = vmatpush1.bf16.msra.mxu0 %v2185
        %2949 = vmatprep.subr.bf16.mxu0 %v2194
        %2950 = vmatpush1.bf16.msra.mxu0 %v2193
        %2951 = vmatprep.subr.bf16.mxu0 %v2202
        %2952 = vmatpush1.bf16.msra.mxu0 %v2201
        %2953 = vmatprep.subr.bf16.mxu0 %v2210
        %2954 = vmatpush1.bf16.msra.mxu0 %v2209
        %2955 = vmatprep.subr.bf16.mxu0 %v2218
        %2956 = vmatpush1.bf16.msra.mxu0 %v2217
        %2957 = vmatprep.subr.bf16.mxu0 %v2226
        %2958 = vmatpush1.bf16.msra.mxu0 %v2225
        %2959 = vmatprep.subr.bf16.mxu0 %v2234
        %2960 = vmatpush1.bf16.msra.mxu0 %v2233
        %2961 = vmatprep.subr.bf16.mxu0 %v2242
        %2962 = vmatpush1.bf16.msra.mxu0 %v2241
        %2963 = vmatprep.mubr.bf16.mxu0 %v830
        %2964 = vmatmul.mubr.bf16.gmra.mrb[0].mxu0 %v829
        %v2965 = vpop.f32.mrb[0].mxu0
        %v2966 = vadd.f32 %v2923, %v2965
        %v2967 = vpop.f32.mrb[0].mxu0
        %v2968 = vadd.f32 %v2925, %v2967
        %v2969 = vpop.f32.mrb[0].mxu0
        %v2970 = vadd.f32 %v2927, %v2969
        %v2971 = vpop.f32.mrb[0].mxu0
        %v2972 = vadd.f32 %v2929, %v2971
        %2973 = vdwg.mxu0
        %2974 = vmatprep.subr.bf16.mxu0 %v2250
        %2975 = vmatpush1.bf16.msra.mxu0 %v2249
        %2976 = vmatprep.subr.bf16.mxu0 %v2258
        %2977 = vmatpush1.bf16.msra.mxu0 %v2257
        %2978 = vmatprep.subr.bf16.mxu0 %v2266
        %2979 = vmatpush1.bf16.msra.mxu0 %v2265
        %2980 = vmatprep.subr.bf16.mxu0 %v2274
        %2981 = vmatpush1.bf16.msra.mxu0 %v2273
        %2982 = vmatprep.subr.bf16.mxu0 %v2282
        %2983 = vmatpush1.bf16.msra.mxu0 %v2281
        %2984 = vmatprep.subr.bf16.mxu0 %v2290
        %2985 = vmatpush1.bf16.msra.mxu0 %v2289
        %2986 = vmatprep.subr.bf16.mxu0 %v2298
        %2987 = vmatpush1.bf16.msra.mxu0 %v2297
        %2988 = vmatprep.subr.bf16.mxu0 %v2306
        %2989 = vmatpush1.bf16.msra.mxu0 %v2305
        %2990 = vmatprep.subr.bf16.mxu0 %v2314
        %2991 = vmatpush1.bf16.msra.mxu0 %v2313
        %2992 = vmatprep.subr.bf16.mxu0 %v2322
        %2993 = vmatpush1.bf16.msra.mxu0 %v2321
        %2994 = vmatprep.subr.bf16.mxu0 %v2330
        %2995 = vmatpush1.bf16.msra.mxu0 %v2329
        %2996 = vmatprep.subr.bf16.mxu0 %v2338
        %2997 = vmatpush1.bf16.msra.mxu0 %v2337
        %2998 = vmatprep.subr.bf16.mxu0 %v2346
        %2999 = vmatpush1.bf16.msra.mxu0 %v2345
        %3000 = vmatprep.subr.bf16.mxu0 %v2354
        %3001 = vmatpush1.bf16.msra.mxu0 %v2353
        %3002 = vmatprep.subr.bf16.mxu0 %v2362
        %3003 = vmatpush1.bf16.msra.mxu0 %v2361
        %3004 = vmatprep.subr.bf16.mxu0 %v2370
        %3005 = vmatpush1.bf16.msra.mxu0 %v2369
        %3006 = vmatprep.mubr.bf16.mxu0 %v832
        %3007 = vmatmul.mubr.bf16.gmra.mrb[0].mxu0 %v831
        %v3008 = vpop.f32.mrb[0].mxu0
        %v3009 = vadd.f32 %v2966, %v3008
        %v3010 = vpop.f32.mrb[0].mxu0
        %v3011 = vadd.f32 %v2968, %v3010
        %v3012 = vpop.f32.mrb[0].mxu0
        %v3013 = vadd.f32 %v2970, %v3012
        %v3014 = vpop.f32.mrb[0].mxu0
        %v3015 = vadd.f32 %v2972, %v3014
        %3016 = vdwg.mxu0
        %3017 = vmatprep.subr.bf16.mxu0 %v1996
        %3018 = vmatpush1.bf16.msra.mxu0 %v1995
        %3019 = vmatprep.subr.bf16.mxu0 %v2004
        %3020 = vmatpush1.bf16.msra.mxu0 %v2003
        %3021 = vmatprep.subr.bf16.mxu0 %v2012
        %3022 = vmatpush1.bf16.msra.mxu0 %v2011
        %3023 = vmatprep.subr.bf16.mxu0 %v2020
        %3024 = vmatpush1.bf16.msra.mxu0 %v2019
        %3025 = vmatprep.subr.bf16.mxu0 %v2028
        %3026 = vmatpush1.bf16.msra.mxu0 %v2027
        %3027 = vmatprep.subr.bf16.mxu0 %v2036
        %3028 = vmatpush1.bf16.msra.mxu0 %v2035
        %3029 = vmatprep.subr.bf16.mxu0 %v2044
        %3030 = vmatpush1.bf16.msra.mxu0 %v2043
        %3031 = vmatprep.subr.bf16.mxu0 %v2052
        %3032 = vmatpush1.bf16.msra.mxu0 %v2051
        %3033 = vmatprep.subr.bf16.mxu0 %v2060
        %3034 = vmatpush1.bf16.msra.mxu0 %v2059
        %3035 = vmatprep.subr.bf16.mxu0 %v2068
        %3036 = vmatpush1.bf16.msra.mxu0 %v2067
        %3037 = vmatprep.subr.bf16.mxu0 %v2076
        %3038 = vmatpush1.bf16.msra.mxu0 %v2075
        %3039 = vmatprep.subr.bf16.mxu0 %v2084
        %3040 = vmatpush1.bf16.msra.mxu0 %v2083
        %3041 = vmatprep.subr.bf16.mxu0 %v2092
        %3042 = vmatpush1.bf16.msra.mxu0 %v2091
        %3043 = vmatprep.subr.bf16.mxu0 %v2100
        %3044 = vmatpush1.bf16.msra.mxu0 %v2099
        %3045 = vmatprep.subr.bf16.mxu0 %v2108
        %3046 = vmatpush1.bf16.msra.mxu0 %v2107
        %3047 = vmatprep.subr.bf16.mxu0 %v2116
        %3048 = vmatpush1.bf16.msra.mxu0 %v2115
        %3049 = vmatprep.mubr.bf16.mxu0 %v828
        %3050 = vmatmul.mubr.bf16.gmra.mrb[0].mxu0 %v827
        %v3051 = vpop.f32.mrb[0].mxu0
        %v3052 = vadd.f32 %v788, %v3051
        %v3053 = vpop.f32.mrb[0].mxu0
        %v3054 = vadd.f32 %v792, %v3053
        %v3055 = vpop.f32.mrb[0].mxu0
        %v3056 = vadd.f32 %v788, %v3055
        %v3057 = vpop.f32.mrb[0].mxu0
        %v3058 = vadd.f32 %v792, %v3057
        %3059 = vdwg.mxu0
        %3060 = vmatprep.subr.bf16.mxu0 %v2124
        %3061 = vmatpush1.bf16.msra.mxu0 %v2123
        %3062 = vmatprep.subr.bf16.mxu0 %v2132
        %3063 = vmatpush1.bf16.msra.mxu0 %v2131
        %3064 = vmatprep.subr.bf16.mxu0 %v2140
        %3065 = vmatpush1.bf16.msra.mxu0 %v2139
        %3066 = vmatprep.subr.bf16.mxu0 %v2148
        %3067 = vmatpush1.bf16.msra.mxu0 %v2147
        %3068 = vmatprep.subr.bf16.mxu0 %v2156
        %3069 = vmatpush1.bf16.msra.mxu0 %v2155
        %3070 = vmatprep.subr.bf16.mxu0 %v2164
        %3071 = vmatpush1.bf16.msra.mxu0 %v2163
        %3072 = vmatprep.subr.bf16.mxu0 %v2172
        %3073 = vmatpush1.bf16.msra.mxu0 %v2171
        %3074 = vmatprep.subr.bf16.mxu0 %v2180
        %3075 = vmatpush1.bf16.msra.mxu0 %v2179
        %3076 = vmatprep.subr.bf16.mxu0 %v2188
        %3077 = vmatpush1.bf16.msra.mxu0 %v2187
        %3078 = vmatprep.subr.bf16.mxu0 %v2196
        %3079 = vmatpush1.bf16.msra.mxu0 %v2195
        %3080 = vmatprep.subr.bf16.mxu0 %v2204
        %3081 = vmatpush1.bf16.msra.mxu0 %v2203
        %3082 = vmatprep.subr.bf16.mxu0 %v2212
        %3083 = vmatpush1.bf16.msra.mxu0 %v2211
        %3084 = vmatprep.subr.bf16.mxu0 %v2220
        %3085 = vmatpush1.bf16.msra.mxu0 %v2219
        %3086 = vmatprep.subr.bf16.mxu0 %v2228
        %3087 = vmatpush1.bf16.msra.mxu0 %v2227
        %3088 = vmatprep.subr.bf16.mxu0 %v2236
        %3089 = vmatpush1.bf16.msra.mxu0 %v2235
        %3090 = vmatprep.subr.bf16.mxu0 %v2244
        %3091 = vmatpush1.bf16.msra.mxu0 %v2243
        %3092 = vmatprep.mubr.bf16.mxu0 %v830
        %3093 = vmatmul.mubr.bf16.gmra.mrb[0].mxu0 %v829
        %v3094 = vpop.f32.mrb[0].mxu0
        %v3095 = vadd.f32 %v3052, %v3094
        %v3096 = vpop.f32.mrb[0].mxu0
        %v3097 = vadd.f32 %v3054, %v3096
        %v3098 = vpop.f32.mrb[0].mxu0
        %v3099 = vadd.f32 %v3056, %v3098
        %v3100 = vpop.f32.mrb[0].mxu0
        %v3101 = vadd.f32 %v3058, %v3100
        %3102 = vdwg.mxu0
        %3103 = vmatprep.subr.bf16.mxu0 %v2252
        %3104 = vmatpush1.bf16.msra.mxu0 %v2251
        %3105 = vmatprep.subr.bf16.mxu0 %v2260
        %3106 = vmatpush1.bf16.msra.mxu0 %v2259
        %3107 = vmatprep.subr.bf16.mxu0 %v2268
        %3108 = vmatpush1.bf16.msra.mxu0 %v2267
        %3109 = vmatprep.subr.bf16.mxu0 %v2276
        %3110 = vmatpush1.bf16.msra.mxu0 %v2275
        %3111 = vmatprep.subr.bf16.mxu0 %v2284
        %3112 = vmatpush1.bf16.msra.mxu0 %v2283
        %3113 = vmatprep.subr.bf16.mxu0 %v2292
        %3114 = vmatpush1.bf16.msra.mxu0 %v2291
        %3115 = vmatprep.subr.bf16.mxu0 %v2300
        %3116 = vmatpush1.bf16.msra.mxu0 %v2299
        %3117 = vmatprep.subr.bf16.mxu0 %v2308
        %3118 = vmatpush1.bf16.msra.mxu0 %v2307
        %3119 = vmatprep.subr.bf16.mxu0 %v2316
        %3120 = vmatpush1.bf16.msra.mxu0 %v2315
        %3121 = vmatprep.subr.bf16.mxu0 %v2324
        %3122 = vmatpush1.bf16.msra.mxu0 %v2323
        %3123 = vmatprep.subr.bf16.mxu0 %v2332
        %3124 = vmatpush1.bf16.msra.mxu0 %v2331
        %3125 = vmatprep.subr.bf16.mxu0 %v2340
        %3126 = vmatpush1.bf16.msra.mxu0 %v2339
        %3127 = vmatprep.subr.bf16.mxu0 %v2348
        %3128 = vmatpush1.bf16.msra.mxu0 %v2347
        %3129 = vmatprep.subr.bf16.mxu0 %v2356
        %3130 = vmatpush1.bf16.msra.mxu0 %v2355
        %3131 = vmatprep.subr.bf16.mxu0 %v2364
        %3132 = vmatpush1.bf16.msra.mxu0 %v2363
        %3133 = vmatprep.subr.bf16.mxu0 %v2372
        %3134 = vmatpush1.bf16.msra.mxu0 %v2371
        %3135 = vmatprep.mubr.bf16.mxu0 %v832
        %3136 = vmatmul.mubr.bf16.gmra.mrb[0].mxu0 %v831
        %v3137 = vpop.f32.mrb[0].mxu0
        %v3138 = vadd.f32 %v3095, %v3137
        %v3139 = vpop.f32.mrb[0].mxu0
        %v3140 = vadd.f32 %v3097, %v3139
        %v3141 = vpop.f32.mrb[0].mxu0
        %v3142 = vadd.f32 %v3099, %v3141
        %v3143 = vpop.f32.mrb[0].mxu0
        %v3144 = vadd.f32 %v3101, %v3143
        %3145 = vdwg.mxu0
        %3146 = vmatprep.subr.bf16.mxu0 %v1998
        %3147 = vmatpush1.bf16.msra.mxu0 %v1997
        %3148 = vmatprep.subr.bf16.mxu0 %v2006
        %3149 = vmatpush1.bf16.msra.mxu0 %v2005
        %3150 = vmatprep.subr.bf16.mxu0 %v2014
        %3151 = vmatpush1.bf16.msra.mxu0 %v2013
        %3152 = vmatprep.subr.bf16.mxu0 %v2022
        %3153 = vmatpush1.bf16.msra.mxu0 %v2021
        %3154 = vmatprep.subr.bf16.mxu0 %v2030
        %3155 = vmatpush1.bf16.msra.mxu0 %v2029
        %3156 = vmatprep.subr.bf16.mxu0 %v2038
        %3157 = vmatpush1.bf16.msra.mxu0 %v2037
        %3158 = vmatprep.subr.bf16.mxu0 %v2046
        %3159 = vmatpush1.bf16.msra.mxu0 %v2045
        %3160 = vmatprep.subr.bf16.mxu0 %v2054
        %3161 = vmatpush1.bf16.msra.mxu0 %v2053
        %3162 = vmatprep.subr.bf16.mxu0 %v2062
        %3163 = vmatpush1.bf16.msra.mxu0 %v2061
        %3164 = vmatprep.subr.bf16.mxu0 %v2070
        %3165 = vmatpush1.bf16.msra.mxu0 %v2069
        %3166 = vmatprep.subr.bf16.mxu0 %v2078
        %3167 = vmatpush1.bf16.msra.mxu0 %v2077
        %3168 = vmatprep.subr.bf16.mxu0 %v2086
        %3169 = vmatpush1.bf16.msra.mxu0 %v2085
        %3170 = vmatprep.subr.bf16.mxu0 %v2094
        %3171 = vmatpush1.bf16.msra.mxu0 %v2093
        %3172 = vmatprep.subr.bf16.mxu0 %v2102
        %3173 = vmatpush1.bf16.msra.mxu0 %v2101
        %3174 = vmatprep.subr.bf16.mxu0 %v2110
        %3175 = vmatpush1.bf16.msra.mxu0 %v2109
        %3176 = vmatprep.subr.bf16.mxu0 %v2118
        %3177 = vmatpush1.bf16.msra.mxu0 %v2117
        %3178 = vmatprep.mubr.bf16.mxu0 %v828
        %3179 = vmatmul.mubr.bf16.gmra.mrb[0].mxu0 %v827
        %v3180 = vpop.f32.mrb[0].mxu0
        %v3181 = vadd.f32 %v796, %v3180
        %v3182 = vpop.f32.mrb[0].mxu0
        %v3183 = vadd.f32 %v800, %v3182
        %v3184 = vpop.f32.mrb[0].mxu0
        %v3185 = vadd.f32 %v796, %v3184
        %v3186 = vpop.f32.mrb[0].mxu0
        %v3187 = vadd.f32 %v800, %v3186
        %3188 = vdwg.mxu0
        %3189 = vmatprep.subr.bf16.mxu0 %v2126
        %3190 = vmatpush1.bf16.msra.mxu0 %v2125
        %3191 = vmatprep.subr.bf16.mxu0 %v2134
        %3192 = vmatpush1.bf16.msra.mxu0 %v2133
        %3193 = vmatprep.subr.bf16.mxu0 %v2142
        %3194 = vmatpush1.bf16.msra.mxu0 %v2141
        %3195 = vmatprep.subr.bf16.mxu0 %v2150
        %3196 = vmatpush1.bf16.msra.mxu0 %v2149
        %3197 = vmatprep.subr.bf16.mxu0 %v2158
        %3198 = vmatpush1.bf16.msra.mxu0 %v2157
        %3199 = vmatprep.subr.bf16.mxu0 %v2166
        %3200 = vmatpush1.bf16.msra.mxu0 %v2165
        %3201 = vmatprep.subr.bf16.mxu0 %v2174
        %3202 = vmatpush1.bf16.msra.mxu0 %v2173
        %3203 = vmatprep.subr.bf16.mxu0 %v2182
        %3204 = vmatpush1.bf16.msra.mxu0 %v2181
        %3205 = vmatprep.subr.bf16.mxu0 %v2190
        %3206 = vmatpush1.bf16.msra.mxu0 %v2189
        %3207 = vmatprep.subr.bf16.mxu0 %v2198
        %3208 = vmatpush1.bf16.msra.mxu0 %v2197
        %3209 = vmatprep.subr.bf16.mxu0 %v2206
        %3210 = vmatpush1.bf16.msra.mxu0 %v2205
        %3211 = vmatprep.subr.bf16.mxu0 %v2214
        %3212 = vmatpush1.bf16.msra.mxu0 %v2213
        %3213 = vmatprep.subr.bf16.mxu0 %v2222
        %3214 = vmatpush1.bf16.msra.mxu0 %v2221
        %3215 = vmatprep.subr.bf16.mxu0 %v2230
        %3216 = vmatpush1.bf16.msra.mxu0 %v2229
        %3217 = vmatprep.subr.bf16.mxu0 %v2238
        %3218 = vmatpush1.bf16.msra.mxu0 %v2237
        %3219 = vmatprep.subr.bf16.mxu0 %v2246
        %3220 = vmatpush1.bf16.msra.mxu0 %v2245
        %3221 = vmatprep.mubr.bf16.mxu0 %v830
        %3222 = vmatmul.mubr.bf16.gmra.mrb[0].mxu0 %v829
        %v3223 = vpop.f32.mrb[0].mxu0
        %v3224 = vadd.f32 %v3181, %v3223
        %v3225 = vpop.f32.mrb[0].mxu0
        %v3226 = vadd.f32 %v3183, %v3225
        %v3227 = vpop.f32.mrb[0].mxu0
        %v3228 = vadd.f32 %v3185, %v3227
        %v3229 = vpop.f32.mrb[0].mxu0
        %v3230 = vadd.f32 %v3187, %v3229
        %3231 = vdwg.mxu0
        %3232 = vmatprep.subr.bf16.mxu0 %v2254
        %3233 = vmatpush1.bf16.msra.mxu0 %v2253
        %3234 = vmatprep.subr.bf16.mxu0 %v2262
        %3235 = vmatpush1.bf16.msra.mxu0 %v2261
        %3236 = vmatprep.subr.bf16.mxu0 %v2270
        %3237 = vmatpush1.bf16.msra.mxu0 %v2269
        %3238 = vmatprep.subr.bf16.mxu0 %v2278
        %3239 = vmatpush1.bf16.msra.mxu0 %v2277
        %3240 = vmatprep.subr.bf16.mxu0 %v2286
        %3241 = vmatpush1.bf16.msra.mxu0 %v2285
        %3242 = vmatprep.subr.bf16.mxu0 %v2294
        %3243 = vmatpush1.bf16.msra.mxu0 %v2293
        %3244 = vmatprep.subr.bf16.mxu0 %v2302
        %3245 = vmatpush1.bf16.msra.mxu0 %v2301
        %3246 = vmatprep.subr.bf16.mxu0 %v2310
        %3247 = vmatpush1.bf16.msra.mxu0 %v2309
        %3248 = vmatprep.subr.bf16.mxu0 %v2318
        %3249 = vmatpush1.bf16.msra.mxu0 %v2317
        %3250 = vmatprep.subr.bf16.mxu0 %v2326
        %3251 = vmatpush1.bf16.msra.mxu0 %v2325
        %3252 = vmatprep.subr.bf16.mxu0 %v2334
        %3253 = vmatpush1.bf16.msra.mxu0 %v2333
        %3254 = vmatprep.subr.bf16.mxu0 %v2342
        %3255 = vmatpush1.bf16.msra.mxu0 %v2341
        %3256 = vmatprep.subr.bf16.mxu0 %v2350
        %3257 = vmatpush1.bf16.msra.mxu0 %v2349
        %3258 = vmatprep.subr.bf16.mxu0 %v2358
        %3259 = vmatpush1.bf16.msra.mxu0 %v2357
        %3260 = vmatprep.subr.bf16.mxu0 %v2366
        %3261 = vmatpush1.bf16.msra.mxu0 %v2365
        %3262 = vmatprep.subr.bf16.mxu0 %v2374
        %3263 = vmatpush1.bf16.msra.mxu0 %v2373
        %3264 = vmatprep.mubr.bf16.mxu0 %v832
        %3265 = vmatmul.mubr.bf16.gmra.mrb[0].mxu0 %v831
        %v3266 = vpop.f32.mrb[0].mxu0
        %v3267 = vadd.f32 %v3224, %v3266
        %v3268 = vpop.f32.mrb[0].mxu0
        %v3269 = vadd.f32 %v3226, %v3268
        %v3270 = vpop.f32.mrb[0].mxu0
        %v3271 = vadd.f32 %v3228, %v3270
        %v3272 = vpop.f32.mrb[0].mxu0
        %v3273 = vadd.f32 %v3230, %v3272
        %3274 = vdwg.mxu0
        %v3275 = vmul.f32 %v2880, %v2880
        %v3276 = vmul.f32 %v2882, %v2882
        %v3277 = vmul.f32 %v3009, %v3009
        %v3278 = vmul.f32 %v3011, %v3011
        %v3279 = vmul.f32 %v3138, %v3138
        %v3280 = vmul.f32 %v3140, %v3140
        %v3281 = vmul.f32 %v3267, %v3267
        %v3282 = vmul.f32 %v3269, %v3269
        %v3283 = vmul.f32 %v2884, %v2884
        %v3284 = vmul.f32 %v2886, %v2886
        %v3285 = vmul.f32 %v3013, %v3013
        %v3286 = vmul.f32 %v3015, %v3015
        %v3287 = vmul.f32 %v3142, %v3142
        %v3288 = vmul.f32 %v3144, %v3144
        %v3289 = vmul.f32 %v3271, %v3271
        %v3290 = vmul.f32 %v3273, %v3273
        %v3291 = vmul.f32 %v2880, %v3275
        %v3292 = vmul.f32 %v2882, %v3276
        %v3293 = vmul.f32 %v3009, %v3277
        %v3294 = vmul.f32 %v3011, %v3278
        %v3295 = vmul.f32 %v3138, %v3279
        %v3296 = vmul.f32 %v3140, %v3280
        %v3297 = vmul.f32 %v3267, %v3281
        %v3298 = vmul.f32 %v3269, %v3282
        %v3299 = vmul.f32 %v2884, %v3283
        %v3300 = vmul.f32 %v2886, %v3284
        %v3301 = vmul.f32 %v3013, %v3285
        %v3302 = vmul.f32 %v3015, %v3286
        %v3303 = vmul.f32 %v3142, %v3287
        %v3304 = vmul.f32 %v3144, %v3288
        %v3305 = vmul.f32 %v3271, %v3289
        %v3306 = vmul.f32 %v3273, %v3290
        %v3307 = vmul.f32 %v3291, 0.044715
        %v3308 = vmul.f32 %v3292, 0.044715
        %v3309 = vmul.f32 %v3293, 0.044715
        %v3310 = vmul.f32 %v3294, 0.044715
        %v3311 = vmul.f32 %v3295, 0.044715
        %v3312 = vmul.f32 %v3296, 0.044715
        %v3313 = vmul.f32 %v3297, 0.044715
        %v3314 = vmul.f32 %v3298, 0.044715
        %v3315 = vmul.f32 %v3299, 0.044715
        %v3316 = vmul.f32 %v3300, 0.044715
        %v3317 = vmul.f32 %v3301, 0.044715
        %v3318 = vmul.f32 %v3302, 0.044715
        %v3319 = vmul.f32 %v3303, 0.044715
        %v3320 = vmul.f32 %v3304, 0.044715
        %v3321 = vmul.f32 %v3305, 0.044715
        %v3322 = vmul.f32 %v3306, 0.044715
        %v3323 = vadd.f32 %v2880, %v3307
        %v3324 = vadd.f32 %v2882, %v3308
        %v3325 = vadd.f32 %v3009, %v3309
        %v3326 = vadd.f32 %v3011, %v3310
        %v3327 = vadd.f32 %v3138, %v3311
        %v3328 = vadd.f32 %v3140, %v3312
        %v3329 = vadd.f32 %v3267, %v3313
        %v3330 = vadd.f32 %v3269, %v3314
        %v3331 = vadd.f32 %v2884, %v3315
        %v3332 = vadd.f32 %v2886, %v3316
        %v3333 = vadd.f32 %v3013, %v3317
        %v3334 = vadd.f32 %v3015, %v3318
        %v3335 = vadd.f32 %v3142, %v3319
        %v3336 = vadd.f32 %v3144, %v3320
        %v3337 = vadd.f32 %v3271, %v3321
        %v3338 = vadd.f32 %v3273, %v3322
        %v3339 = vmul.f32 %v3323, 0.7978846
        %v3340 = vmul.f32 %v3324, 0.7978846
        %v3341 = vmul.f32 %v3325, 0.7978846
        %v3342 = vmul.f32 %v3326, 0.7978846
        %v3343 = vmul.f32 %v3327, 0.7978846
        %v3344 = vmul.f32 %v3328, 0.7978846
        %v3345 = vmul.f32 %v3329, 0.7978846
        %v3346 = vmul.f32 %v3330, 0.7978846
        %v3347 = vmul.f32 %v3331, 0.7978846
        %v3348 = vmul.f32 %v3332, 0.7978846
        %v3349 = vmul.f32 %v3333, 0.7978846
        %v3350 = vmul.f32 %v3334, 0.7978846
        %v3351 = vmul.f32 %v3335, 0.7978846
        %v3352 = vmul.f32 %v3336, 0.7978846
        %v3353 = vmul.f32 %v3337, 0.7978846
        %v3354 = vmul.f32 %v3338, 0.7978846
        %v3355 = vtanh.pop %v3339
        %v3356 = vtanh.pop %v3340
        %v3357 = vtanh.pop %v3341
        %v3358 = vtanh.pop %v3342
        %v3359 = vtanh.pop %v3343
        %v3360 = vtanh.pop %v3344
        %v3361 = vtanh.pop %v3345
        %v3362 = vtanh.pop %v3346
        %v3363 = vtanh.pop %v3347
        %v3364 = vtanh.pop %v3348
        %v3365 = vtanh.pop %v3349
        %v3366 = vtanh.pop %v3350
        %v3367 = vtanh.pop %v3351
        %v3368 = vtanh.pop %v3352
        %v3369 = vtanh.pop %v3353
        %v3370 = vtanh.pop %v3354
        %v3371 = vadd.f32 %v3355, 1.0
        %v3372 = vadd.f32 %v3356, 1.0
        %v3373 = vadd.f32 %v3357, 1.0
        %v3374 = vadd.f32 %v3358, 1.0
        %v3375 = vadd.f32 %v3359, 1.0
        %v3376 = vadd.f32 %v3360, 1.0
        %v3377 = vadd.f32 %v3361, 1.0
        %v3378 = vadd.f32 %v3362, 1.0
        %v3379 = vadd.f32 %v3363, 1.0
        %v3380 = vadd.f32 %v3364, 1.0
        %v3381 = vadd.f32 %v3365, 1.0
        %v3382 = vadd.f32 %v3366, 1.0
        %v3383 = vadd.f32 %v3367, 1.0
        %v3384 = vadd.f32 %v3368, 1.0
        %v3385 = vadd.f32 %v3369, 1.0
        %v3386 = vadd.f32 %v3370, 1.0
        %v3387 = vmul.f32 %v3371, 0.5
        %v3388 = vmul.f32 %v3372, 0.5
        %v3389 = vmul.f32 %v3373, 0.5
        %v3390 = vmul.f32 %v3374, 0.5
        %v3391 = vmul.f32 %v3375, 0.5
        %v3392 = vmul.f32 %v3376, 0.5
        %v3393 = vmul.f32 %v3377, 0.5
        %v3394 = vmul.f32 %v3378, 0.5
        %v3395 = vmul.f32 %v3379, 0.5
        %v3396 = vmul.f32 %v3380, 0.5
        %v3397 = vmul.f32 %v3381, 0.5
        %v3398 = vmul.f32 %v3382, 0.5
        %v3399 = vmul.f32 %v3383, 0.5
        %v3400 = vmul.f32 %v3384, 0.5
        %v3401 = vmul.f32 %v3385, 0.5
        %v3402 = vmul.f32 %v3386, 0.5
        %v3403 = vmul.f32 %v2880, %v3387
        %v3404 = vmul.f32 %v2882, %v3388
        %v3405 = vmul.f32 %v3009, %v3389
        %v3406 = vmul.f32 %v3011, %v3390
        %v3407 = vmul.f32 %v3138, %v3391
        %v3408 = vmul.f32 %v3140, %v3392
        %v3409 = vmul.f32 %v3267, %v3393
        %v3410 = vmul.f32 %v3269, %v3394
        %v3411 = vmul.f32 %v2884, %v3395
        %v3412 = vmul.f32 %v2886, %v3396
        %v3413 = vmul.f32 %v3013, %v3397
        %v3414 = vmul.f32 %v3015, %v3398
        %v3415 = vmul.f32 %v3142, %v3399
        %v3416 = vmul.f32 %v3144, %v3400
        %v3417 = vmul.f32 %v3271, %v3401
        %v3418 = vmul.f32 %v3273, %v3402
        %v3419 = vld [vmem:[#allocation2] sm:$0xff]
        %v3420 = vld [vmem:[#allocation2 + $0x8] sm:$0xff]
        %v3421 = vld [vmem:[#allocation2 + $0x10] sm:$0xff]
        %v3422 = vld [vmem:[#allocation2 + $0x18] sm:$0xff]
        %v3423 = vld [vmem:[#allocation2 + $0x20] sm:$0xff]
        %v3424 = vld [vmem:[#allocation2 + $0x28] sm:$0xff]
        %v3425 = vld [vmem:[#allocation2 + $0x30] sm:$0xff]
        %v3426 = vld [vmem:[#allocation2 + $0x38] sm:$0xff]
        %v3427 = vpack.c.bf16 %v3411, %v3403
        %v3428 = vpack.c.bf16 %v3412, %v3404
        %v3429 = vpack.c.bf16 %v3413, %v3405
        %v3430 = vpack.c.bf16 %v3414, %v3406
        %v3431 = vpack.c.bf16 %v3415, %v3407
        %v3432 = vpack.c.bf16 %v3416, %v3408
        %v3433 = vpack.c.bf16 %v3417, %v3409
        %v3434 = vpack.c.bf16 %v3418, %v3410
        %v3435 = vld [vmem:[%s324] sm:$0xff]
        %v3436 = vld [vmem:[%s324 + $0x8] sm:$0xff]
        %v3437 = vld [vmem:[%s324 + $0x10] sm:$0xff]
        %v3438 = vld [vmem:[%s324 + $0x18] sm:$0xff]
        %v3439 = vld [vmem:[%s324 + $0x20] sm:$0xff]
        %v3440 = vld [vmem:[%s324 + $0x28] sm:$0xff]
        %v3441 = vld [vmem:[%s324 + $0x30] sm:$0xff]
        %v3442 = vld [vmem:[%s324 + $0x38] sm:$0xff]
        %v3443 = vld [vmem:[%s324 + $0x40] sm:$0xff]
        %v3444 = vld [vmem:[%s324 + $0x48] sm:$0xff]
        %v3445 = vld [vmem:[%s324 + $0x50] sm:$0xff]
        %v3446 = vld [vmem:[%s324 + $0x58] sm:$0xff]
        %v3447 = vld [vmem:[%s324 + $0x60] sm:$0xff]
        %v3448 = vld [vmem:[%s324 + $0x68] sm:$0xff]
        %v3449 = vld [vmem:[%s324 + $0x70] sm:$0xff]
        %v3450 = vld [vmem:[%s324 + $0x78] sm:$0xff]
        %v3451 = vld [vmem:[%s324 + $0x80] sm:$0xff]
        %v3452 = vld [vmem:[%s324 + $0x88] sm:$0xff]
        %v3453 = vld [vmem:[%s324 + $0x90] sm:$0xff]
        %v3454 = vld [vmem:[%s324 + $0x98] sm:$0xff]
        %v3455 = vld [vmem:[%s324 + $0xa0] sm:$0xff]
        %v3456 = vld [vmem:[%s324 + $0xa8] sm:$0xff]
        %v3457 = vld [vmem:[%s324 + $0xb0] sm:$0xff]
        %v3458 = vld [vmem:[%s324 + $0xb8] sm:$0xff]
        %v3459 = vld [vmem:[%s324 + $0xc0] sm:$0xff]
        %v3460 = vld [vmem:[%s324 + $0xc8] sm:$0xff]
        %v3461 = vld [vmem:[%s324 + $0xd0] sm:$0xff]
        %v3462 = vld [vmem:[%s324 + $0xd8] sm:$0xff]
        %v3463 = vld [vmem:[%s324 + $0xe0] sm:$0xff]
        %v3464 = vld [vmem:[%s324 + $0xe8] sm:$0xff]
        %v3465 = vld [vmem:[%s324 + $0xf0] sm:$0xff]
        %v3466 = vld [vmem:[%s324 + $0xf8] sm:$0xff]
        %v3467 = vld [vmem:[%s324 + $0x100] sm:$0xff]
        %v3468 = vld [vmem:[%s324 + $0x108] sm:$0xff]
        %v3469 = vld [vmem:[%s324 + $0x110] sm:$0xff]
        %v3470 = vld [vmem:[%s324 + $0x118] sm:$0xff]
        %v3471 = vld [vmem:[%s324 + $0x120] sm:$0xff]
        %v3472 = vld [vmem:[%s324 + $0x128] sm:$0xff]
        %v3473 = vld [vmem:[%s324 + $0x130] sm:$0xff]
        %v3474 = vld [vmem:[%s324 + $0x138] sm:$0xff]
        %v3475 = vld [vmem:[%s324 + $0x140] sm:$0xff]
        %v3476 = vld [vmem:[%s324 + $0x148] sm:$0xff]
        %v3477 = vld [vmem:[%s324 + $0x150] sm:$0xff]
        %v3478 = vld [vmem:[%s324 + $0x158] sm:$0xff]
        %v3479 = vld [vmem:[%s324 + $0x160] sm:$0xff]
        %v3480 = vld [vmem:[%s324 + $0x168] sm:$0xff]
        %v3481 = vld [vmem:[%s324 + $0x170] sm:$0xff]
        %v3482 = vld [vmem:[%s324 + $0x178] sm:$0xff]
        %v3483 = vld [vmem:[%s324 + $0x180] sm:$0xff]
        %v3484 = vld [vmem:[%s324 + $0x188] sm:$0xff]
        %v3485 = vld [vmem:[%s324 + $0x190] sm:$0xff]
        %v3486 = vld [vmem:[%s324 + $0x198] sm:$0xff]
        %v3487 = vld [vmem:[%s324 + $0x1a0] sm:$0xff]
        %v3488 = vld [vmem:[%s324 + $0x1a8] sm:$0xff]
        %v3489 = vld [vmem:[%s324 + $0x1b0] sm:$0xff]
        %v3490 = vld [vmem:[%s324 + $0x1b8] sm:$0xff]
        %v3491 = vld [vmem:[%s324 + $0x1c0] sm:$0xff]
        %v3492 = vld [vmem:[%s324 + $0x1c8] sm:$0xff]
        %v3493 = vld [vmem:[%s324 + $0x1d0] sm:$0xff]
        %v3494 = vld [vmem:[%s324 + $0x1d8] sm:$0xff]
        %v3495 = vld [vmem:[%s324 + $0x1e0] sm:$0xff]
        %v3496 = vld [vmem:[%s324 + $0x1e8] sm:$0xff]
        %v3497 = vld [vmem:[%s324 + $0x1f0] sm:$0xff]
        %v3498 = vld [vmem:[%s324 + $0x1f8] sm:$0xff]
        %v3499 = vld [vmem:[%s324 + $0x200] sm:$0xff]
        %v3500 = vld [vmem:[%s324 + $0x208] sm:$0xff]
        %v3501 = vld [vmem:[%s324 + $0x210] sm:$0xff]
        %v3502 = vld [vmem:[%s324 + $0x218] sm:$0xff]
        %v3503 = vld [vmem:[%s324 + $0x220] sm:$0xff]
        %v3504 = vld [vmem:[%s324 + $0x228] sm:$0xff]
        %v3505 = vld [vmem:[%s324 + $0x230] sm:$0xff]
        %v3506 = vld [vmem:[%s324 + $0x238] sm:$0xff]
        %v3507 = vld [vmem:[%s324 + $0x240] sm:$0xff]
        %v3508 = vld [vmem:[%s324 + $0x248] sm:$0xff]
        %v3509 = vld [vmem:[%s324 + $0x250] sm:$0xff]
        %v3510 = vld [vmem:[%s324 + $0x258] sm:$0xff]
        %v3511 = vld [vmem:[%s324 + $0x260] sm:$0xff]
        %v3512 = vld [vmem:[%s324 + $0x268] sm:$0xff]
        %v3513 = vld [vmem:[%s324 + $0x270] sm:$0xff]
        %v3514 = vld [vmem:[%s324 + $0x278] sm:$0xff]
        %v3515 = vld [vmem:[%s324 + $0x280] sm:$0xff]
        %v3516 = vld [vmem:[%s324 + $0x288] sm:$0xff]
        %v3517 = vld [vmem:[%s324 + $0x290] sm:$0xff]
        %v3518 = vld [vmem:[%s324 + $0x298] sm:$0xff]
        %v3519 = vld [vmem:[%s324 + $0x2a0] sm:$0xff]
        %v3520 = vld [vmem:[%s324 + $0x2a8] sm:$0xff]
        %v3521 = vld [vmem:[%s324 + $0x2b0] sm:$0xff]
        %v3522 = vld [vmem:[%s324 + $0x2b8] sm:$0xff]
        %v3523 = vld [vmem:[%s324 + $0x2c0] sm:$0xff]
        %v3524 = vld [vmem:[%s324 + $0x2c8] sm:$0xff]
        %v3525 = vld [vmem:[%s324 + $0x2d0] sm:$0xff]
        %v3526 = vld [vmem:[%s324 + $0x2d8] sm:$0xff]
        %v3527 = vld [vmem:[%s324 + $0x2e0] sm:$0xff]
        %v3528 = vld [vmem:[%s324 + $0x2e8] sm:$0xff]
        %v3529 = vld [vmem:[%s324 + $0x2f0] sm:$0xff]
        %v3530 = vld [vmem:[%s324 + $0x2f8] sm:$0xff]
        %v3531 = vld [vmem:[%s324 + $0x300] sm:$0xff]
        %v3532 = vld [vmem:[%s324 + $0x308] sm:$0xff]
        %v3533 = vld [vmem:[%s324 + $0x310] sm:$0xff]
        %v3534 = vld [vmem:[%s324 + $0x318] sm:$0xff]
        %v3535 = vld [vmem:[%s324 + $0x320] sm:$0xff]
        %v3536 = vld [vmem:[%s324 + $0x328] sm:$0xff]
        %v3537 = vld [vmem:[%s324 + $0x330] sm:$0xff]
        %v3538 = vld [vmem:[%s324 + $0x338] sm:$0xff]
        %v3539 = vld [vmem:[%s324 + $0x340] sm:$0xff]
        %v3540 = vld [vmem:[%s324 + $0x348] sm:$0xff]
        %v3541 = vld [vmem:[%s324 + $0x350] sm:$0xff]
        %v3542 = vld [vmem:[%s324 + $0x358] sm:$0xff]
        %v3543 = vld [vmem:[%s324 + $0x360] sm:$0xff]
        %v3544 = vld [vmem:[%s324 + $0x368] sm:$0xff]
        %v3545 = vld [vmem:[%s324 + $0x370] sm:$0xff]
        %v3546 = vld [vmem:[%s324 + $0x378] sm:$0xff]
        %v3547 = vld [vmem:[%s324 + $0x380] sm:$0xff]
        %v3548 = vld [vmem:[%s324 + $0x388] sm:$0xff]
        %v3549 = vld [vmem:[%s324 + $0x390] sm:$0xff]
        %v3550 = vld [vmem:[%s324 + $0x398] sm:$0xff]
        %v3551 = vld [vmem:[%s324 + $0x3a0] sm:$0xff]
        %v3552 = vld [vmem:[%s324 + $0x3a8] sm:$0xff]
        %v3553 = vld [vmem:[%s324 + $0x3b0] sm:$0xff]
        %v3554 = vld [vmem:[%s324 + $0x3b8] sm:$0xff]
        %v3555 = vld [vmem:[%s324 + $0x3c0] sm:$0xff]
        %v3556 = vld [vmem:[%s324 + $0x3c8] sm:$0xff]
        %v3557 = vld [vmem:[%s324 + $0x3d0] sm:$0xff]
        %v3558 = vld [vmem:[%s324 + $0x3d8] sm:$0xff]
        %v3559 = vld [vmem:[%s324 + $0x3e0] sm:$0xff]
        %v3560 = vld [vmem:[%s324 + $0x3e8] sm:$0xff]
        %v3561 = vld [vmem:[%s324 + $0x3f0] sm:$0xff]
        %v3562 = vld [vmem:[%s324 + $0x3f8] sm:$0xff]
        %v3563 = vld [vmem:[%s324 + $0x400] sm:$0xff]
        %v3564 = vld [vmem:[%s324 + $0x408] sm:$0xff]
        %v3565 = vld [vmem:[%s324 + $0x410] sm:$0xff]
        %v3566 = vld [vmem:[%s324 + $0x418] sm:$0xff]
        %v3567 = vld [vmem:[%s324 + $0x420] sm:$0xff]
        %v3568 = vld [vmem:[%s324 + $0x428] sm:$0xff]
        %v3569 = vld [vmem:[%s324 + $0x430] sm:$0xff]
        %v3570 = vld [vmem:[%s324 + $0x438] sm:$0xff]
        %v3571 = vld [vmem:[%s324 + $0x440] sm:$0xff]
        %v3572 = vld [vmem:[%s324 + $0x448] sm:$0xff]
        %v3573 = vld [vmem:[%s324 + $0x450] sm:$0xff]
        %v3574 = vld [vmem:[%s324 + $0x458] sm:$0xff]
        %v3575 = vld [vmem:[%s324 + $0x460] sm:$0xff]
        %v3576 = vld [vmem:[%s324 + $0x468] sm:$0xff]
        %v3577 = vld [vmem:[%s324 + $0x470] sm:$0xff]
        %v3578 = vld [vmem:[%s324 + $0x478] sm:$0xff]
        %v3579 = vld [vmem:[%s324 + $0x480] sm:$0xff]
        %v3580 = vld [vmem:[%s324 + $0x488] sm:$0xff]
        %v3581 = vld [vmem:[%s324 + $0x490] sm:$0xff]
        %v3582 = vld [vmem:[%s324 + $0x498] sm:$0xff]
        %v3583 = vld [vmem:[%s324 + $0x4a0] sm:$0xff]
        %v3584 = vld [vmem:[%s324 + $0x4a8] sm:$0xff]
        %v3585 = vld [vmem:[%s324 + $0x4b0] sm:$0xff]
        %v3586 = vld [vmem:[%s324 + $0x4b8] sm:$0xff]
        %v3587 = vld [vmem:[%s324 + $0x4c0] sm:$0xff]
        %v3588 = vld [vmem:[%s324 + $0x4c8] sm:$0xff]
        %v3589 = vld [vmem:[%s324 + $0x4d0] sm:$0xff]
        %v3590 = vld [vmem:[%s324 + $0x4d8] sm:$0xff]
        %v3591 = vld [vmem:[%s324 + $0x4e0] sm:$0xff]
        %v3592 = vld [vmem:[%s324 + $0x4e8] sm:$0xff]
        %v3593 = vld [vmem:[%s324 + $0x4f0] sm:$0xff]
        %v3594 = vld [vmem:[%s324 + $0x4f8] sm:$0xff]
        %v3595 = vld [vmem:[%s324 + $0x500] sm:$0xff]
        %v3596 = vld [vmem:[%s324 + $0x508] sm:$0xff]
        %v3597 = vld [vmem:[%s324 + $0x510] sm:$0xff]
        %v3598 = vld [vmem:[%s324 + $0x518] sm:$0xff]
        %v3599 = vld [vmem:[%s324 + $0x520] sm:$0xff]
        %v3600 = vld [vmem:[%s324 + $0x528] sm:$0xff]
        %v3601 = vld [vmem:[%s324 + $0x530] sm:$0xff]
        %v3602 = vld [vmem:[%s324 + $0x538] sm:$0xff]
        %v3603 = vld [vmem:[%s324 + $0x540] sm:$0xff]
        %v3604 = vld [vmem:[%s324 + $0x548] sm:$0xff]
        %v3605 = vld [vmem:[%s324 + $0x550] sm:$0xff]
        %v3606 = vld [vmem:[%s324 + $0x558] sm:$0xff]
        %v3607 = vld [vmem:[%s324 + $0x560] sm:$0xff]
        %v3608 = vld [vmem:[%s324 + $0x568] sm:$0xff]
        %v3609 = vld [vmem:[%s324 + $0x570] sm:$0xff]
        %v3610 = vld [vmem:[%s324 + $0x578] sm:$0xff]
        %v3611 = vld [vmem:[%s324 + $0x580] sm:$0xff]
        %v3612 = vld [vmem:[%s324 + $0x588] sm:$0xff]
        %v3613 = vld [vmem:[%s324 + $0x590] sm:$0xff]
        %v3614 = vld [vmem:[%s324 + $0x598] sm:$0xff]
        %v3615 = vld [vmem:[%s324 + $0x5a0] sm:$0xff]
        %v3616 = vld [vmem:[%s324 + $0x5a8] sm:$0xff]
        %v3617 = vld [vmem:[%s324 + $0x5b0] sm:$0xff]
        %v3618 = vld [vmem:[%s324 + $0x5b8] sm:$0xff]
        %v3619 = vld [vmem:[%s324 + $0x5c0] sm:$0xff]
        %v3620 = vld [vmem:[%s324 + $0x5c8] sm:$0xff]
        %v3621 = vld [vmem:[%s324 + $0x5d0] sm:$0xff]
        %v3622 = vld [vmem:[%s324 + $0x5d8] sm:$0xff]
        %v3623 = vld [vmem:[%s324 + $0x5e0] sm:$0xff]
        %v3624 = vld [vmem:[%s324 + $0x5e8] sm:$0xff]
        %v3625 = vld [vmem:[%s324 + $0x5f0] sm:$0xff]
        %v3626 = vld [vmem:[%s324 + $0x5f8] sm:$0xff]
        %v3627 = vld [vmem:[%s324 + $0x600] sm:$0xff]
        %v3628 = vld [vmem:[%s324 + $0x608] sm:$0xff]
        %v3629 = vld [vmem:[%s324 + $0x610] sm:$0xff]
        %v3630 = vld [vmem:[%s324 + $0x618] sm:$0xff]
        %v3631 = vld [vmem:[%s324 + $0x620] sm:$0xff]
        %v3632 = vld [vmem:[%s324 + $0x628] sm:$0xff]
        %v3633 = vld [vmem:[%s324 + $0x630] sm:$0xff]
        %v3634 = vld [vmem:[%s324 + $0x638] sm:$0xff]
        %v3635 = vld [vmem:[%s324 + $0x640] sm:$0xff]
        %v3636 = vld [vmem:[%s324 + $0x648] sm:$0xff]
        %v3637 = vld [vmem:[%s324 + $0x650] sm:$0xff]
        %v3638 = vld [vmem:[%s324 + $0x658] sm:$0xff]
        %v3639 = vld [vmem:[%s324 + $0x660] sm:$0xff]
        %v3640 = vld [vmem:[%s324 + $0x668] sm:$0xff]
        %v3641 = vld [vmem:[%s324 + $0x670] sm:$0xff]
        %v3642 = vld [vmem:[%s324 + $0x678] sm:$0xff]
        %v3643 = vld [vmem:[%s324 + $0x680] sm:$0xff]
        %v3644 = vld [vmem:[%s324 + $0x688] sm:$0xff]
        %v3645 = vld [vmem:[%s324 + $0x690] sm:$0xff]
        %v3646 = vld [vmem:[%s324 + $0x698] sm:$0xff]
        %v3647 = vld [vmem:[%s324 + $0x6a0] sm:$0xff]
        %v3648 = vld [vmem:[%s324 + $0x6a8] sm:$0xff]
        %v3649 = vld [vmem:[%s324 + $0x6b0] sm:$0xff]
        %v3650 = vld [vmem:[%s324 + $0x6b8] sm:$0xff]
        %v3651 = vld [vmem:[%s324 + $0x6c0] sm:$0xff]
        %v3652 = vld [vmem:[%s324 + $0x6c8] sm:$0xff]
        %v3653 = vld [vmem:[%s324 + $0x6d0] sm:$0xff]
        %v3654 = vld [vmem:[%s324 + $0x6d8] sm:$0xff]
        %v3655 = vld [vmem:[%s324 + $0x6e0] sm:$0xff]
        %v3656 = vld [vmem:[%s324 + $0x6e8] sm:$0xff]
        %v3657 = vld [vmem:[%s324 + $0x6f0] sm:$0xff]
        %v3658 = vld [vmem:[%s324 + $0x6f8] sm:$0xff]
        %v3659 = vld [vmem:[%s324 + $0x700] sm:$0xff]
        %v3660 = vld [vmem:[%s324 + $0x708] sm:$0xff]
        %v3661 = vld [vmem:[%s324 + $0x710] sm:$0xff]
        %v3662 = vld [vmem:[%s324 + $0x718] sm:$0xff]
        %v3663 = vld [vmem:[%s324 + $0x720] sm:$0xff]
        %v3664 = vld [vmem:[%s324 + $0x728] sm:$0xff]
        %v3665 = vld [vmem:[%s324 + $0x730] sm:$0xff]
        %v3666 = vld [vmem:[%s324 + $0x738] sm:$0xff]
        %v3667 = vld [vmem:[%s324 + $0x740] sm:$0xff]
        %v3668 = vld [vmem:[%s324 + $0x748] sm:$0xff]
        %v3669 = vld [vmem:[%s324 + $0x750] sm:$0xff]
        %v3670 = vld [vmem:[%s324 + $0x758] sm:$0xff]
        %v3671 = vld [vmem:[%s324 + $0x760] sm:$0xff]
        %v3672 = vld [vmem:[%s324 + $0x768] sm:$0xff]
        %v3673 = vld [vmem:[%s324 + $0x770] sm:$0xff]
        %v3674 = vld [vmem:[%s324 + $0x778] sm:$0xff]
        %v3675 = vld [vmem:[%s324 + $0x780] sm:$0xff]
        %v3676 = vld [vmem:[%s324 + $0x788] sm:$0xff]
        %v3677 = vld [vmem:[%s324 + $0x790] sm:$0xff]
        %v3678 = vld [vmem:[%s324 + $0x798] sm:$0xff]
        %v3679 = vld [vmem:[%s324 + $0x7a0] sm:$0xff]
        %v3680 = vld [vmem:[%s324 + $0x7a8] sm:$0xff]
        %v3681 = vld [vmem:[%s324 + $0x7b0] sm:$0xff]
        %v3682 = vld [vmem:[%s324 + $0x7b8] sm:$0xff]
        %v3683 = vld [vmem:[%s324 + $0x7c0] sm:$0xff]
        %v3684 = vld [vmem:[%s324 + $0x7c8] sm:$0xff]
        %v3685 = vld [vmem:[%s324 + $0x7d0] sm:$0xff]
        %v3686 = vld [vmem:[%s324 + $0x7d8] sm:$0xff]
        %v3687 = vld [vmem:[%s324 + $0x7e0] sm:$0xff]
        %v3688 = vld [vmem:[%s324 + $0x7e8] sm:$0xff]
        %v3689 = vld [vmem:[%s324 + $0x7f0] sm:$0xff]
        %v3690 = vld [vmem:[%s324 + $0x7f8] sm:$0xff]
        %v3947 = vunpack.c.l.b16 %v3435
        %v3948 = vunpack.c.h.b16 %v3435
        %v3949 = vunpack.c.l.b16 %v3436
        %v3950 = vunpack.c.h.b16 %v3436
        %v3951 = vunpack.c.l.b16 %v3437
        %v3952 = vunpack.c.h.b16 %v3437
        %v3953 = vunpack.c.l.b16 %v3438
        %v3954 = vunpack.c.h.b16 %v3438
        %v3955 = vunpack.c.l.b16 %v3439
        %v3956 = vunpack.c.h.b16 %v3439
        %v3957 = vunpack.c.l.b16 %v3440
        %v3958 = vunpack.c.h.b16 %v3440
        %v3959 = vunpack.c.l.b16 %v3441
        %v3960 = vunpack.c.h.b16 %v3441
        %v3961 = vunpack.c.l.b16 %v3442
        %v3962 = vunpack.c.h.b16 %v3442
        %v3963 = vunpack.c.l.b16 %v3443
        %v3964 = vunpack.c.h.b16 %v3443
        %v3965 = vunpack.c.l.b16 %v3444
        %v3966 = vunpack.c.h.b16 %v3444
        %v3967 = vunpack.c.l.b16 %v3445
        %v3968 = vunpack.c.h.b16 %v3445
        %v3969 = vunpack.c.l.b16 %v3446
        %v3970 = vunpack.c.h.b16 %v3446
        %v3971 = vunpack.c.l.b16 %v3447
        %v3972 = vunpack.c.h.b16 %v3447
        %v3973 = vunpack.c.l.b16 %v3448
        %v3974 = vunpack.c.h.b16 %v3448
        %v3975 = vunpack.c.l.b16 %v3449
        %v3976 = vunpack.c.h.b16 %v3449
        %v3977 = vunpack.c.l.b16 %v3450
        %v3978 = vunpack.c.h.b16 %v3450
        %v3979 = vunpack.c.l.b16 %v3451
        %v3980 = vunpack.c.h.b16 %v3451
        %v3981 = vunpack.c.l.b16 %v3452
        %v3982 = vunpack.c.h.b16 %v3452
        %v3983 = vunpack.c.l.b16 %v3453
        %v3984 = vunpack.c.h.b16 %v3453
        %v3985 = vunpack.c.l.b16 %v3454
        %v3986 = vunpack.c.h.b16 %v3454
        %v3987 = vunpack.c.l.b16 %v3455
        %v3988 = vunpack.c.h.b16 %v3455
        %v3989 = vunpack.c.l.b16 %v3456
        %v3990 = vunpack.c.h.b16 %v3456
        %v3991 = vunpack.c.l.b16 %v3457
        %v3992 = vunpack.c.h.b16 %v3457
        %v3993 = vunpack.c.l.b16 %v3458
        %v3994 = vunpack.c.h.b16 %v3458
        %v3995 = vunpack.c.l.b16 %v3459
        %v3996 = vunpack.c.h.b16 %v3459
        %v3997 = vunpack.c.l.b16 %v3460
        %v3998 = vunpack.c.h.b16 %v3460
        %v3999 = vunpack.c.l.b16 %v3461
        %v4000 = vunpack.c.h.b16 %v3461
        %v4001 = vunpack.c.l.b16 %v3462
        %v4002 = vunpack.c.h.b16 %v3462
        %v4003 = vunpack.c.l.b16 %v3463
        %v4004 = vunpack.c.h.b16 %v3463
        %v4005 = vunpack.c.l.b16 %v3464
        %v4006 = vunpack.c.h.b16 %v3464
        %v4007 = vunpack.c.l.b16 %v3465
        %v4008 = vunpack.c.h.b16 %v3465
        %v4009 = vunpack.c.l.b16 %v3466
        %v4010 = vunpack.c.h.b16 %v3466
        %v4011 = vunpack.c.l.b16 %v3467
        %v4012 = vunpack.c.h.b16 %v3467
        %v4013 = vunpack.c.l.b16 %v3468
        %v4014 = vunpack.c.h.b16 %v3468
        %v4015 = vunpack.c.l.b16 %v3469
        %v4016 = vunpack.c.h.b16 %v3469
        %v4017 = vunpack.c.l.b16 %v3470
        %v4018 = vunpack.c.h.b16 %v3470
        %v4019 = vunpack.c.l.b16 %v3471
        %v4020 = vunpack.c.h.b16 %v3471
        %v4021 = vunpack.c.l.b16 %v3472
        %v4022 = vunpack.c.h.b16 %v3472
        %v4023 = vunpack.c.l.b16 %v3473
        %v4024 = vunpack.c.h.b16 %v3473
        %v4025 = vunpack.c.l.b16 %v3474
        %v4026 = vunpack.c.h.b16 %v3474
        %v4027 = vunpack.c.l.b16 %v3475
        %v4028 = vunpack.c.h.b16 %v3475
        %v4029 = vunpack.c.l.b16 %v3476
        %v4030 = vunpack.c.h.b16 %v3476
        %v4031 = vunpack.c.l.b16 %v3477
        %v4032 = vunpack.c.h.b16 %v3477
        %v4033 = vunpack.c.l.b16 %v3478
        %v4034 = vunpack.c.h.b16 %v3478
        %v4035 = vunpack.c.l.b16 %v3479
        %v4036 = vunpack.c.h.b16 %v3479
        %v4037 = vunpack.c.l.b16 %v3480
        %v4038 = vunpack.c.h.b16 %v3480
        %v4039 = vunpack.c.l.b16 %v3481
        %v4040 = vunpack.c.h.b16 %v3481
        %v4041 = vunpack.c.l.b16 %v3482
        %v4042 = vunpack.c.h.b16 %v3482
        %v4043 = vunpack.c.l.b16 %v3483
        %v4044 = vunpack.c.h.b16 %v3483
        %v4045 = vunpack.c.l.b16 %v3484
        %v4046 = vunpack.c.h.b16 %v3484
        %v4047 = vunpack.c.l.b16 %v3485
        %v4048 = vunpack.c.h.b16 %v3485
        %v4049 = vunpack.c.l.b16 %v3486
        %v4050 = vunpack.c.h.b16 %v3486
        %v4051 = vunpack.c.l.b16 %v3487
        %v4052 = vunpack.c.h.b16 %v3487
        %v4053 = vunpack.c.l.b16 %v3488
        %v4054 = vunpack.c.h.b16 %v3488
        %v4055 = vunpack.c.l.b16 %v3489
        %v4056 = vunpack.c.h.b16 %v3489
        %v4057 = vunpack.c.l.b16 %v3490
        %v4058 = vunpack.c.h.b16 %v3490
        %v4059 = vunpack.c.l.b16 %v3491
        %v4060 = vunpack.c.h.b16 %v3491
        %v4061 = vunpack.c.l.b16 %v3492
        %v4062 = vunpack.c.h.b16 %v3492
        %v4063 = vunpack.c.l.b16 %v3493
        %v4064 = vunpack.c.h.b16 %v3493
        %v4065 = vunpack.c.l.b16 %v3494
        %v4066 = vunpack.c.h.b16 %v3494
        %v4067 = vunpack.c.l.b16 %v3495
        %v4068 = vunpack.c.h.b16 %v3495
        %v4069 = vunpack.c.l.b16 %v3496
        %v4070 = vunpack.c.h.b16 %v3496
        %v4071 = vunpack.c.l.b16 %v3497
        %v4072 = vunpack.c.h.b16 %v3497
        %v4073 = vunpack.c.l.b16 %v3498
        %v4074 = vunpack.c.h.b16 %v3498
        %v4075 = vunpack.c.l.b16 %v3499
        %v4076 = vunpack.c.h.b16 %v3499
        %v4077 = vunpack.c.l.b16 %v3500
        %v4078 = vunpack.c.h.b16 %v3500
        %v4079 = vunpack.c.l.b16 %v3501
        %v4080 = vunpack.c.h.b16 %v3501
        %v4081 = vunpack.c.l.b16 %v3502
        %v4082 = vunpack.c.h.b16 %v3502
        %v4083 = vunpack.c.l.b16 %v3503
        %v4084 = vunpack.c.h.b16 %v3503
        %v4085 = vunpack.c.l.b16 %v3504
        %v4086 = vunpack.c.h.b16 %v3504
        %v4087 = vunpack.c.l.b16 %v3505
        %v4088 = vunpack.c.h.b16 %v3505
        %v4089 = vunpack.c.l.b16 %v3506
        %v4090 = vunpack.c.h.b16 %v3506
        %v4091 = vunpack.c.l.b16 %v3507
        %v4092 = vunpack.c.h.b16 %v3507
        %v4093 = vunpack.c.l.b16 %v3508
        %v4094 = vunpack.c.h.b16 %v3508
        %v4095 = vunpack.c.l.b16 %v3509
        %v4096 = vunpack.c.h.b16 %v3509
        %v4097 = vunpack.c.l.b16 %v3510
        %v4098 = vunpack.c.h.b16 %v3510
        %v4099 = vunpack.c.l.b16 %v3511
        %v4100 = vunpack.c.h.b16 %v3511
        %v4101 = vunpack.c.l.b16 %v3512
        %v4102 = vunpack.c.h.b16 %v3512
        %v4103 = vunpack.c.l.b16 %v3513
        %v4104 = vunpack.c.h.b16 %v3513
        %v4105 = vunpack.c.l.b16 %v3514
        %v4106 = vunpack.c.h.b16 %v3514
        %v4107 = vunpack.c.l.b16 %v3515
        %v4108 = vunpack.c.h.b16 %v3515
        %v4109 = vunpack.c.l.b16 %v3516
        %v4110 = vunpack.c.h.b16 %v3516
        %v4111 = vunpack.c.l.b16 %v3517
        %v4112 = vunpack.c.h.b16 %v3517
        %v4113 = vunpack.c.l.b16 %v3518
        %v4114 = vunpack.c.h.b16 %v3518
        %v4115 = vunpack.c.l.b16 %v3519
        %v4116 = vunpack.c.h.b16 %v3519
        %v4117 = vunpack.c.l.b16 %v3520
        %v4118 = vunpack.c.h.b16 %v3520
        %v4119 = vunpack.c.l.b16 %v3521
        %v4120 = vunpack.c.h.b16 %v3521
        %v4121 = vunpack.c.l.b16 %v3522
        %v4122 = vunpack.c.h.b16 %v3522
        %v4123 = vunpack.c.l.b16 %v3523
        %v4124 = vunpack.c.h.b16 %v3523
        %v4125 = vunpack.c.l.b16 %v3524
        %v4126 = vunpack.c.h.b16 %v3524
        %v4127 = vunpack.c.l.b16 %v3525
        %v4128 = vunpack.c.h.b16 %v3525
        %v4129 = vunpack.c.l.b16 %v3526
        %v4130 = vunpack.c.h.b16 %v3526
        %v4131 = vunpack.c.l.b16 %v3527
        %v4132 = vunpack.c.h.b16 %v3527
        %v4133 = vunpack.c.l.b16 %v3528
        %v4134 = vunpack.c.h.b16 %v3528
        %v4135 = vunpack.c.l.b16 %v3529
        %v4136 = vunpack.c.h.b16 %v3529
        %v4137 = vunpack.c.l.b16 %v3530
        %v4138 = vunpack.c.h.b16 %v3530
        %v4139 = vunpack.c.l.b16 %v3531
        %v4140 = vunpack.c.h.b16 %v3531
        %v4141 = vunpack.c.l.b16 %v3532
        %v4142 = vunpack.c.h.b16 %v3532
        %v4143 = vunpack.c.l.b16 %v3533
        %v4144 = vunpack.c.h.b16 %v3533
        %v4145 = vunpack.c.l.b16 %v3534
        %v4146 = vunpack.c.h.b16 %v3534
        %v4147 = vunpack.c.l.b16 %v3535
        %v4148 = vunpack.c.h.b16 %v3535
        %v4149 = vunpack.c.l.b16 %v3536
        %v4150 = vunpack.c.h.b16 %v3536
        %v4151 = vunpack.c.l.b16 %v3537
        %v4152 = vunpack.c.h.b16 %v3537
        %v4153 = vunpack.c.l.b16 %v3538
        %v4154 = vunpack.c.h.b16 %v3538
        %v4155 = vunpack.c.l.b16 %v3539
        %v4156 = vunpack.c.h.b16 %v3539
        %v4157 = vunpack.c.l.b16 %v3540
        %v4158 = vunpack.c.h.b16 %v3540
        %v4159 = vunpack.c.l.b16 %v3541
        %v4160 = vunpack.c.h.b16 %v3541
        %v4161 = vunpack.c.l.b16 %v3542
        %v4162 = vunpack.c.h.b16 %v3542
        %v4163 = vunpack.c.l.b16 %v3543
        %v4164 = vunpack.c.h.b16 %v3543
        %v4165 = vunpack.c.l.b16 %v3544
        %v4166 = vunpack.c.h.b16 %v3544
        %v4167 = vunpack.c.l.b16 %v3545
        %v4168 = vunpack.c.h.b16 %v3545
        %v4169 = vunpack.c.l.b16 %v3546
        %v4170 = vunpack.c.h.b16 %v3546
        %v4171 = vunpack.c.l.b16 %v3547
        %v4172 = vunpack.c.h.b16 %v3547
        %v4173 = vunpack.c.l.b16 %v3548
        %v4174 = vunpack.c.h.b16 %v3548
        %v4175 = vunpack.c.l.b16 %v3549
        %v4176 = vunpack.c.h.b16 %v3549
        %v4177 = vunpack.c.l.b16 %v3550
        %v4178 = vunpack.c.h.b16 %v3550
        %v4179 = vunpack.c.l.b16 %v3551
        %v4180 = vunpack.c.h.b16 %v3551
        %v4181 = vunpack.c.l.b16 %v3552
        %v4182 = vunpack.c.h.b16 %v3552
        %v4183 = vunpack.c.l.b16 %v3553
        %v4184 = vunpack.c.h.b16 %v3553
        %v4185 = vunpack.c.l.b16 %v3554
        %v4186 = vunpack.c.h.b16 %v3554
        %v4187 = vunpack.c.l.b16 %v3555
        %v4188 = vunpack.c.h.b16 %v3555
        %v4189 = vunpack.c.l.b16 %v3556
        %v4190 = vunpack.c.h.b16 %v3556
        %v4191 = vunpack.c.l.b16 %v3557
        %v4192 = vunpack.c.h.b16 %v3557
        %v4193 = vunpack.c.l.b16 %v3558
        %v4194 = vunpack.c.h.b16 %v3558
        %v4195 = vunpack.c.l.b16 %v3559
        %v4196 = vunpack.c.h.b16 %v3559
        %v4197 = vunpack.c.l.b16 %v3560
        %v4198 = vunpack.c.h.b16 %v3560
        %v4199 = vunpack.c.l.b16 %v3561
        %v4200 = vunpack.c.h.b16 %v3561
        %v4201 = vunpack.c.l.b16 %v3562
        %v4202 = vunpack.c.h.b16 %v3562
        %v4203 = vunpack.c.l.b16 %v3563
        %v4204 = vunpack.c.h.b16 %v3563
        %v4205 = vunpack.c.l.b16 %v3564
        %v4206 = vunpack.c.h.b16 %v3564
        %v4207 = vunpack.c.l.b16 %v3565
        %v4208 = vunpack.c.h.b16 %v3565
        %v4209 = vunpack.c.l.b16 %v3566
        %v4210 = vunpack.c.h.b16 %v3566
        %v4211 = vunpack.c.l.b16 %v3567
        %v4212 = vunpack.c.h.b16 %v3567
        %v4213 = vunpack.c.l.b16 %v3568
        %v4214 = vunpack.c.h.b16 %v3568
        %v4215 = vunpack.c.l.b16 %v3569
        %v4216 = vunpack.c.h.b16 %v3569
        %v4217 = vunpack.c.l.b16 %v3570
        %v4218 = vunpack.c.h.b16 %v3570
        %v4219 = vunpack.c.l.b16 %v3571
        %v4220 = vunpack.c.h.b16 %v3571
        %v4221 = vunpack.c.l.b16 %v3572
        %v4222 = vunpack.c.h.b16 %v3572
        %v4223 = vunpack.c.l.b16 %v3573
        %v4224 = vunpack.c.h.b16 %v3573
        %v4225 = vunpack.c.l.b16 %v3574
        %v4226 = vunpack.c.h.b16 %v3574
        %v4227 = vunpack.c.l.b16 %v3575
        %v4228 = vunpack.c.h.b16 %v3575
        %v4229 = vunpack.c.l.b16 %v3576
        %v4230 = vunpack.c.h.b16 %v3576
        %v4231 = vunpack.c.l.b16 %v3577
        %v4232 = vunpack.c.h.b16 %v3577
        %v4233 = vunpack.c.l.b16 %v3578
        %v4234 = vunpack.c.h.b16 %v3578
        %v4235 = vunpack.c.l.b16 %v3579
        %v4236 = vunpack.c.h.b16 %v3579
        %v4237 = vunpack.c.l.b16 %v3580
        %v4238 = vunpack.c.h.b16 %v3580
        %v4239 = vunpack.c.l.b16 %v3581
        %v4240 = vunpack.c.h.b16 %v3581
        %v4241 = vunpack.c.l.b16 %v3582
        %v4242 = vunpack.c.h.b16 %v3582
        %v4243 = vunpack.c.l.b16 %v3583
        %v4244 = vunpack.c.h.b16 %v3583
        %v4245 = vunpack.c.l.b16 %v3584
        %v4246 = vunpack.c.h.b16 %v3584
        %v4247 = vunpack.c.l.b16 %v3585
        %v4248 = vunpack.c.h.b16 %v3585
        %v4249 = vunpack.c.l.b16 %v3586
        %v4250 = vunpack.c.h.b16 %v3586
        %v4251 = vunpack.c.l.b16 %v3587
        %v4252 = vunpack.c.h.b16 %v3587
        %v4253 = vunpack.c.l.b16 %v3588
        %v4254 = vunpack.c.h.b16 %v3588
        %v4255 = vunpack.c.l.b16 %v3589
        %v4256 = vunpack.c.h.b16 %v3589
        %v4257 = vunpack.c.l.b16 %v3590
        %v4258 = vunpack.c.h.b16 %v3590
        %v4259 = vunpack.c.l.b16 %v3591
        %v4260 = vunpack.c.h.b16 %v3591
        %v4261 = vunpack.c.l.b16 %v3592
        %v4262 = vunpack.c.h.b16 %v3592
        %v4263 = vunpack.c.l.b16 %v3593
        %v4264 = vunpack.c.h.b16 %v3593
        %v4265 = vunpack.c.l.b16 %v3594
        %v4266 = vunpack.c.h.b16 %v3594
        %v4267 = vunpack.c.l.b16 %v3595
        %v4268 = vunpack.c.h.b16 %v3595
        %v4269 = vunpack.c.l.b16 %v3596
        %v4270 = vunpack.c.h.b16 %v3596
        %v4271 = vunpack.c.l.b16 %v3597
        %v4272 = vunpack.c.h.b16 %v3597
        %v4273 = vunpack.c.l.b16 %v3598
        %v4274 = vunpack.c.h.b16 %v3598
        %v4275 = vunpack.c.l.b16 %v3599
        %v4276 = vunpack.c.h.b16 %v3599
        %v4277 = vunpack.c.l.b16 %v3600
        %v4278 = vunpack.c.h.b16 %v3600
        %v4279 = vunpack.c.l.b16 %v3601
        %v4280 = vunpack.c.h.b16 %v3601
        %v4281 = vunpack.c.l.b16 %v3602
        %v4282 = vunpack.c.h.b16 %v3602
        %v4283 = vunpack.c.l.b16 %v3603
        %v4284 = vunpack.c.h.b16 %v3603
        %v4285 = vunpack.c.l.b16 %v3604
        %v4286 = vunpack.c.h.b16 %v3604
        %v4287 = vunpack.c.l.b16 %v3605
        %v4288 = vunpack.c.h.b16 %v3605
        %v4289 = vunpack.c.l.b16 %v3606
        %v4290 = vunpack.c.h.b16 %v3606
        %v4291 = vunpack.c.l.b16 %v3607
        %v4292 = vunpack.c.h.b16 %v3607
        %v4293 = vunpack.c.l.b16 %v3608
        %v4294 = vunpack.c.h.b16 %v3608
        %v4295 = vunpack.c.l.b16 %v3609
        %v4296 = vunpack.c.h.b16 %v3609
        %v4297 = vunpack.c.l.b16 %v3610
        %v4298 = vunpack.c.h.b16 %v3610
        %v4299 = vunpack.c.l.b16 %v3611
        %v4300 = vunpack.c.h.b16 %v3611
        %v4301 = vunpack.c.l.b16 %v3612
        %v4302 = vunpack.c.h.b16 %v3612
        %v4303 = vunpack.c.l.b16 %v3613
        %v4304 = vunpack.c.h.b16 %v3613
        %v4305 = vunpack.c.l.b16 %v3614
        %v4306 = vunpack.c.h.b16 %v3614
        %v4307 = vunpack.c.l.b16 %v3615
        %v4308 = vunpack.c.h.b16 %v3615
        %v4309 = vunpack.c.l.b16 %v3616
        %v4310 = vunpack.c.h.b16 %v3616
        %v4311 = vunpack.c.l.b16 %v3617
        %v4312 = vunpack.c.h.b16 %v3617
        %v4313 = vunpack.c.l.b16 %v3618
        %v4314 = vunpack.c.h.b16 %v3618
        %v4315 = vunpack.c.l.b16 %v3619
        %v4316 = vunpack.c.h.b16 %v3619
        %v4317 = vunpack.c.l.b16 %v3620
        %v4318 = vunpack.c.h.b16 %v3620
        %v4319 = vunpack.c.l.b16 %v3621
        %v4320 = vunpack.c.h.b16 %v3621
        %v4321 = vunpack.c.l.b16 %v3622
        %v4322 = vunpack.c.h.b16 %v3622
        %v4323 = vunpack.c.l.b16 %v3623
        %v4324 = vunpack.c.h.b16 %v3623
        %v4325 = vunpack.c.l.b16 %v3624
        %v4326 = vunpack.c.h.b16 %v3624
        %v4327 = vunpack.c.l.b16 %v3625
        %v4328 = vunpack.c.h.b16 %v3625
        %v4329 = vunpack.c.l.b16 %v3626
        %v4330 = vunpack.c.h.b16 %v3626
        %v4331 = vunpack.c.l.b16 %v3627
        %v4332 = vunpack.c.h.b16 %v3627
        %v4333 = vunpack.c.l.b16 %v3628
        %v4334 = vunpack.c.h.b16 %v3628
        %v4335 = vunpack.c.l.b16 %v3629
        %v4336 = vunpack.c.h.b16 %v3629
        %v4337 = vunpack.c.l.b16 %v3630
        %v4338 = vunpack.c.h.b16 %v3630
        %v4339 = vunpack.c.l.b16 %v3631
        %v4340 = vunpack.c.h.b16 %v3631
        %v4341 = vunpack.c.l.b16 %v3632
        %v4342 = vunpack.c.h.b16 %v3632
        %v4343 = vunpack.c.l.b16 %v3633
        %v4344 = vunpack.c.h.b16 %v3633
        %v4345 = vunpack.c.l.b16 %v3634
        %v4346 = vunpack.c.h.b16 %v3634
        %v4347 = vunpack.c.l.b16 %v3635
        %v4348 = vunpack.c.h.b16 %v3635
        %v4349 = vunpack.c.l.b16 %v3636
        %v4350 = vunpack.c.h.b16 %v3636
        %v4351 = vunpack.c.l.b16 %v3637
        %v4352 = vunpack.c.h.b16 %v3637
        %v4353 = vunpack.c.l.b16 %v3638
        %v4354 = vunpack.c.h.b16 %v3638
        %v4355 = vunpack.c.l.b16 %v3639
        %v4356 = vunpack.c.h.b16 %v3639
        %v4357 = vunpack.c.l.b16 %v3640
        %v4358 = vunpack.c.h.b16 %v3640
        %v4359 = vunpack.c.l.b16 %v3641
        %v4360 = vunpack.c.h.b16 %v3641
        %v4361 = vunpack.c.l.b16 %v3642
        %v4362 = vunpack.c.h.b16 %v3642
        %v4363 = vunpack.c.l.b16 %v3643
        %v4364 = vunpack.c.h.b16 %v3643
        %v4365 = vunpack.c.l.b16 %v3644
        %v4366 = vunpack.c.h.b16 %v3644
        %v4367 = vunpack.c.l.b16 %v3645
        %v4368 = vunpack.c.h.b16 %v3645
        %v4369 = vunpack.c.l.b16 %v3646
        %v4370 = vunpack.c.h.b16 %v3646
        %v4371 = vunpack.c.l.b16 %v3647
        %v4372 = vunpack.c.h.b16 %v3647
        %v4373 = vunpack.c.l.b16 %v3648
        %v4374 = vunpack.c.h.b16 %v3648
        %v4375 = vunpack.c.l.b16 %v3649
        %v4376 = vunpack.c.h.b16 %v3649
        %v4377 = vunpack.c.l.b16 %v3650
        %v4378 = vunpack.c.h.b16 %v3650
        %v4379 = vunpack.c.l.b16 %v3651
        %v4380 = vunpack.c.h.b16 %v3651
        %v4381 = vunpack.c.l.b16 %v3652
        %v4382 = vunpack.c.h.b16 %v3652
        %v4383 = vunpack.c.l.b16 %v3653
        %v4384 = vunpack.c.h.b16 %v3653
        %v4385 = vunpack.c.l.b16 %v3654
        %v4386 = vunpack.c.h.b16 %v3654
        %v4387 = vunpack.c.l.b16 %v3655
        %v4388 = vunpack.c.h.b16 %v3655
        %v4389 = vunpack.c.l.b16 %v3656
        %v4390 = vunpack.c.h.b16 %v3656
        %v4391 = vunpack.c.l.b16 %v3657
        %v4392 = vunpack.c.h.b16 %v3657
        %v4393 = vunpack.c.l.b16 %v3658
        %v4394 = vunpack.c.h.b16 %v3658
        %v4395 = vunpack.c.l.b16 %v3659
        %v4396 = vunpack.c.h.b16 %v3659
        %v4397 = vunpack.c.l.b16 %v3660
        %v4398 = vunpack.c.h.b16 %v3660
        %v4399 = vunpack.c.l.b16 %v3661
        %v4400 = vunpack.c.h.b16 %v3661
        %v4401 = vunpack.c.l.b16 %v3662
        %v4402 = vunpack.c.h.b16 %v3662
        %v4403 = vunpack.c.l.b16 %v3663
        %v4404 = vunpack.c.h.b16 %v3663
        %v4405 = vunpack.c.l.b16 %v3664
        %v4406 = vunpack.c.h.b16 %v3664
        %v4407 = vunpack.c.l.b16 %v3665
        %v4408 = vunpack.c.h.b16 %v3665
        %v4409 = vunpack.c.l.b16 %v3666
        %v4410 = vunpack.c.h.b16 %v3666
        %v4411 = vunpack.c.l.b16 %v3667
        %v4412 = vunpack.c.h.b16 %v3667
        %v4413 = vunpack.c.l.b16 %v3668
        %v4414 = vunpack.c.h.b16 %v3668
        %v4415 = vunpack.c.l.b16 %v3669
        %v4416 = vunpack.c.h.b16 %v3669
        %v4417 = vunpack.c.l.b16 %v3670
        %v4418 = vunpack.c.h.b16 %v3670
        %v4419 = vunpack.c.l.b16 %v3671
        %v4420 = vunpack.c.h.b16 %v3671
        %v4421 = vunpack.c.l.b16 %v3672
        %v4422 = vunpack.c.h.b16 %v3672
        %v4423 = vunpack.c.l.b16 %v3673
        %v4424 = vunpack.c.h.b16 %v3673
        %v4425 = vunpack.c.l.b16 %v3674
        %v4426 = vunpack.c.h.b16 %v3674
        %v4427 = vunpack.c.l.b16 %v3675
        %v4428 = vunpack.c.h.b16 %v3675
        %v4429 = vunpack.c.l.b16 %v3676
        %v4430 = vunpack.c.h.b16 %v3676
        %v4431 = vunpack.c.l.b16 %v3677
        %v4432 = vunpack.c.h.b16 %v3677
        %v4433 = vunpack.c.l.b16 %v3678
        %v4434 = vunpack.c.h.b16 %v3678
        %v4435 = vunpack.c.l.b16 %v3679
        %v4436 = vunpack.c.h.b16 %v3679
        %v4437 = vunpack.c.l.b16 %v3680
        %v4438 = vunpack.c.h.b16 %v3680
        %v4439 = vunpack.c.l.b16 %v3681
        %v4440 = vunpack.c.h.b16 %v3681
        %v4441 = vunpack.c.l.b16 %v3682
        %v4442 = vunpack.c.h.b16 %v3682
        %v4443 = vunpack.c.l.b16 %v3683
        %v4444 = vunpack.c.h.b16 %v3683
        %v4445 = vunpack.c.l.b16 %v3684
        %v4446 = vunpack.c.h.b16 %v3684
        %v4447 = vunpack.c.l.b16 %v3685
        %v4448 = vunpack.c.h.b16 %v3685
        %v4449 = vunpack.c.l.b16 %v3686
        %v4450 = vunpack.c.h.b16 %v3686
        %v4451 = vunpack.c.l.b16 %v3687
        %v4452 = vunpack.c.h.b16 %v3687
        %v4453 = vunpack.c.l.b16 %v3688
        %v4454 = vunpack.c.h.b16 %v3688
        %v4455 = vunpack.c.l.b16 %v3689
        %v4456 = vunpack.c.h.b16 %v3689
        %v4457 = vunpack.c.l.b16 %v3690
        %v4458 = vunpack.c.h.b16 %v3690
        %v4459 = vpack.c.b16 %v3951, %v3947
        %v4460 = vpack.c.b16 %v3952, %v3948
        %v4461 = vpack.c.b16 %v3953, %v3949
        %v4462 = vpack.c.b16 %v3954, %v3950
        %v4463 = vpack.c.b16 %v3959, %v3955
        %v4464 = vpack.c.b16 %v3960, %v3956
        %v4465 = vpack.c.b16 %v3961, %v3957
        %v4466 = vpack.c.b16 %v3962, %v3958
        %v4467 = vpack.c.b16 %v3967, %v3963
        %v4468 = vpack.c.b16 %v3968, %v3964
        %v4469 = vpack.c.b16 %v3969, %v3965
        %v4470 = vpack.c.b16 %v3970, %v3966
        %v4471 = vpack.c.b16 %v3975, %v3971
        %v4472 = vpack.c.b16 %v3976, %v3972
        %v4473 = vpack.c.b16 %v3977, %v3973
        %v4474 = vpack.c.b16 %v3978, %v3974
        %v4475 = vpack.c.b16 %v3983, %v3979
        %v4476 = vpack.c.b16 %v3984, %v3980
        %v4477 = vpack.c.b16 %v3985, %v3981
        %v4478 = vpack.c.b16 %v3986, %v3982
        %v4479 = vpack.c.b16 %v3991, %v3987
        %v4480 = vpack.c.b16 %v3992, %v3988
        %v4481 = vpack.c.b16 %v3993, %v3989
        %v4482 = vpack.c.b16 %v3994, %v3990
        %v4483 = vpack.c.b16 %v3999, %v3995
        %v4484 = vpack.c.b16 %v4000, %v3996
        %v4485 = vpack.c.b16 %v4001, %v3997
        %v4486 = vpack.c.b16 %v4002, %v3998
        %v4487 = vpack.c.b16 %v4007, %v4003
        %v4488 = vpack.c.b16 %v4008, %v4004
        %v4489 = vpack.c.b16 %v4009, %v4005
        %v4490 = vpack.c.b16 %v4010, %v4006
        %v4491 = vpack.c.b16 %v4015, %v4011
        %v4492 = vpack.c.b16 %v4016, %v4012
        %v4493 = vpack.c.b16 %v4017, %v4013
        %v4494 = vpack.c.b16 %v4018, %v4014
        %v4495 = vpack.c.b16 %v4023, %v4019
        %v4496 = vpack.c.b16 %v4024, %v4020
        %v4497 = vpack.c.b16 %v4025, %v4021
        %v4498 = vpack.c.b16 %v4026, %v4022
        %v4499 = vpack.c.b16 %v4031, %v4027
        %v4500 = vpack.c.b16 %v4032, %v4028
        %v4501 = vpack.c.b16 %v4033, %v4029
        %v4502 = vpack.c.b16 %v4034, %v4030
        %v4503 = vpack.c.b16 %v4039, %v4035
        %v4504 = vpack.c.b16 %v4040, %v4036
        %v4505 = vpack.c.b16 %v4041, %v4037
        %v4506 = vpack.c.b16 %v4042, %v4038
        %v4507 = vpack.c.b16 %v4047, %v4043
        %v4508 = vpack.c.b16 %v4048, %v4044
        %v4509 = vpack.c.b16 %v4049, %v4045
        %v4510 = vpack.c.b16 %v4050, %v4046
        %v4511 = vpack.c.b16 %v4055, %v4051
        %v4512 = vpack.c.b16 %v4056, %v4052
        %v4513 = vpack.c.b16 %v4057, %v4053
        %v4514 = vpack.c.b16 %v4058, %v4054
        %v4515 = vpack.c.b16 %v4063, %v4059
        %v4516 = vpack.c.b16 %v4064, %v4060
        %v4517 = vpack.c.b16 %v4065, %v4061
        %v4518 = vpack.c.b16 %v4066, %v4062
        %v4519 = vpack.c.b16 %v4071, %v4067
        %v4520 = vpack.c.b16 %v4072, %v4068
        %v4521 = vpack.c.b16 %v4073, %v4069
        %v4522 = vpack.c.b16 %v4074, %v4070
        %v4523 = vpack.c.b16 %v4079, %v4075
        %v4524 = vpack.c.b16 %v4080, %v4076
        %v4525 = vpack.c.b16 %v4081, %v4077
        %v4526 = vpack.c.b16 %v4082, %v4078
        %v4527 = vpack.c.b16 %v4087, %v4083
        %v4528 = vpack.c.b16 %v4088, %v4084
        %v4529 = vpack.c.b16 %v4089, %v4085
        %v4530 = vpack.c.b16 %v4090, %v4086
        %v4531 = vpack.c.b16 %v4095, %v4091
        %v4532 = vpack.c.b16 %v4096, %v4092
        %v4533 = vpack.c.b16 %v4097, %v4093
        %v4534 = vpack.c.b16 %v4098, %v4094
        %v4535 = vpack.c.b16 %v4103, %v4099
        %v4536 = vpack.c.b16 %v4104, %v4100
        %v4537 = vpack.c.b16 %v4105, %v4101
        %v4538 = vpack.c.b16 %v4106, %v4102
        %v4539 = vpack.c.b16 %v4111, %v4107
        %v4540 = vpack.c.b16 %v4112, %v4108
        %v4541 = vpack.c.b16 %v4113, %v4109
        %v4542 = vpack.c.b16 %v4114, %v4110
        %v4543 = vpack.c.b16 %v4119, %v4115
        %v4544 = vpack.c.b16 %v4120, %v4116
        %v4545 = vpack.c.b16 %v4121, %v4117
        %v4546 = vpack.c.b16 %v4122, %v4118
        %v4547 = vpack.c.b16 %v4127, %v4123
        %v4548 = vpack.c.b16 %v4128, %v4124
        %v4549 = vpack.c.b16 %v4129, %v4125
        %v4550 = vpack.c.b16 %v4130, %v4126
        %v4551 = vpack.c.b16 %v4135, %v4131
        %v4552 = vpack.c.b16 %v4136, %v4132
        %v4553 = vpack.c.b16 %v4137, %v4133
        %v4554 = vpack.c.b16 %v4138, %v4134
        %v4555 = vpack.c.b16 %v4143, %v4139
        %v4556 = vpack.c.b16 %v4144, %v4140
        %v4557 = vpack.c.b16 %v4145, %v4141
        %v4558 = vpack.c.b16 %v4146, %v4142
        %v4559 = vpack.c.b16 %v4151, %v4147
        %v4560 = vpack.c.b16 %v4152, %v4148
        %v4561 = vpack.c.b16 %v4153, %v4149
        %v4562 = vpack.c.b16 %v4154, %v4150
        %v4563 = vpack.c.b16 %v4159, %v4155
        %v4564 = vpack.c.b16 %v4160, %v4156
        %v4565 = vpack.c.b16 %v4161, %v4157
        %v4566 = vpack.c.b16 %v4162, %v4158
        %v4567 = vpack.c.b16 %v4167, %v4163
        %v4568 = vpack.c.b16 %v4168, %v4164
        %v4569 = vpack.c.b16 %v4169, %v4165
        %v4570 = vpack.c.b16 %v4170, %v4166
        %v4571 = vpack.c.b16 %v4175, %v4171
        %v4572 = vpack.c.b16 %v4176, %v4172
        %v4573 = vpack.c.b16 %v4177, %v4173
        %v4574 = vpack.c.b16 %v4178, %v4174
        %v4575 = vpack.c.b16 %v4183, %v4179
        %v4576 = vpack.c.b16 %v4184, %v4180
        %v4577 = vpack.c.b16 %v4185, %v4181
        %v4578 = vpack.c.b16 %v4186, %v4182
        %v4579 = vpack.c.b16 %v4191, %v4187
        %v4580 = vpack.c.b16 %v4192, %v4188
        %v4581 = vpack.c.b16 %v4193, %v4189
        %v4582 = vpack.c.b16 %v4194, %v4190
        %v4583 = vpack.c.b16 %v4199, %v4195
        %v4584 = vpack.c.b16 %v4200, %v4196
        %v4585 = vpack.c.b16 %v4201, %v4197
        %v4586 = vpack.c.b16 %v4202, %v4198
        %v4587 = vpack.c.b16 %v4207, %v4203
        %v4588 = vpack.c.b16 %v4208, %v4204
        %v4589 = vpack.c.b16 %v4209, %v4205
        %v4590 = vpack.c.b16 %v4210, %v4206
        %v4591 = vpack.c.b16 %v4215, %v4211
        %v4592 = vpack.c.b16 %v4216, %v4212
        %v4593 = vpack.c.b16 %v4217, %v4213
        %v4594 = vpack.c.b16 %v4218, %v4214
        %v4595 = vpack.c.b16 %v4223, %v4219
        %v4596 = vpack.c.b16 %v4224, %v4220
        %v4597 = vpack.c.b16 %v4225, %v4221
        %v4598 = vpack.c.b16 %v4226, %v4222
        %v4599 = vpack.c.b16 %v4231, %v4227
        %v4600 = vpack.c.b16 %v4232, %v4228
        %v4601 = vpack.c.b16 %v4233, %v4229
        %v4602 = vpack.c.b16 %v4234, %v4230
        %v4603 = vpack.c.b16 %v4239, %v4235
        %v4604 = vpack.c.b16 %v4240, %v4236
        %v4605 = vpack.c.b16 %v4241, %v4237
        %v4606 = vpack.c.b16 %v4242, %v4238
        %v4607 = vpack.c.b16 %v4247, %v4243
        %v4608 = vpack.c.b16 %v4248, %v4244
        %v4609 = vpack.c.b16 %v4249, %v4245
        %v4610 = vpack.c.b16 %v4250, %v4246
        %v4611 = vpack.c.b16 %v4255, %v4251
        %v4612 = vpack.c.b16 %v4256, %v4252
        %v4613 = vpack.c.b16 %v4257, %v4253
        %v4614 = vpack.c.b16 %v4258, %v4254
        %v4615 = vpack.c.b16 %v4263, %v4259
        %v4616 = vpack.c.b16 %v4264, %v4260
        %v4617 = vpack.c.b16 %v4265, %v4261
        %v4618 = vpack.c.b16 %v4266, %v4262
        %v4619 = vpack.c.b16 %v4271, %v4267
        %v4620 = vpack.c.b16 %v4272, %v4268
        %v4621 = vpack.c.b16 %v4273, %v4269
        %v4622 = vpack.c.b16 %v4274, %v4270
        %v4623 = vpack.c.b16 %v4279, %v4275
        %v4624 = vpack.c.b16 %v4280, %v4276
        %v4625 = vpack.c.b16 %v4281, %v4277
        %v4626 = vpack.c.b16 %v4282, %v4278
        %v4627 = vpack.c.b16 %v4287, %v4283
        %v4628 = vpack.c.b16 %v4288, %v4284
        %v4629 = vpack.c.b16 %v4289, %v4285
        %v4630 = vpack.c.b16 %v4290, %v4286
        %v4631 = vpack.c.b16 %v4295, %v4291
        %v4632 = vpack.c.b16 %v4296, %v4292
        %v4633 = vpack.c.b16 %v4297, %v4293
        %v4634 = vpack.c.b16 %v4298, %v4294
        %v4635 = vpack.c.b16 %v4303, %v4299
        %v4636 = vpack.c.b16 %v4304, %v4300
        %v4637 = vpack.c.b16 %v4305, %v4301
        %v4638 = vpack.c.b16 %v4306, %v4302
        %v4639 = vpack.c.b16 %v4311, %v4307
        %v4640 = vpack.c.b16 %v4312, %v4308
        %v4641 = vpack.c.b16 %v4313, %v4309
        %v4642 = vpack.c.b16 %v4314, %v4310
        %v4643 = vpack.c.b16 %v4319, %v4315
        %v4644 = vpack.c.b16 %v4320, %v4316
        %v4645 = vpack.c.b16 %v4321, %v4317
        %v4646 = vpack.c.b16 %v4322, %v4318
        %v4647 = vpack.c.b16 %v4327, %v4323
        %v4648 = vpack.c.b16 %v4328, %v4324
        %v4649 = vpack.c.b16 %v4329, %v4325
        %v4650 = vpack.c.b16 %v4330, %v4326
        %v4651 = vpack.c.b16 %v4335, %v4331
        %v4652 = vpack.c.b16 %v4336, %v4332
        %v4653 = vpack.c.b16 %v4337, %v4333
        %v4654 = vpack.c.b16 %v4338, %v4334
        %v4655 = vpack.c.b16 %v4343, %v4339
        %v4656 = vpack.c.b16 %v4344, %v4340
        %v4657 = vpack.c.b16 %v4345, %v4341
        %v4658 = vpack.c.b16 %v4346, %v4342
        %v4659 = vpack.c.b16 %v4351, %v4347
        %v4660 = vpack.c.b16 %v4352, %v4348
        %v4661 = vpack.c.b16 %v4353, %v4349
        %v4662 = vpack.c.b16 %v4354, %v4350
        %v4663 = vpack.c.b16 %v4359, %v4355
        %v4664 = vpack.c.b16 %v4360, %v4356
        %v4665 = vpack.c.b16 %v4361, %v4357
        %v4666 = vpack.c.b16 %v4362, %v4358
        %v4667 = vpack.c.b16 %v4367, %v4363
        %v4668 = vpack.c.b16 %v4368, %v4364
        %v4669 = vpack.c.b16 %v4369, %v4365
        %v4670 = vpack.c.b16 %v4370, %v4366
        %v4671 = vpack.c.b16 %v4375, %v4371
        %v4672 = vpack.c.b16 %v4376, %v4372
        %v4673 = vpack.c.b16 %v4377, %v4373
        %v4674 = vpack.c.b16 %v4378, %v4374
        %v4675 = vpack.c.b16 %v4383, %v4379
        %v4676 = vpack.c.b16 %v4384, %v4380
        %v4677 = vpack.c.b16 %v4385, %v4381
        %v4678 = vpack.c.b16 %v4386, %v4382
        %v4679 = vpack.c.b16 %v4391, %v4387
        %v4680 = vpack.c.b16 %v4392, %v4388
        %v4681 = vpack.c.b16 %v4393, %v4389
        %v4682 = vpack.c.b16 %v4394, %v4390
        %v4683 = vpack.c.b16 %v4399, %v4395
        %v4684 = vpack.c.b16 %v4400, %v4396
        %v4685 = vpack.c.b16 %v4401, %v4397
        %v4686 = vpack.c.b16 %v4402, %v4398
        %v4687 = vpack.c.b16 %v4407, %v4403
        %v4688 = vpack.c.b16 %v4408, %v4404
        %v4689 = vpack.c.b16 %v4409, %v4405
        %v4690 = vpack.c.b16 %v4410, %v4406
        %v4691 = vpack.c.b16 %v4415, %v4411
        %v4692 = vpack.c.b16 %v4416, %v4412
        %v4693 = vpack.c.b16 %v4417, %v4413
        %v4694 = vpack.c.b16 %v4418, %v4414
        %v4695 = vpack.c.b16 %v4423, %v4419
        %v4696 = vpack.c.b16 %v4424, %v4420
        %v4697 = vpack.c.b16 %v4425, %v4421
        %v4698 = vpack.c.b16 %v4426, %v4422
        %v4699 = vpack.c.b16 %v4431, %v4427
        %v4700 = vpack.c.b16 %v4432, %v4428
        %v4701 = vpack.c.b16 %v4433, %v4429
        %v4702 = vpack.c.b16 %v4434, %v4430
        %v4703 = vpack.c.b16 %v4439, %v4435
        %v4704 = vpack.c.b16 %v4440, %v4436
        %v4705 = vpack.c.b16 %v4441, %v4437
        %v4706 = vpack.c.b16 %v4442, %v4438
        %v4707 = vpack.c.b16 %v4447, %v4443
        %v4708 = vpack.c.b16 %v4448, %v4444
        %v4709 = vpack.c.b16 %v4449, %v4445
        %v4710 = vpack.c.b16 %v4450, %v4446
        %v4711 = vpack.c.b16 %v4455, %v4451
        %v4712 = vpack.c.b16 %v4456, %v4452
        %v4713 = vpack.c.b16 %v4457, %v4453
        %v4714 = vpack.c.b16 %v4458, %v4454
        %4971 = vmatprep.subr.bf16.mxu0 %v4460
        %4972 = vmatpush1.bf16.msra.mxu0 %v4459
        %4973 = vmatprep.subr.bf16.mxu0 %v4464
        %4974 = vmatpush1.bf16.msra.mxu0 %v4463
        %4975 = vmatprep.subr.bf16.mxu0 %v4468
        %4976 = vmatpush1.bf16.msra.mxu0 %v4467
        %4977 = vmatprep.subr.bf16.mxu0 %v4472
        %4978 = vmatpush1.bf16.msra.mxu0 %v4471
        %4979 = vmatprep.subr.bf16.mxu0 %v4476
        %4980 = vmatpush1.bf16.msra.mxu0 %v4475
        %4981 = vmatprep.subr.bf16.mxu0 %v4480
        %4982 = vmatpush1.bf16.msra.mxu0 %v4479
        %4983 = vmatprep.subr.bf16.mxu0 %v4484
        %4984 = vmatpush1.bf16.msra.mxu0 %v4483
        %4985 = vmatprep.subr.bf16.mxu0 %v4488
        %4986 = vmatpush1.bf16.msra.mxu0 %v4487
        %4987 = vmatprep.subr.bf16.mxu0 %v4492
        %4988 = vmatpush1.bf16.msra.mxu0 %v4491
        %4989 = vmatprep.subr.bf16.mxu0 %v4496
        %4990 = vmatpush1.bf16.msra.mxu0 %v4495
        %4991 = vmatprep.subr.bf16.mxu0 %v4500
        %4992 = vmatpush1.bf16.msra.mxu0 %v4499
        %4993 = vmatprep.subr.bf16.mxu0 %v4504
        %4994 = vmatpush1.bf16.msra.mxu0 %v4503
        %4995 = vmatprep.subr.bf16.mxu0 %v4508
        %4996 = vmatpush1.bf16.msra.mxu0 %v4507
        %4997 = vmatprep.subr.bf16.mxu0 %v4512
        %4998 = vmatpush1.bf16.msra.mxu0 %v4511
        %4999 = vmatprep.subr.bf16.mxu0 %v4516
        %5000 = vmatpush1.bf16.msra.mxu0 %v4515
        %5001 = vmatprep.subr.bf16.mxu0 %v4520
        %5002 = vmatpush1.bf16.msra.mxu0 %v4519
        %5003 = vmatprep.mubr.bf16.mxu0 %v3428
        %5004 = vmatmul.mubr.bf16.gmra.mrb[0].mxu0 %v3427
        %v5005 = vpop.f32.mrb[0].mxu0
        %v5006 = vadd.f32 0.0, %v5005
        %v5007 = vpop.f32.mrb[0].mxu0
        %v5008 = vadd.f32 0.0, %v5007
        %v5009 = vpop.f32.mrb[0].mxu0
        %v5010 = vadd.f32 0.0, %v5009
        %v5011 = vpop.f32.mrb[0].mxu0
        %v5012 = vadd.f32 0.0, %v5011
        %5013 = vdwg.mxu0
        %5014 = vmatprep.subr.bf16.mxu0 %v4524
        %5015 = vmatpush1.bf16.msra.mxu0 %v4523
        %5016 = vmatprep.subr.bf16.mxu0 %v4528
        %5017 = vmatpush1.bf16.msra.mxu0 %v4527
        %5018 = vmatprep.subr.bf16.mxu0 %v4532
        %5019 = vmatpush1.bf16.msra.mxu0 %v4531
        %5020 = vmatprep.subr.bf16.mxu0 %v4536
        %5021 = vmatpush1.bf16.msra.mxu0 %v4535
        %5022 = vmatprep.subr.bf16.mxu0 %v4540
        %5023 = vmatpush1.bf16.msra.mxu0 %v4539
        %5024 = vmatprep.subr.bf16.mxu0 %v4544
        %5025 = vmatpush1.bf16.msra.mxu0 %v4543
        %5026 = vmatprep.subr.bf16.mxu0 %v4548
        %5027 = vmatpush1.bf16.msra.mxu0 %v4547
        %5028 = vmatprep.subr.bf16.mxu0 %v4552
        %5029 = vmatpush1.bf16.msra.mxu0 %v4551
        %5030 = vmatprep.subr.bf16.mxu0 %v4556
        %5031 = vmatpush1.bf16.msra.mxu0 %v4555
        %5032 = vmatprep.subr.bf16.mxu0 %v4560
        %5033 = vmatpush1.bf16.msra.mxu0 %v4559
        %5034 = vmatprep.subr.bf16.mxu0 %v4564
        %5035 = vmatpush1.bf16.msra.mxu0 %v4563
        %5036 = vmatprep.subr.bf16.mxu0 %v4568
        %5037 = vmatpush1.bf16.msra.mxu0 %v4567
        %5038 = vmatprep.subr.bf16.mxu0 %v4572
        %5039 = vmatpush1.bf16.msra.mxu0 %v4571
        %5040 = vmatprep.subr.bf16.mxu0 %v4576
        %5041 = vmatpush1.bf16.msra.mxu0 %v4575
        %5042 = vmatprep.subr.bf16.mxu0 %v4580
        %5043 = vmatpush1.bf16.msra.mxu0 %v4579
        %5044 = vmatprep.subr.bf16.mxu0 %v4584
        %5045 = vmatpush1.bf16.msra.mxu0 %v4583
        %5046 = vmatprep.mubr.bf16.mxu0 %v3430
        %5047 = vmatmul.mubr.bf16.gmra.mrb[0].mxu0 %v3429
        %v5048 = vpop.f32.mrb[0].mxu0
        %v5049 = vadd.f32 %v5006, %v5048
        %v5050 = vpop.f32.mrb[0].mxu0
        %v5051 = vadd.f32 %v5008, %v5050
        %v5052 = vpop.f32.mrb[0].mxu0
        %v5053 = vadd.f32 %v5010, %v5052
        %v5054 = vpop.f32.mrb[0].mxu0
        %v5055 = vadd.f32 %v5012, %v5054
        %5056 = vdwg.mxu0
        %5057 = vmatprep.subr.bf16.mxu0 %v4588
        %5058 = vmatpush1.bf16.msra.mxu0 %v4587
        %5059 = vmatprep.subr.bf16.mxu0 %v4592
        %5060 = vmatpush1.bf16.msra.mxu0 %v4591
        %5061 = vmatprep.subr.bf16.mxu0 %v4596
        %5062 = vmatpush1.bf16.msra.mxu0 %v4595
        %5063 = vmatprep.subr.bf16.mxu0 %v4600
        %5064 = vmatpush1.bf16.msra.mxu0 %v4599
        %5065 = vmatprep.subr.bf16.mxu0 %v4604
        %5066 = vmatpush1.bf16.msra.mxu0 %v4603
        %5067 = vmatprep.subr.bf16.mxu0 %v4608
        %5068 = vmatpush1.bf16.msra.mxu0 %v4607
        %5069 = vmatprep.subr.bf16.mxu0 %v4612
        %5070 = vmatpush1.bf16.msra.mxu0 %v4611
        %5071 = vmatprep.subr.bf16.mxu0 %v4616
        %5072 = vmatpush1.bf16.msra.mxu0 %v4615
        %5073 = vmatprep.subr.bf16.mxu0 %v4620
        %5074 = vmatpush1.bf16.msra.mxu0 %v4619
        %5075 = vmatprep.subr.bf16.mxu0 %v4624
        %5076 = vmatpush1.bf16.msra.mxu0 %v4623
        %5077 = vmatprep.subr.bf16.mxu0 %v4628
        %5078 = vmatpush1.bf16.msra.mxu0 %v4627
        %5079 = vmatprep.subr.bf16.mxu0 %v4632
        %5080 = vmatpush1.bf16.msra.mxu0 %v4631
        %5081 = vmatprep.subr.bf16.mxu0 %v4636
        %5082 = vmatpush1.bf16.msra.mxu0 %v4635
        %5083 = vmatprep.subr.bf16.mxu0 %v4640
        %5084 = vmatpush1.bf16.msra.mxu0 %v4639
        %5085 = vmatprep.subr.bf16.mxu0 %v4644
        %5086 = vmatpush1.bf16.msra.mxu0 %v4643
        %5087 = vmatprep.subr.bf16.mxu0 %v4648
        %5088 = vmatpush1.bf16.msra.mxu0 %v4647
        %5089 = vmatprep.mubr.bf16.mxu0 %v3432
        %5090 = vmatmul.mubr.bf16.gmra.mrb[0].mxu0 %v3431
        %v5091 = vpop.f32.mrb[0].mxu0
        %v5092 = vadd.f32 %v5049, %v5091
        %v5093 = vpop.f32.mrb[0].mxu0
        %v5094 = vadd.f32 %v5051, %v5093
        %v5095 = vpop.f32.mrb[0].mxu0
        %v5096 = vadd.f32 %v5053, %v5095
        %v5097 = vpop.f32.mrb[0].mxu0
        %v5098 = vadd.f32 %v5055, %v5097
        %5099 = vdwg.mxu0
        %5100 = vmatprep.subr.bf16.mxu0 %v4652
        %5101 = vmatpush1.bf16.msra.mxu0 %v4651
        %5102 = vmatprep.subr.bf16.mxu0 %v4656
        %5103 = vmatpush1.bf16.msra.mxu0 %v4655
        %5104 = vmatprep.subr.bf16.mxu0 %v4660
        %5105 = vmatpush1.bf16.msra.mxu0 %v4659
        %5106 = vmatprep.subr.bf16.mxu0 %v4664
        %5107 = vmatpush1.bf16.msra.mxu0 %v4663
        %5108 = vmatprep.subr.bf16.mxu0 %v4668
        %5109 = vmatpush1.bf16.msra.mxu0 %v4667
        %5110 = vmatprep.subr.bf16.mxu0 %v4672
        %5111 = vmatpush1.bf16.msra.mxu0 %v4671
        %5112 = vmatprep.subr.bf16.mxu0 %v4676
        %5113 = vmatpush1.bf16.msra.mxu0 %v4675
        %5114 = vmatprep.subr.bf16.mxu0 %v4680
        %5115 = vmatpush1.bf16.msra.mxu0 %v4679
        %5116 = vmatprep.subr.bf16.mxu0 %v4684
        %5117 = vmatpush1.bf16.msra.mxu0 %v4683
        %5118 = vmatprep.subr.bf16.mxu0 %v4688
        %5119 = vmatpush1.bf16.msra.mxu0 %v4687
        %5120 = vmatprep.subr.bf16.mxu0 %v4692
        %5121 = vmatpush1.bf16.msra.mxu0 %v4691
        %5122 = vmatprep.subr.bf16.mxu0 %v4696
        %5123 = vmatpush1.bf16.msra.mxu0 %v4695
        %5124 = vmatprep.subr.bf16.mxu0 %v4700
        %5125 = vmatpush1.bf16.msra.mxu0 %v4699
        %5126 = vmatprep.subr.bf16.mxu0 %v4704
        %5127 = vmatpush1.bf16.msra.mxu0 %v4703
        %5128 = vmatprep.subr.bf16.mxu0 %v4708
        %5129 = vmatpush1.bf16.msra.mxu0 %v4707
        %5130 = vmatprep.subr.bf16.mxu0 %v4712
        %5131 = vmatpush1.bf16.msra.mxu0 %v4711
        %5132 = vmatprep.mubr.bf16.mxu0 %v3434
        %5133 = vmatmul.mubr.bf16.gmra.mrb[0].mxu0 %v3433
        %v5134 = vpop.f32.mrb[0].mxu0
        %v5135 = vadd.f32 %v5092, %v5134
        %v5136 = vpop.f32.mrb[0].mxu0
        %v5137 = vadd.f32 %v5094, %v5136
        %v5138 = vpop.f32.mrb[0].mxu0
        %v5139 = vadd.f32 %v5096, %v5138
        %v5140 = vpop.f32.mrb[0].mxu0
        %v5141 = vadd.f32 %v5098, %v5140
        %5142 = vdwg.mxu0
        %5143 = vmatprep.subr.bf16.mxu0 %v4462
        %5144 = vmatpush1.bf16.msra.mxu0 %v4461
        %5145 = vmatprep.subr.bf16.mxu0 %v4466
        %5146 = vmatpush1.bf16.msra.mxu0 %v4465
        %5147 = vmatprep.subr.bf16.mxu0 %v4470
        %5148 = vmatpush1.bf16.msra.mxu0 %v4469
        %5149 = vmatprep.subr.bf16.mxu0 %v4474
        %5150 = vmatpush1.bf16.msra.mxu0 %v4473
        %5151 = vmatprep.subr.bf16.mxu0 %v4478
        %5152 = vmatpush1.bf16.msra.mxu0 %v4477
        %5153 = vmatprep.subr.bf16.mxu0 %v4482
        %5154 = vmatpush1.bf16.msra.mxu0 %v4481
        %5155 = vmatprep.subr.bf16.mxu0 %v4486
        %5156 = vmatpush1.bf16.msra.mxu0 %v4485
        %5157 = vmatprep.subr.bf16.mxu0 %v4490
        %5158 = vmatpush1.bf16.msra.mxu0 %v4489
        %5159 = vmatprep.subr.bf16.mxu0 %v4494
        %5160 = vmatpush1.bf16.msra.mxu0 %v4493
        %5161 = vmatprep.subr.bf16.mxu0 %v4498
        %5162 = vmatpush1.bf16.msra.mxu0 %v4497
        %5163 = vmatprep.subr.bf16.mxu0 %v4502
        %5164 = vmatpush1.bf16.msra.mxu0 %v4501
        %5165 = vmatprep.subr.bf16.mxu0 %v4506
        %5166 = vmatpush1.bf16.msra.mxu0 %v4505
        %5167 = vmatprep.subr.bf16.mxu0 %v4510
        %5168 = vmatpush1.bf16.msra.mxu0 %v4509
        %5169 = vmatprep.subr.bf16.mxu0 %v4514
        %5170 = vmatpush1.bf16.msra.mxu0 %v4513
        %5171 = vmatprep.subr.bf16.mxu0 %v4518
        %5172 = vmatpush1.bf16.msra.mxu0 %v4517
        %5173 = vmatprep.subr.bf16.mxu0 %v4522
        %5174 = vmatpush1.bf16.msra.mxu0 %v4521
        %5175 = vmatprep.mubr.bf16.mxu0 %v3428
        %5176 = vmatmul.mubr.bf16.gmra.mrb[0].mxu0 %v3427
        %v5177 = vpop.f32.mrb[0].mxu0
        %v5178 = vadd.f32 0.0, %v5177
        %v5179 = vpop.f32.mrb[0].mxu0
        %v5180 = vadd.f32 0.0, %v5179
        %v5181 = vpop.f32.mrb[0].mxu0
        %v5182 = vadd.f32 0.0, %v5181
        %v5183 = vpop.f32.mrb[0].mxu0
        %v5184 = vadd.f32 0.0, %v5183
        %5185 = vdwg.mxu0
        %5186 = vmatprep.subr.bf16.mxu0 %v4526
        %5187 = vmatpush1.bf16.msra.mxu0 %v4525
        %5188 = vmatprep.subr.bf16.mxu0 %v4530
        %5189 = vmatpush1.bf16.msra.mxu0 %v4529
        %5190 = vmatprep.subr.bf16.mxu0 %v4534
        %5191 = vmatpush1.bf16.msra.mxu0 %v4533
        %5192 = vmatprep.subr.bf16.mxu0 %v4538
        %5193 = vmatpush1.bf16.msra.mxu0 %v4537
        %5194 = vmatprep.subr.bf16.mxu0 %v4542
        %5195 = vmatpush1.bf16.msra.mxu0 %v4541
        %5196 = vmatprep.subr.bf16.mxu0 %v4546
        %5197 = vmatpush1.bf16.msra.mxu0 %v4545
        %5198 = vmatprep.subr.bf16.mxu0 %v4550
        %5199 = vmatpush1.bf16.msra.mxu0 %v4549
        %5200 = vmatprep.subr.bf16.mxu0 %v4554
        %5201 = vmatpush1.bf16.msra.mxu0 %v4553
        %5202 = vmatprep.subr.bf16.mxu0 %v4558
        %5203 = vmatpush1.bf16.msra.mxu0 %v4557
        %5204 = vmatprep.subr.bf16.mxu0 %v4562
        %5205 = vmatpush1.bf16.msra.mxu0 %v4561
        %5206 = vmatprep.subr.bf16.mxu0 %v4566
        %5207 = vmatpush1.bf16.msra.mxu0 %v4565
        %5208 = vmatprep.subr.bf16.mxu0 %v4570
        %5209 = vmatpush1.bf16.msra.mxu0 %v4569
        %5210 = vmatprep.subr.bf16.mxu0 %v4574
        %5211 = vmatpush1.bf16.msra.mxu0 %v4573
        %5212 = vmatprep.subr.bf16.mxu0 %v4578
        %5213 = vmatpush1.bf16.msra.mxu0 %v4577
        %5214 = vmatprep.subr.bf16.mxu0 %v4582
        %5215 = vmatpush1.bf16.msra.mxu0 %v4581
        %5216 = vmatprep.subr.bf16.mxu0 %v4586
        %5217 = vmatpush1.bf16.msra.mxu0 %v4585
        %5218 = vmatprep.mubr.bf16.mxu0 %v3430
        %5219 = vmatmul.mubr.bf16.gmra.mrb[0].mxu0 %v3429
        %v5220 = vpop.f32.mrb[0].mxu0
        %v5221 = vadd.f32 %v5178, %v5220
        %v5222 = vpop.f32.mrb[0].mxu0
        %v5223 = vadd.f32 %v5180, %v5222
        %v5224 = vpop.f32.mrb[0].mxu0
        %v5225 = vadd.f32 %v5182, %v5224
        %v5226 = vpop.f32.mrb[0].mxu0
        %v5227 = vadd.f32 %v5184, %v5226
        %5228 = vdwg.mxu0
        %5229 = vmatprep.subr.bf16.mxu0 %v4590
        %5230 = vmatpush1.bf16.msra.mxu0 %v4589
        %5231 = vmatprep.subr.bf16.mxu0 %v4594
        %5232 = vmatpush1.bf16.msra.mxu0 %v4593
        %5233 = vmatprep.subr.bf16.mxu0 %v4598
        %5234 = vmatpush1.bf16.msra.mxu0 %v4597
        %5235 = vmatprep.subr.bf16.mxu0 %v4602
        %5236 = vmatpush1.bf16.msra.mxu0 %v4601
        %5237 = vmatprep.subr.bf16.mxu0 %v4606
        %5238 = vmatpush1.bf16.msra.mxu0 %v4605
        %5239 = vmatprep.subr.bf16.mxu0 %v4610
        %5240 = vmatpush1.bf16.msra.mxu0 %v4609
        %5241 = vmatprep.subr.bf16.mxu0 %v4614
        %5242 = vmatpush1.bf16.msra.mxu0 %v4613
        %5243 = vmatprep.subr.bf16.mxu0 %v4618
        %5244 = vmatpush1.bf16.msra.mxu0 %v4617
        %5245 = vmatprep.subr.bf16.mxu0 %v4622
        %5246 = vmatpush1.bf16.msra.mxu0 %v4621
        %5247 = vmatprep.subr.bf16.mxu0 %v4626
        %5248 = vmatpush1.bf16.msra.mxu0 %v4625
        %5249 = vmatprep.subr.bf16.mxu0 %v4630
        %5250 = vmatpush1.bf16.msra.mxu0 %v4629
        %5251 = vmatprep.subr.bf16.mxu0 %v4634
        %5252 = vmatpush1.bf16.msra.mxu0 %v4633
        %5253 = vmatprep.subr.bf16.mxu0 %v4638
        %5254 = vmatpush1.bf16.msra.mxu0 %v4637
        %5255 = vmatprep.subr.bf16.mxu0 %v4642
        %5256 = vmatpush1.bf16.msra.mxu0 %v4641
        %5257 = vmatprep.subr.bf16.mxu0 %v4646
        %5258 = vmatpush1.bf16.msra.mxu0 %v4645
        %5259 = vmatprep.subr.bf16.mxu0 %v4650
        %5260 = vmatpush1.bf16.msra.mxu0 %v4649
        %5261 = vmatprep.mubr.bf16.mxu0 %v3432
        %5262 = vmatmul.mubr.bf16.gmra.mrb[0].mxu0 %v3431
        %v5263 = vpop.f32.mrb[0].mxu0
        %v5264 = vadd.f32 %v5221, %v5263
        %v5265 = vpop.f32.mrb[0].mxu0
        %v5266 = vadd.f32 %v5223, %v5265
        %v5267 = vpop.f32.mrb[0].mxu0
        %v5268 = vadd.f32 %v5225, %v5267
        %v5269 = vpop.f32.mrb[0].mxu0
        %v5270 = vadd.f32 %v5227, %v5269
        %5271 = vdwg.mxu0
        %5272 = vmatprep.subr.bf16.mxu0 %v4654
        %5273 = vmatpush1.bf16.msra.mxu0 %v4653
        %5274 = vmatprep.subr.bf16.mxu0 %v4658
        %5275 = vmatpush1.bf16.msra.mxu0 %v4657
        %5276 = vmatprep.subr.bf16.mxu0 %v4662
        %5277 = vmatpush1.bf16.msra.mxu0 %v4661
        %5278 = vmatprep.subr.bf16.mxu0 %v4666
        %5279 = vmatpush1.bf16.msra.mxu0 %v4665
        %5280 = vmatprep.subr.bf16.mxu0 %v4670
        %5281 = vmatpush1.bf16.msra.mxu0 %v4669
        %5282 = vmatprep.subr.bf16.mxu0 %v4674
        %5283 = vmatpush1.bf16.msra.mxu0 %v4673
        %5284 = vmatprep.subr.bf16.mxu0 %v4678
        %5285 = vmatpush1.bf16.msra.mxu0 %v4677
        %5286 = vmatprep.subr.bf16.mxu0 %v4682
        %5287 = vmatpush1.bf16.msra.mxu0 %v4681
        %5288 = vmatprep.subr.bf16.mxu0 %v4686
        %5289 = vmatpush1.bf16.msra.mxu0 %v4685
        %5290 = vmatprep.subr.bf16.mxu0 %v4690
        %5291 = vmatpush1.bf16.msra.mxu0 %v4689
        %5292 = vmatprep.subr.bf16.mxu0 %v4694
        %5293 = vmatpush1.bf16.msra.mxu0 %v4693
        %5294 = vmatprep.subr.bf16.mxu0 %v4698
        %5295 = vmatpush1.bf16.msra.mxu0 %v4697
        %5296 = vmatprep.subr.bf16.mxu0 %v4702
        %5297 = vmatpush1.bf16.msra.mxu0 %v4701
        %5298 = vmatprep.subr.bf16.mxu0 %v4706
        %5299 = vmatpush1.bf16.msra.mxu0 %v4705
        %5300 = vmatprep.subr.bf16.mxu0 %v4710
        %5301 = vmatpush1.bf16.msra.mxu0 %v4709
        %5302 = vmatprep.subr.bf16.mxu0 %v4714
        %5303 = vmatpush1.bf16.msra.mxu0 %v4713
        %5304 = vmatprep.mubr.bf16.mxu0 %v3434
        %5305 = vmatmul.mubr.bf16.gmra.mrb[0].mxu0 %v3433
        %v5306 = vpop.f32.mrb[0].mxu0
        %v5307 = vadd.f32 %v5264, %v5306
        %v5308 = vpop.f32.mrb[0].mxu0
        %v5309 = vadd.f32 %v5266, %v5308
        %v5310 = vpop.f32.mrb[0].mxu0
        %v5311 = vadd.f32 %v5268, %v5310
        %v5312 = vpop.f32.mrb[0].mxu0
        %v5313 = vadd.f32 %v5270, %v5312
        %5314 = vdwg.mxu0
        %v5315 = vadd.f32 %v3419, %v5135
        %v5316 = vadd.f32 %v3420, %v5137
        %v5317 = vadd.f32 %v3421, %v5307
        %v5318 = vadd.f32 %v3422, %v5309
        %v5319 = vadd.f32 %v3423, %v5139
        %v5320 = vadd.f32 %v3424, %v5141
        %v5321 = vadd.f32 %v3425, %v5311
        %v5322 = vadd.f32 %v3426, %v5313
        %5323 = vst [vmem:[#allocation2] sm:$0xff] %v5315
        %5324 = vst [vmem:[#allocation2 + $0x8] sm:$0xff] %v5316
        %5325 = vst [vmem:[#allocation2 + $0x10] sm:$0xff] %v5317
        %5326 = vst [vmem:[#allocation2 + $0x18] sm:$0xff] %v5318
        %5327 = vst [vmem:[#allocation2 + $0x20] sm:$0xff] %v5319
        %5328 = vst [vmem:[#allocation2 + $0x28] sm:$0xff] %v5320
        %5329 = vst [vmem:[#allocation2 + $0x30] sm:$0xff] %v5321
        %5330 = vst [vmem:[#allocation2 + $0x38] sm:$0xff] %v5322
        %p5331 = scmp.eq.s32.totalorder %s29, 2
        // Predicated region
        $region65: #{tpu_custom_call.1} parent=39 // pred_check
          %p5332 = pneg %p5331
        $region66: #{tpu_custom_call.1} parent=39 // pred_check_branch
          %5334 = sbr.rel (%p5332) target = $region68
        $region67: #{tpu_custom_call.1} parent=39 // pred_region
          %v5335 = vld [vmem:[#allocation2] sm:$0xff]
          %v5336 = vld [vmem:[#allocation2 + $0x8] sm:$0xff]
          %v5337 = vld [vmem:[#allocation2 + $0x10] sm:$0xff]
          %v5338 = vld [vmem:[#allocation2 + $0x18] sm:$0xff]
          %v5339 = vld [vmem:[#allocation2 + $0x20] sm:$0xff]
          %v5340 = vld [vmem:[#allocation2 + $0x28] sm:$0xff]
          %v5341 = vld [vmem:[#allocation2 + $0x30] sm:$0xff]
          %v5342 = vld [vmem:[#allocation2 + $0x38] sm:$0xff]
          %v5343 = vld [vmem:[#allocation11] sm:$0xf]
          %v5345 = vlaneseq
          %v5346 = vshrl.u32 %v5345, 7
          %v5347 = vsub.s32 0, %v5346
          %v5348 = vrot.slane %v5343, %v5347
          %v5349 = vlaneseq
          %v5350 = vshrl.u32 %v5349, 7
          %v5351 = vsub.s32 1, %v5350
          %v5352 = vrot.slane %v5343, %v5351
          %v5353 = vlaneseq
          %v5354 = vshrl.u32 %v5353, 7
          %v5355 = vsub.s32 2, %v5354
          %v5356 = vrot.slane %v5343, %v5355
          %v5357 = vlaneseq
          %v5358 = vshrl.u32 %v5357, 7
          %v5359 = vsub.s32 3, %v5358
          %v5360 = vrot.slane %v5343, %v5359
          %v5365 = vadd.f32 %v5335, %v5348
          %v5366 = vadd.f32 %v5336, %v5352
          %v5367 = vadd.f32 %v5337, %v5356
          %v5368 = vadd.f32 %v5338, %v5360
          %v5369 = vadd.f32 %v5339, %v5348
          %v5370 = vadd.f32 %v5340, %v5352
          %v5371 = vadd.f32 %v5341, %v5356
          %v5372 = vadd.f32 %v5342, %v5360
          %5373 = vst [vmem:[#allocation12] sm:$0xff] %v5365
          %5374 = vst [vmem:[#allocation12 + $0x8] sm:$0xff] %v5366
          %5375 = vst [vmem:[#allocation12 + $0x10] sm:$0xff] %v5367
          %5376 = vst [vmem:[#allocation12 + $0x18] sm:$0xff] %v5368
          %5377 = vst [vmem:[#allocation12 + $0x20] sm:$0xff] %v5369
          %5378 = vst [vmem:[#allocation12 + $0x28] sm:$0xff] %v5370
          %5379 = vst [vmem:[#allocation12 + $0x30] sm:$0xff] %v5371
          %5380 = vst [vmem:[#allocation12 + $0x38] sm:$0xff] %v5372
        $region68: #{tpu_custom_call.1} parent=39 // pred_fallthru
          _
        // Predicated region
        $region69: #{tpu_custom_call.1} parent=39 // pred_check
          %p5381 = pneg %p179
        $region70: #{tpu_custom_call.1} parent=39 // pred_check_branch
          %5383 = sbr.rel (%p5381) target = $region72
        $region71: #{tpu_custom_call.1} parent=39 // pred_region
          %s5384 = smul.u32 2, %s28
          %s5386 = ssub.s32 1024, 1024
          %5387 = vsyncadd [#allocation5], %s5386
          %s5388 = smul.addr %s5384, 4
          %s5389 = smul.addr %s5388, 128
          %s5390 = scalar_lea.hbm %s5, %s5389
          %s5391 = sshll.u32 [#allocation12], 4
          %s5392 = int_to_ptr.vmem [resolvable:$true] %s5391
          %5397 = dma.vmem_to_hbm [thread:$0]  %s5392, 1024, %s5390, [#allocation5], 512, 512, 32
        $region72: #{tpu_custom_call.1} parent=39 // pred_fallthru
          _
        // Predicated region
        $region73: #{tpu_custom_call.1} parent=39 // pred_check
          %p5398 = pneg %p179
        $region74: #{tpu_custom_call.1} parent=39 // pred_check_branch
          %5400 = sbr.rel (%p5398) target = $region76
        $region75: #{tpu_custom_call.1} parent=39 // pred_region
          %5401 = dma.done [#allocation5], 1024
        $region76: #{tpu_custom_call.1} parent=39 // pred_fallthru
          _
      $region40: #{tpu_custom_call.1} parent=5 // pred_fallthru
        _
      %p5402 = scmp.le.s32.totalorder 2, %s19
      // Predicated region
      $region77: #{tpu_custom_call.1} parent=5 // pred_check
        %p5403 = pneg %p5402
      $region78: #{tpu_custom_call.1} parent=5 // pred_check_branch
        %5405 = sbr.rel (%p5403) target = $region80
      $region79: #{tpu_custom_call.1} parent=5 // pred_region
        %s5406 = ssub.s32 %s19, 2
      $region80: #{tpu_custom_call.1} parent=5 // pred_fallthru
        _
    $region6: #{tpu_custom_call.1} parent=1 // loop_footer
      %s23 = sadd.s32 1, %s19
    $region7: #{tpu_custom_call.1} parent=1 // loop_footer_branch
      %18 = sbr.rel target = $region3
    $region8: #{tpu_custom_call.1} parent=1 // loop_exit
      _
    %5407 = vsyncpa [#allocation4], 1
    %s5408 = scalar_lea.sflag [#allocation4], 1
    %5409 = vsyncpa %s5408, 1
    %5410 = vsyncpa [#allocation7], 1
    %s5411 = scalar_lea.sflag [#allocation7], 1
    %5412 = vsyncpa %s5411, 1
    %5413 = vsyncpa [#allocation10], 1
    %s5414 = scalar_lea.sflag [#allocation10], 1
    %5415 = vsyncpa %s5414, 1
    %5416 = vsyncpa [#allocation5], 1
    %s5417 = scalar_lea.sflag [#allocation5], 1
    %5418 = vsyncpa %s5417, 1

</llo_original>
